<compile_context>
chip_gen: v7x
topology: tpu7x:2x2x1
jax: 0.10.0
libtpu: 0.0.40
codegen_flags: <defaults>
</compile_context>

<pallas_src>
import math

import jax
import jax.numpy as jnp
import numpy as np
from jax.experimental import pallas as pl
from jax.experimental.pallas import tpu as pltpu

# ----------------------------- config -------------------------------------
BATCH = 2
SEQ = 8
HIDDEN = 32
NUM_HEADS = 4
HEAD_DIM = HIDDEN // NUM_HEADS
FFN = 64
NUM_LAYERS = 2
VOCAB = 100
MAX_POS = 16
LN_EPS = 1e-12
MASK_BIAS = -10000.0
VEC_W = 3 * HIDDEN          # packed per-layer vector row width (>= FFN)


# --------------------------- in-kernel math --------------------------------
def _layer_norm(x, g, b):
    mu = jnp.mean(x, axis=-1, keepdims=True)
    var = jnp.mean((x - mu) ** 2, axis=-1, keepdims=True)
    return (x - mu) * jax.lax.rsqrt(var + LN_EPS) * g + b


def _gelu(x):
    # tanh-approximation GELU (the "gelu_new" variant used by BERT impls).
    c = math.sqrt(2.0 / math.pi)
    return 0.5 * x * (1.0 + jnp.tanh(c * (x + 0.044715 * x * x * x)))


def _softmax_rows_kernel(s):
    s = s - jnp.max(s, axis=-1, keepdims=True)
    p = jnp.exp(s)
    return p * pl.reciprocal(jnp.sum(p, axis=-1, keepdims=True), approx=True)


# ------------------------------ kernel -------------------------------------
def encoder_kernel(emb_ref, bias_ref, embln_ref, win_ref, w2_ref, vecs_ref,
                   out_ref, ctx_ref):
    # Whole batch in one step: x is (B*S, HIDDEN).
    x = _layer_norm(emb_ref[...], embln_ref[0], embln_ref[1])
    bias = bias_ref[...]                          # (B*S, B*S) block-diag + padding bias
    scale = 1.0 / math.sqrt(HEAD_DIM)

    for l in range(NUM_LAYERS):                   # static unroll (2 layers)
        win = win_ref[l]                          # (H, 3H + H + F)
        vec = vecs_ref[l]                         # (8, VEC_W)
        w_qkv = win[:, : 3 * HIDDEN]
        w_o = win[:, 3 * HIDDEN: 4 * HIDDEN]
        w_1 = win[:, 4 * HIDDEN:]
        b_qkv = vec[0]                            # (3H,)
        b_o, g1, bt1 = vec[1, :HIDDEN], vec[2, :HIDDEN], vec[3, :HIDDEN]
        b_f1 = vec[4, :FFN]
        b_f2, g2, bt2 = vec[5, :HIDDEN], vec[6, :HIDDEN], vec[7, :HIDDEN]

        # fused QKV projection: one (B*S, H) x (H, 3H) push
        qkv = jnp.dot(x, w_qkv, preferred_element_type=jnp.float32) + b_qkv

        # per-head attention over the whole batch; heads write into ctx scratch
        for h in range(NUM_HEADS):                # static unroll (4 heads)
            q = qkv[:, h * HEAD_DIM:(h + 1) * HEAD_DIM]
            k = qkv[:, HIDDEN + h * HEAD_DIM: HIDDEN + (h + 1) * HEAD_DIM]
            v = qkv[:, 2 * HIDDEN + h * HEAD_DIM: 2 * HIDDEN + (h + 1) * HEAD_DIM]
            s = jnp.dot(q, k.T, preferred_element_type=jnp.float32) * scale + bias
            p = _softmax_rows_kernel(s)
            ctx_ref[:, h * HEAD_DIM:(h + 1) * HEAD_DIM] = jnp.dot(
                p, v, preferred_element_type=jnp.float32)

        attn = jnp.dot(ctx_ref[...], w_o, preferred_element_type=jnp.float32) + b_o
        x = _layer_norm(x + attn, g1, bt1)

        h1 = _gelu(jnp.dot(x, w_1, preferred_element_type=jnp.float32) + b_f1)
        ffn = jnp.dot(h1, w2_ref[l], preferred_element_type=jnp.float32) + b_f2
        x = _layer_norm(x + ffn, g2, bt2)

    out_ref[...] = x


# ---------------------------- wrapper --------------------------------------
def _pack_params(params):
    # weights applied to H-wide inputs packed on the output (lane) axis
    wqkv = jnp.concatenate([params["wq"], params["wk"], params["wv"]], axis=-1)
    win = jnp.concatenate([wqkv, params["wo"], params["w1"]], axis=-1)   # (L,H,3H+H+F)
    bqkv = jnp.concatenate([params["bq"], params["bk"], params["bv"]], axis=-1)

    def pad(v):
        return jnp.pad(v, ((0, 0), (0, VEC_W - v.shape[-1])))

    vecs = jnp.stack(
        [bqkv, pad(params["bo"]), pad(params["ln1_g"]), pad(params["ln1_b"]),
         pad(params["b1"]), pad(params["b2"]), pad(params["ln2_g"]),
         pad(params["ln2_b"])], axis=1)                                   # (L,8,VEC_W)
    embln = jnp.stack([params["emb_ln_g"], params["emb_ln_b"]], axis=0)   # (2,H)
    return win, params["w2"], vecs, embln


@jax.jit
def token_level_encoder(input_ids, attention_mask, params):
    """Returns token_reps of shape (B, S, H), like model(input_ids, mask)[0]."""
    B, S = input_ids.shape
    BS = B * S

    # --- embedding lookup (JAX glue) ---
    word = jnp.take(params["word_emb"], input_ids, axis=0)               # (B,S,H)
    pos = params["pos_emb"][:S][None, :, :]
    typ = params["type_emb"][0][None, None, :]
    emb = (word + pos + typ).astype(jnp.float32).reshape(BS, HIDDEN)

    # combined block-diagonal (no cross-batch attention) + padding mask bias
    key_valid = attention_mask.astype(jnp.float32).reshape(BS)           # (BS,)
    batch_ids = jnp.repeat(jnp.arange(B), S)                             # (BS,)
    same = (batch_ids[:, None] == batch_ids[None, :]).astype(jnp.float32)
    bias2d = (1.0 - same * key_valid[None, :]) * MASK_BIAS               # (BS,BS)

    win, w2, vecs, embln = _pack_params(params)

    def full(shape):
        n = len(shape)
        return pl.BlockSpec(shape, lambda i, _n=n: (0,) * _n)

    out = pl.pallas_call(
        encoder_kernel,
        out_shape=jax.ShapeDtypeStruct((BS, HIDDEN), jnp.float32),
        grid_spec=pltpu.PrefetchScalarGridSpec(
            num_scalar_prefetch=0,
            grid=(1,),                                   # single grid step
            in_specs=[full((BS, HIDDEN)), full((BS, BS)), full(embln.shape),
                      full(win.shape), full(w2.shape), full(vecs.shape)],
            out_specs=full((BS, HIDDEN)),
            scratch_shapes=[pltpu.VMEM((BS, HIDDEN), jnp.float32)],      # ctx
        ),
        compiler_params=pltpu.CompilerParams(dimension_semantics=("arbitrary",)),
    )(emb, bias2d, embln, win, w2, vecs)
    # TODO(synk): at scaled (BERT-base) sizes, stream per-layer weights via a
    # layer grid axis and lane-densify the output store; unnecessary at toy size.
    return out.reshape(B, S, HIDDEN)


# ------------------------ pure-JAX reference --------------------------------
def reference_encoder(input_ids, attention_mask, params):
    B, S = input_ids.shape
    word = jnp.take(params["word_emb"], input_ids, axis=0)
    pos = params["pos_emb"][:S][None, :, :]
    typ = params["type_emb"][0][None, None, :]
    x = word + pos + typ
    x = _layer_norm(x, params["emb_ln_g"], params["emb_ln_b"])
    bias = (1.0 - attention_mask.astype(jnp.float32))[:, None, :] * MASK_BIAS
    scale = 1.0 / math.sqrt(HEAD_DIM)
    for l in range(NUM_LAYERS):
        q = x @ params["wq"][l] + params["bq"][l]
        k = x @ params["wk"][l] + params["bk"][l]
        v = x @ params["wv"][l] + params["bv"][l]

        def split(t):  # (B,S,H) -> (B,NH,S,HD)
            return t.reshape(B, S, NUM_HEADS, HEAD_DIM).transpose(0, 2, 1, 3)

        qh, kh, vh = split(q), split(k), split(v)
        s = jnp.einsum("bhqd,bhkd->bhqk", qh, kh) * scale + bias[:, None, :, :]
        p = jax.nn.softmax(s, axis=-1)
        ctx = jnp.einsum("bhqk,bhkd->bhqd", p, vh).transpose(0, 2, 1, 3).reshape(B, S, HIDDEN)
        attn_out = ctx @ params["wo"][l] + params["bo"][l]
        x = _layer_norm(x + attn_out, params["ln1_g"][l], params["ln1_b"][l])
        h1 = _gelu(x @ params["w1"][l] + params["b1"][l])
        x = _layer_norm(x + h1 @ params["w2"][l] + params["b2"][l],
                        params["ln2_g"][l], params["ln2_b"][l])
    return x


# ------------------------------ params --------------------------------------
def init_params(key):
    ks = jax.random.split(key, 16)
    std = 0.02
    return {
        "word_emb": jax.random.normal(ks[0], (VOCAB, HIDDEN), jnp.float32) * std,
        "pos_emb": jax.random.normal(ks[1], (MAX_POS, HIDDEN), jnp.float32) * std,
        "type_emb": jax.random.normal(ks[2], (2, HIDDEN), jnp.float32) * std,
        "emb_ln_g": jnp.ones((HIDDEN,), jnp.float32),
        "emb_ln_b": jnp.zeros((HIDDEN,), jnp.float32),
        "wq": jax.random.normal(ks[3], (NUM_LAYERS, HIDDEN, HIDDEN), jnp.float32) * std,
        "wk": jax.random.normal(ks[4], (NUM_LAYERS, HIDDEN, HIDDEN), jnp.float32) * std,
        "wv": jax.random.normal(ks[5], (NUM_LAYERS, HIDDEN, HIDDEN), jnp.float32) * std,
        "wo": jax.random.normal(ks[6], (NUM_LAYERS, HIDDEN, HIDDEN), jnp.float32) * std,
        "bq": jnp.zeros((NUM_LAYERS, HIDDEN), jnp.float32),
        "bk": jnp.zeros((NUM_LAYERS, HIDDEN), jnp.float32),
        "bv": jnp.zeros((NUM_LAYERS, HIDDEN), jnp.float32),
        "bo": jnp.zeros((NUM_LAYERS, HIDDEN), jnp.float32),
        "ln1_g": jnp.ones((NUM_LAYERS, HIDDEN), jnp.float32),
        "ln1_b": jnp.zeros((NUM_LAYERS, HIDDEN), jnp.float32),
        "w1": jax.random.normal(ks[7], (NUM_LAYERS, HIDDEN, FFN), jnp.float32) * std,
        "b1": jnp.zeros((NUM_LAYERS, FFN), jnp.float32),
        "w2": jax.random.normal(ks[8], (NUM_LAYERS, FFN, HIDDEN), jnp.float32) * std,
        "b2": jnp.zeros((NUM_LAYERS, HIDDEN), jnp.float32),
        "ln2_g": jnp.ones((NUM_LAYERS, HIDDEN), jnp.float32),
        "ln2_b": jnp.zeros((NUM_LAYERS, HIDDEN), jnp.float32),
    }


# ------------------------------- main ---------------------------------------
if __name__ == "__main__":
    key = jax.random.PRNGKey(0)
    params = init_params(key)

    kid, _ = jax.random.split(key)
    input_ids = jax.random.randint(kid, (BATCH, SEQ), 0, VOCAB, dtype=jnp.int32)
    attention_mask = jnp.ones((BATCH, SEQ), jnp.int32)
    attention_mask = attention_mask.at[1, 6:].set(0)   # some padding on sample 1

    token_reps = token_level_encoder(input_ids, attention_mask, params)
    token_reps = jax.block_until_ready(token_reps)

    ref = reference_encoder(input_ids, attention_mask, params)
    assert token_reps.shape == (BATCH, SEQ, HIDDEN)
    # tolerance loosened slightly for the approx-reciprocal softmax denominator
    np.testing.assert_allclose(np.asarray(token_reps), np.asarray(ref),
                               rtol=2e-3, atol=2e-3)
    print("KERNEL_OK")
</pallas_src>

<mosaic_0001>
module attributes {stable_mosaic.version = 11 : i64} {
  func.func @encoder_kernel(%arg0: i32, %arg1: memref<16x32xf32, #tpu.memory_space<vmem>>, %arg2: memref<16x16xf32, #tpu.memory_space<vmem>>, %arg3: memref<2x32xf32, #tpu.memory_space<vmem>>, %arg4: memref<2x32x192xf32, #tpu.memory_space<vmem>>, %arg5: memref<2x64x32xf32, #tpu.memory_space<vmem>>, %arg6: memref<2x8x96xf32, #tpu.memory_space<vmem>>, %arg7: memref<16x32xf32, #tpu.memory_space<vmem>>, %arg8: memref<16x32xf32, #tpu.memory_space<vmem>>) attributes {dimension_semantics = [#tpu.dimension_semantics<arbitrary>], iteration_bounds = array<i64: 1>, scalar_prefetch = 0 : i64, scratch_operands = 1 : i64, tpu.core_type = #tpu.core_type<tc>, window_params = [{pipeline_mode = #tpu.pipeline_mode<synchronous>, transform_indices = @transform_0, window_bounds = array<i64: 16, 32>}, {pipeline_mode = #tpu.pipeline_mode<synchronous>, transform_indices = @transform_1, window_bounds = array<i64: 16, 16>}, {pipeline_mode = #tpu.pipeline_mode<synchronous>, transform_indices = @transform_2, window_bounds = array<i64: 2, 32>}, {pipeline_mode = #tpu.pipeline_mode<synchronous>, transform_indices = @transform_3, window_bounds = array<i64: 2, 32, 192>}, {pipeline_mode = #tpu.pipeline_mode<synchronous>, transform_indices = @transform_4, window_bounds = array<i64: 2, 64, 32>}, {pipeline_mode = #tpu.pipeline_mode<synchronous>, transform_indices = @transform_5, window_bounds = array<i64: 2, 8, 96>}, {pipeline_mode = #tpu.pipeline_mode<synchronous>, transform_indices = @transform_6, window_bounds = array<i64: 16, 32>}]} {
    %c0 = arith.constant 0 : index
    %c0_0 = arith.constant 0 : index
    %0 = vector.load %arg1[%c0, %c0_0] : memref<16x32xf32, #tpu.memory_space<vmem>>, vector<16x32xf32>
    %c0_1 = arith.constant 0 : index
    %c0_2 = arith.constant 0 : index
    %1 = vector.load %arg3[%c0_1, %c0_2] : memref<2x32xf32, #tpu.memory_space<vmem>>, vector<1x32xf32>
    %2 = vector.shape_cast %1 : vector<1x32xf32> to vector<32xf32>
    %c1 = arith.constant 1 : index
    %c0_3 = arith.constant 0 : index
    %3 = vector.load %arg3[%c1, %c0_3] : memref<2x32xf32, #tpu.memory_space<vmem>>, vector<1x32xf32>
    %4 = vector.shape_cast %3 : vector<1x32xf32> to vector<32xf32>
    %cst = arith.constant dense<0.000000e+00> : vector<16xf32>
    %5 = vector.multi_reduction <add>, %0, %cst [1] : vector<16x32xf32> to vector<16xf32>
    %6 = vector.shape_cast %5 : vector<16xf32> to vector<16x1xf32>
    %cst_4 = arith.constant 3.200000e+01 : f32
    %7 = vector.broadcast %cst_4 : f32 to vector<16x1xf32>
    %8 = arith.divf %6, %7 : vector<16x1xf32>
    %9 = vector.broadcast %8 : vector<16x1xf32> to vector<16x32xf32>
    %10 = arith.subf %0, %9 : vector<16x32xf32>
    %11 = arith.mulf %10, %10 : vector<16x32xf32>
    %cst_5 = arith.constant dense<0.000000e+00> : vector<16xf32>
    %12 = vector.multi_reduction <add>, %11, %cst_5 [1] : vector<16x32xf32> to vector<16xf32>
    %13 = vector.shape_cast %12 : vector<16xf32> to vector<16x1xf32>
    %cst_6 = arith.constant 3.200000e+01 : f32
    %14 = vector.broadcast %cst_6 : f32 to vector<16x1xf32>
    %15 = arith.divf %13, %14 : vector<16x1xf32>
    %16 = vector.broadcast %8 : vector<16x1xf32> to vector<16x32xf32>
    %17 = arith.subf %0, %16 : vector<16x32xf32>
    %cst_7 = arith.constant 9.99999996E-13 : f32
    %18 = vector.broadcast %cst_7 : f32 to vector<16x1xf32>
    %19 = arith.addf %15, %18 : vector<16x1xf32>
    %20 = math.rsqrt %19 : vector<16x1xf32>
    %21 = vector.broadcast %20 : vector<16x1xf32> to vector<16x32xf32>
    %22 = arith.mulf %17, %21 : vector<16x32xf32>
    %23 = vector.shape_cast %2 : vector<32xf32> to vector<1x32xf32>
    %24 = vector.broadcast %23 : vector<1x32xf32> to vector<16x32xf32>
    %25 = arith.mulf %22, %24 : vector<16x32xf32>
    %26 = vector.shape_cast %4 : vector<32xf32> to vector<1x32xf32>
    %27 = vector.broadcast %26 : vector<1x32xf32> to vector<16x32xf32>
    %28 = arith.addf %25, %27 : vector<16x32xf32>
    %c0_8 = arith.constant 0 : index
    %c0_9 = arith.constant 0 : index
    %29 = vector.load %arg2[%c0_8, %c0_9] : memref<16x16xf32, #tpu.memory_space<vmem>>, vector<16x16xf32>
    %c0_10 = arith.constant 0 : index
    %c0_11 = arith.constant 0 : index
    %c0_12 = arith.constant 0 : index
    %30 = vector.load %arg4[%c0_10, %c0_11, %c0_12] : memref<2x32x192xf32, #tpu.memory_space<vmem>>, vector<1x32x192xf32>
    %31 = vector.shape_cast %30 : vector<1x32x192xf32> to vector<32x192xf32>
    %c0_13 = arith.constant 0 : index
    %c0_14 = arith.constant 0 : index
    %c0_15 = arith.constant 0 : index
    %32 = vector.load %arg6[%c0_13, %c0_14, %c0_15] : memref<2x8x96xf32, #tpu.memory_space<vmem>>, vector<1x8x96xf32>
    %33 = vector.shape_cast %32 : vector<1x8x96xf32> to vector<8x96xf32>
    %34 = vector.extract_strided_slice %31 {offsets = [0, 0], sizes = [32, 96], strides = [1, 1]} : vector<32x192xf32> to vector<32x96xf32>
    %35 = vector.extract_strided_slice %31 {offsets = [0, 96], sizes = [32, 32], strides = [1, 1]} : vector<32x192xf32> to vector<32x32xf32>
    %36 = vector.extract_strided_slice %31 {offsets = [0, 128], sizes = [32, 64], strides = [1, 1]} : vector<32x192xf32> to vector<32x64xf32>
    %37 = vector.extract_strided_slice %33 {offsets = [0, 0], sizes = [1, 96], strides = [1, 1]} : vector<8x96xf32> to vector<1x96xf32>
    %38 = vector.shape_cast %37 : vector<1x96xf32> to vector<96xf32>
    %39 = vector.extract_strided_slice %33 {offsets = [1, 0], sizes = [1, 32], strides = [1, 1]} : vector<8x96xf32> to vector<1x32xf32>
    %40 = vector.shape_cast %39 : vector<1x32xf32> to vector<32xf32>
    %41 = vector.extract_strided_slice %33 {offsets = [2, 0], sizes = [1, 32], strides = [1, 1]} : vector<8x96xf32> to vector<1x32xf32>
    %42 = vector.shape_cast %41 : vector<1x32xf32> to vector<32xf32>
    %43 = vector.extract_strided_slice %33 {offsets = [3, 0], sizes = [1, 32], strides = [1, 1]} : vector<8x96xf32> to vector<1x32xf32>
    %44 = vector.shape_cast %43 : vector<1x32xf32> to vector<32xf32>
    %45 = vector.extract_strided_slice %33 {offsets = [4, 0], sizes = [1, 64], strides = [1, 1]} : vector<8x96xf32> to vector<1x64xf32>
    %46 = vector.shape_cast %45 : vector<1x64xf32> to vector<64xf32>
    %47 = vector.extract_strided_slice %33 {offsets = [5, 0], sizes = [1, 32], strides = [1, 1]} : vector<8x96xf32> to vector<1x32xf32>
    %48 = vector.shape_cast %47 : vector<1x32xf32> to vector<32xf32>
    %49 = vector.extract_strided_slice %33 {offsets = [6, 0], sizes = [1, 32], strides = [1, 1]} : vector<8x96xf32> to vector<1x32xf32>
    %50 = vector.shape_cast %49 : vector<1x32xf32> to vector<32xf32>
    %51 = vector.extract_strided_slice %33 {offsets = [7, 0], sizes = [1, 32], strides = [1, 1]} : vector<8x96xf32> to vector<1x32xf32>
    %52 = vector.shape_cast %51 : vector<1x32xf32> to vector<32xf32>
    %cst_16 = arith.constant dense<0.000000e+00> : vector<16x96xf32>
    %53 = tpu.matmul %28, %34, %cst_16 {dimension_numbers = #tpu.dot_dimension_numbers<[1], [0], [0], [1], [0, 0, 1, 1], [], []>} : vector<16x32xf32>, vector<32x96xf32>, vector<16x96xf32> -> vector<16x96xf32>
    %54 = vector.shape_cast %38 : vector<96xf32> to vector<1x96xf32>
    %55 = vector.broadcast %54 : vector<1x96xf32> to vector<16x96xf32>
    %56 = arith.addf %53, %55 : vector<16x96xf32>
    %57 = vector.extract_strided_slice %56 {offsets = [0, 0], sizes = [16, 8], strides = [1, 1]} : vector<16x96xf32> to vector<16x8xf32>
    %58 = vector.extract_strided_slice %56 {offsets = [0, 32], sizes = [16, 8], strides = [1, 1]} : vector<16x96xf32> to vector<16x8xf32>
    %59 = vector.extract_strided_slice %56 {offsets = [0, 64], sizes = [16, 8], strides = [1, 1]} : vector<16x96xf32> to vector<16x8xf32>
    %60 = tpu.transpose %58, [1, 0] : vector<16x8xf32> -> vector<8x16xf32>
    %cst_17 = arith.constant dense<0.000000e+00> : vector<16x16xf32>
    %61 = tpu.matmul %57, %60, %cst_17 {dimension_numbers = #tpu.dot_dimension_numbers<[1], [0], [0], [1], [0, 0, 1, 1], [], []>} : vector<16x8xf32>, vector<8x16xf32>, vector<16x16xf32> -> vector<16x16xf32>
    %cst_18 = arith.constant 0.353553385 : f32
    %62 = vector.broadcast %cst_18 : f32 to vector<16x16xf32>
    %63 = arith.mulf %61, %62 : vector<16x16xf32>
    %64 = arith.addf %63, %29 : vector<16x16xf32>
    %cst_19 = arith.constant dense<0xFF800000> : vector<16xf32>
    %65 = vector.multi_reduction <maximumf>, %64, %cst_19 [1] : vector<16x16xf32> to vector<16xf32>
    %66 = vector.shape_cast %65 : vector<16xf32> to vector<16x1xf32>
    %67 = vector.broadcast %66 : vector<16x1xf32> to vector<16x16xf32>
    %68 = arith.subf %64, %67 : vector<16x16xf32>
    %69 = math.exp %68 : vector<16x16xf32>
    %cst_20 = arith.constant dense<0.000000e+00> : vector<16xf32>
    %70 = vector.multi_reduction <add>, %69, %cst_20 [1] : vector<16x16xf32> to vector<16xf32>
    %71 = vector.shape_cast %70 : vector<16xf32> to vector<16x1xf32>
    %72 = tpu.reciprocal %71 {approx = true} : vector<16x1xf32> -> vector<16x1xf32>
    %73 = vector.broadcast %72 : vector<16x1xf32> to vector<16x16xf32>
    %74 = arith.mulf %69, %73 : vector<16x16xf32>
    %cst_21 = arith.constant dense<0.000000e+00> : vector<16x8xf32>
    %75 = tpu.matmul %74, %59, %cst_21 {dimension_numbers = #tpu.dot_dimension_numbers<[1], [0], [0], [1], [0, 0, 1, 1], [], []>} : vector<16x16xf32>, vector<16x8xf32>, vector<16x8xf32> -> vector<16x8xf32>
    %c0_22 = arith.constant 0 : index
    %c0_23 = arith.constant 0 : index
    %76 = vector.load %arg8[%c0_22, %c0_23] : memref<16x32xf32, #tpu.memory_space<vmem>>, vector<16x8xf32>
    tpu.vector_store %arg8[%c0_22, %c0_23], %75 {strides = array<i32>} : memref<16x32xf32, #tpu.memory_space<vmem>>, vector<16x8xf32>,
    %77 = vector.extract_strided_slice %56 {offsets = [0, 8], sizes = [16, 8], strides = [1, 1]} : vector<16x96xf32> to vector<16x8xf32>
    %78 = vector.extract_strided_slice %56 {offsets = [0, 40], sizes = [16, 8], strides = [1, 1]} : vector<16x96xf32> to vector<16x8xf32>
    %79 = vector.extract_strided_slice %56 {offsets = [0, 72], sizes = [16, 8], strides = [1, 1]} : vector<16x96xf32> to vector<16x8xf32>
    %80 = tpu.transpose %78, [1, 0] : vector<16x8xf32> -> vector<8x16xf32>
    %cst_24 = arith.constant dense<0.000000e+00> : vector<16x16xf32>
    %81 = tpu.matmul %77, %80, %cst_24 {dimension_numbers = #tpu.dot_dimension_numbers<[1], [0], [0], [1], [0, 0, 1, 1], [], []>} : vector<16x8xf32>, vector<8x16xf32>, vector<16x16xf32> -> vector<16x16xf32>
    %cst_25 = arith.constant 0.353553385 : f32
    %82 = vector.broadcast %cst_25 : f32 to vector<16x16xf32>
    %83 = arith.mulf %81, %82 : vector<16x16xf32>
    %84 = arith.addf %83, %29 : vector<16x16xf32>
    %cst_26 = arith.constant dense<0xFF800000> : vector<16xf32>
    %85 = vector.multi_reduction <maximumf>, %84, %cst_26 [1] : vector<16x16xf32> to vector<16xf32>
    %86 = vector.shape_cast %85 : vector<16xf32> to vector<16x1xf32>
    %87 = vector.broadcast %86 : vector<16x1xf32> to vector<16x16xf32>
    %88 = arith.subf %84, %87 : vector<16x16xf32>
    %89 = math.exp %88 : vector<16x16xf32>
    %cst_27 = arith.constant dense<0.000000e+00> : vector<16xf32>
    %90 = vector.multi_reduction <add>, %89, %cst_27 [1] : vector<16x16xf32> to vector<16xf32>
    %91 = vector.shape_cast %90 : vector<16xf32> to vector<16x1xf32>
    %92 = tpu.reciprocal %91 {approx = true} : vector<16x1xf32> -> vector<16x1xf32>
    %93 = vector.broadcast %92 : vector<16x1xf32> to vector<16x16xf32>
    %94 = arith.mulf %89, %93 : vector<16x16xf32>
    %cst_28 = arith.constant dense<0.000000e+00> : vector<16x8xf32>
    %95 = tpu.matmul %94, %79, %cst_28 {dimension_numbers = #tpu.dot_dimension_numbers<[1], [0], [0], [1], [0, 0, 1, 1], [], []>} : vector<16x16xf32>, vector<16x8xf32>, vector<16x8xf32> -> vector<16x8xf32>
    %c0_29 = arith.constant 0 : index
    %c8 = arith.constant 8 : index
    %96 = vector.load %arg8[%c0_29, %c8] : memref<16x32xf32, #tpu.memory_space<vmem>>, vector<16x8xf32>
    tpu.vector_store %arg8[%c0_29, %c8], %95 {strides = array<i32>} : memref<16x32xf32, #tpu.memory_space<vmem>>, vector<16x8xf32>,
    %97 = vector.extract_strided_slice %56 {offsets = [0, 16], sizes = [16, 8], strides = [1, 1]} : vector<16x96xf32> to vector<16x8xf32>
    %98 = vector.extract_strided_slice %56 {offsets = [0, 48], sizes = [16, 8], strides = [1, 1]} : vector<16x96xf32> to vector<16x8xf32>
    %99 = vector.extract_strided_slice %56 {offsets = [0, 80], sizes = [16, 8], strides = [1, 1]} : vector<16x96xf32> to vector<16x8xf32>
    %100 = tpu.transpose %98, [1, 0] : vector<16x8xf32> -> vector<8x16xf32>
    %cst_30 = arith.constant dense<0.000000e+00> : vector<16x16xf32>
    %101 = tpu.matmul %97, %100, %cst_30 {dimension_numbers = #tpu.dot_dimension_numbers<[1], [0], [0], [1], [0, 0, 1, 1], [], []>} : vector<16x8xf32>, vector<8x16xf32>, vector<16x16xf32> -> vector<16x16xf32>
    %cst_31 = arith.constant 0.353553385 : f32
    %102 = vector.broadcast %cst_31 : f32 to vector<16x16xf32>
    %103 = arith.mulf %101, %102 : vector<16x16xf32>
    %104 = arith.addf %103, %29 : vector<16x16xf32>
    %cst_32 = arith.constant dense<0xFF800000> : vector<16xf32>
    %105 = vector.multi_reduction <maximumf>, %104, %cst_32 [1] : vector<16x16xf32> to vector<16xf32>
    %106 = vector.shape_cast %105 : vector<16xf32> to vector<16x1xf32>
    %107 = vector.broadcast %106 : vector<16x1xf32> to vector<16x16xf32>
    %108 = arith.subf %104, %107 : vector<16x16xf32>
    %109 = math.exp %108 : vector<16x16xf32>
    %cst_33 = arith.constant dense<0.000000e+00> : vector<16xf32>
    %110 = vector.multi_reduction <add>, %109, %cst_33 [1] : vector<16x16xf32> to vector<16xf32>
    %111 = vector.shape_cast %110 : vector<16xf32> to vector<16x1xf32>
    %112 = tpu.reciprocal %111 {approx = true} : vector<16x1xf32> -> vector<16x1xf32>
    %113 = vector.broadcast %112 : vector<16x1xf32> to vector<16x16xf32>
    %114 = arith.mulf %109, %113 : vector<16x16xf32>
    %cst_34 = arith.constant dense<0.000000e+00> : vector<16x8xf32>
    %115 = tpu.matmul %114, %99, %cst_34 {dimension_numbers = #tpu.dot_dimension_numbers<[1], [0], [0], [1], [0, 0, 1, 1], [], []>} : vector<16x16xf32>, vector<16x8xf32>, vector<16x8xf32> -> vector<16x8xf32>
    %c0_35 = arith.constant 0 : index
    %c16 = arith.constant 16 : index
    %116 = vector.load %arg8[%c0_35, %c16] : memref<16x32xf32, #tpu.memory_space<vmem>>, vector<16x8xf32>
    tpu.vector_store %arg8[%c0_35, %c16], %115 {strides = array<i32>} : memref<16x32xf32, #tpu.memory_space<vmem>>, vector<16x8xf32>,
    %117 = vector.extract_strided_slice %56 {offsets = [0, 24], sizes = [16, 8], strides = [1, 1]} : vector<16x96xf32> to vector<16x8xf32>
    %118 = vector.extract_strided_slice %56 {offsets = [0, 56], sizes = [16, 8], strides = [1, 1]} : vector<16x96xf32> to vector<16x8xf32>
    %119 = vector.extract_strided_slice %56 {offsets = [0, 88], sizes = [16, 8], strides = [1, 1]} : vector<16x96xf32> to vector<16x8xf32>
    %120 = tpu.transpose %118, [1, 0] : vector<16x8xf32> -> vector<8x16xf32>
    %cst_36 = arith.constant dense<0.000000e+00> : vector<16x16xf32>
    %121 = tpu.matmul %117, %120, %cst_36 {dimension_numbers = #tpu.dot_dimension_numbers<[1], [0], [0], [1], [0, 0, 1, 1], [], []>} : vector<16x8xf32>, vector<8x16xf32>, vector<16x16xf32> -> vector<16x16xf32>
    %cst_37 = arith.constant 0.353553385 : f32
    %122 = vector.broadcast %cst_37 : f32 to vector<16x16xf32>
    %123 = arith.mulf %121, %122 : vector<16x16xf32>
    %124 = arith.addf %123, %29 : vector<16x16xf32>
    %cst_38 = arith.constant dense<0xFF800000> : vector<16xf32>
    %125 = vector.multi_reduction <maximumf>, %124, %cst_38 [1] : vector<16x16xf32> to vector<16xf32>
    %126 = vector.shape_cast %125 : vector<16xf32> to vector<16x1xf32>
    %127 = vector.broadcast %126 : vector<16x1xf32> to vector<16x16xf32>
    %128 = arith.subf %124, %127 : vector<16x16xf32>
    %129 = math.exp %128 : vector<16x16xf32>
    %cst_39 = arith.constant dense<0.000000e+00> : vector<16xf32>
    %130 = vector.multi_reduction <add>, %129, %cst_39 [1] : vector<16x16xf32> to vector<16xf32>
    %131 = vector.shape_cast %130 : vector<16xf32> to vector<16x1xf32>
    %132 = tpu.reciprocal %131 {approx = true} : vector<16x1xf32> -> vector<16x1xf32>
    %133 = vector.broadcast %132 : vector<16x1xf32> to vector<16x16xf32>
    %134 = arith.mulf %129, %133 : vector<16x16xf32>
    %cst_40 = arith.constant dense<0.000000e+00> : vector<16x8xf32>
    %135 = tpu.matmul %134, %119, %cst_40 {dimension_numbers = #tpu.dot_dimension_numbers<[1], [0], [0], [1], [0, 0, 1, 1], [], []>} : vector<16x16xf32>, vector<16x8xf32>, vector<16x8xf32> -> vector<16x8xf32>
    %c0_41 = arith.constant 0 : index
    %c24 = arith.constant 24 : index
    %136 = vector.load %arg8[%c0_41, %c24] : memref<16x32xf32, #tpu.memory_space<vmem>>, vector<16x8xf32>
    tpu.vector_store %arg8[%c0_41, %c24], %135 {strides = array<i32>} : memref<16x32xf32, #tpu.memory_space<vmem>>, vector<16x8xf32>,
    %c0_42 = arith.constant 0 : index
    %c0_43 = arith.constant 0 : index
    %137 = vector.load %arg8[%c0_42, %c0_43] : memref<16x32xf32, #tpu.memory_space<vmem>>, vector<16x32xf32>
    %cst_44 = arith.constant dense<0.000000e+00> : vector<16x32xf32>
    %138 = tpu.matmul %137, %35, %cst_44 {dimension_numbers = #tpu.dot_dimension_numbers<[1], [0], [0], [1], [0, 0, 1, 1], [], []>} : vector<16x32xf32>, vector<32x32xf32>, vector<16x32xf32> -> vector<16x32xf32>
    %139 = vector.shape_cast %40 : vector<32xf32> to vector<1x32xf32>
    %140 = vector.broadcast %139 : vector<1x32xf32> to vector<16x32xf32>
    %141 = arith.addf %138, %140 : vector<16x32xf32>
    %142 = arith.addf %28, %141 : vector<16x32xf32>
    %cst_45 = arith.constant dense<0.000000e+00> : vector<16xf32>
    %143 = vector.multi_reduction <add>, %142, %cst_45 [1] : vector<16x32xf32> to vector<16xf32>
    %144 = vector.shape_cast %143 : vector<16xf32> to vector<16x1xf32>
    %cst_46 = arith.constant 3.200000e+01 : f32
    %145 = vector.broadcast %cst_46 : f32 to vector<16x1xf32>
    %146 = arith.divf %144, %145 : vector<16x1xf32>
    %147 = vector.broadcast %146 : vector<16x1xf32> to vector<16x32xf32>
    %148 = arith.subf %142, %147 : vector<16x32xf32>
    %149 = arith.mulf %148, %148 : vector<16x32xf32>
    %cst_47 = arith.constant dense<0.000000e+00> : vector<16xf32>
    %150 = vector.multi_reduction <add>, %149, %cst_47 [1] : vector<16x32xf32> to vector<16xf32>
    %151 = vector.shape_cast %150 : vector<16xf32> to vector<16x1xf32>
    %cst_48 = arith.constant 3.200000e+01 : f32
    %152 = vector.broadcast %cst_48 : f32 to vector<16x1xf32>
    %153 = arith.divf %151, %152 : vector<16x1xf32>
    %154 = vector.broadcast %146 : vector<16x1xf32> to vector<16x32xf32>
    %155 = arith.subf %142, %154 : vector<16x32xf32>
    %cst_49 = arith.constant 9.99999996E-13 : f32
    %156 = vector.broadcast %cst_49 : f32 to vector<16x1xf32>
    %157 = arith.addf %153, %156 : vector<16x1xf32>
    %158 = math.rsqrt %157 : vector<16x1xf32>
    %159 = vector.broadcast %158 : vector<16x1xf32> to vector<16x32xf32>
    %160 = arith.mulf %155, %159 : vector<16x32xf32>
    %161 = vector.shape_cast %42 : vector<32xf32> to vector<1x32xf32>
    %162 = vector.broadcast %161 : vector<1x32xf32> to vector<16x32xf32>
    %163 = arith.mulf %160, %162 : vector<16x32xf32>
    %164 = vector.shape_cast %44 : vector<32xf32> to vector<1x32xf32>
    %165 = vector.broadcast %164 : vector<1x32xf32> to vector<16x32xf32>
    %166 = arith.addf %163, %165 : vector<16x32xf32>
    %cst_50 = arith.constant dense<0.000000e+00> : vector<16x64xf32>
    %167 = tpu.matmul %166, %36, %cst_50 {dimension_numbers = #tpu.dot_dimension_numbers<[1], [0], [0], [1], [0, 0, 1, 1], [], []>} : vector<16x32xf32>, vector<32x64xf32>, vector<16x64xf32> -> vector<16x64xf32>
    %168 = vector.shape_cast %46 : vector<64xf32> to vector<1x64xf32>
    %169 = vector.broadcast %168 : vector<1x64xf32> to vector<16x64xf32>
    %170 = arith.addf %167, %169 : vector<16x64xf32>
    %cst_51 = arith.constant 5.000000e-01 : f32
    %171 = vector.broadcast %cst_51 : f32 to vector<16x64xf32>
    %172 = arith.mulf %171, %170 : vector<16x64xf32>
    %cst_52 = arith.constant 4.471500e-02 : f32
    %173 = vector.broadcast %cst_52 : f32 to vector<16x64xf32>
    %174 = arith.mulf %173, %170 : vector<16x64xf32>
    %175 = arith.mulf %174, %170 : vector<16x64xf32>
    %176 = arith.mulf %175, %170 : vector<16x64xf32>
    %177 = arith.addf %170, %176 : vector<16x64xf32>
    %cst_53 = arith.constant 0.797884583 : f32
    %178 = vector.broadcast %cst_53 : f32 to vector<16x64xf32>
    %179 = arith.mulf %178, %177 : vector<16x64xf32>
    %180 = math.tanh %179 : vector<16x64xf32>
    %cst_54 = arith.constant 1.000000e+00 : f32
    %181 = vector.broadcast %cst_54 : f32 to vector<16x64xf32>
    %182 = arith.addf %181, %180 : vector<16x64xf32>
    %183 = arith.mulf %172, %182 : vector<16x64xf32>
    %c0_55 = arith.constant 0 : index
    %c0_56 = arith.constant 0 : index
    %c0_57 = arith.constant 0 : index
    %184 = vector.load %arg5[%c0_55, %c0_56, %c0_57] : memref<2x64x32xf32, #tpu.memory_space<vmem>>, vector<1x64x32xf32>
    %185 = vector.shape_cast %184 : vector<1x64x32xf32> to vector<64x32xf32>
    %cst_58 = arith.constant dense<0.000000e+00> : vector<16x32xf32>
    %186 = tpu.matmul %183, %185, %cst_58 {dimension_numbers = #tpu.dot_dimension_numbers<[1], [0], [0], [1], [0, 0, 1, 1], [], []>} : vector<16x64xf32>, vector<64x32xf32>, vector<16x32xf32> -> vector<16x32xf32>
    %187 = vector.shape_cast %48 : vector<32xf32> to vector<1x32xf32>
    %188 = vector.broadcast %187 : vector<1x32xf32> to vector<16x32xf32>
    %189 = arith.addf %186, %188 : vector<16x32xf32>
    %190 = arith.addf %166, %189 : vector<16x32xf32>
    %cst_59 = arith.constant dense<0.000000e+00> : vector<16xf32>
    %191 = vector.multi_reduction <add>, %190, %cst_59 [1] : vector<16x32xf32> to vector<16xf32>
    %192 = vector.shape_cast %191 : vector<16xf32> to vector<16x1xf32>
    %cst_60 = arith.constant 3.200000e+01 : f32
    %193 = vector.broadcast %cst_60 : f32 to vector<16x1xf32>
    %194 = arith.divf %192, %193 : vector<16x1xf32>
    %195 = vector.broadcast %194 : vector<16x1xf32> to vector<16x32xf32>
    %196 = arith.subf %190, %195 : vector<16x32xf32>
    %197 = arith.mulf %196, %196 : vector<16x32xf32>
    %cst_61 = arith.constant dense<0.000000e+00> : vector<16xf32>
    %198 = vector.multi_reduction <add>, %197, %cst_61 [1] : vector<16x32xf32> to vector<16xf32>
    %199 = vector.shape_cast %198 : vector<16xf32> to vector<16x1xf32>
    %cst_62 = arith.constant 3.200000e+01 : f32
    %200 = vector.broadcast %cst_62 : f32 to vector<16x1xf32>
    %201 = arith.divf %199, %200 : vector<16x1xf32>
    %202 = vector.broadcast %194 : vector<16x1xf32> to vector<16x32xf32>
    %203 = arith.subf %190, %202 : vector<16x32xf32>
    %cst_63 = arith.constant 9.99999996E-13 : f32
    %204 = vector.broadcast %cst_63 : f32 to vector<16x1xf32>
    %205 = arith.addf %201, %204 : vector<16x1xf32>
    %206 = math.rsqrt %205 : vector<16x1xf32>
    %207 = vector.broadcast %206 : vector<16x1xf32> to vector<16x32xf32>
    %208 = arith.mulf %203, %207 : vector<16x32xf32>
    %209 = vector.shape_cast %50 : vector<32xf32> to vector<1x32xf32>
    %210 = vector.broadcast %209 : vector<1x32xf32> to vector<16x32xf32>
    %211 = arith.mulf %208, %210 : vector<16x32xf32>
    %212 = vector.shape_cast %52 : vector<32xf32> to vector<1x32xf32>
    %213 = vector.broadcast %212 : vector<1x32xf32> to vector<16x32xf32>
    %214 = arith.addf %211, %213 : vector<16x32xf32>
    %c1_64 = arith.constant 1 : index
    %c0_65 = arith.constant 0 : index
    %c0_66 = arith.constant 0 : index
    %215 = vector.load %arg4[%c1_64, %c0_65, %c0_66] : memref<2x32x192xf32, #tpu.memory_space<vmem>>, vector<1x32x192xf32>
    %216 = vector.shape_cast %215 : vector<1x32x192xf32> to vector<32x192xf32>
    %c1_67 = arith.constant 1 : index
    %c0_68 = arith.constant 0 : index
    %c0_69 = arith.constant 0 : index
    %217 = vector.load %arg6[%c1_67, %c0_68, %c0_69] : memref<2x8x96xf32, #tpu.memory_space<vmem>>, vector<1x8x96xf32>
    %218 = vector.shape_cast %217 : vector<1x8x96xf32> to vector<8x96xf32>
    %219 = vector.extract_strided_slice %216 {offsets = [0, 0], sizes = [32, 96], strides = [1, 1]} : vector<32x192xf32> to vector<32x96xf32>
    %220 = vector.extract_strided_slice %216 {offsets = [0, 96], sizes = [32, 32], strides = [1, 1]} : vector<32x192xf32> to vector<32x32xf32>
    %221 = vector.extract_strided_slice %216 {offsets = [0, 128], sizes = [32, 64], strides = [1, 1]} : vector<32x192xf32> to vector<32x64xf32>
    %222 = vector.extract_strided_slice %218 {offsets = [0, 0], sizes = [1, 96], strides = [1, 1]} : vector<8x96xf32> to vector<1x96xf32>
    %223 = vector.shape_cast %222 : vector<1x96xf32> to vector<96xf32>
    %224 = vector.extract_strided_slice %218 {offsets = [1, 0], sizes = [1, 32], strides = [1, 1]} : vector<8x96xf32> to vector<1x32xf32>
    %225 = vector.shape_cast %224 : vector<1x32xf32> to vector<32xf32>
    %226 = vector.extract_strided_slice %218 {offsets = [2, 0], sizes = [1, 32], strides = [1, 1]} : vector<8x96xf32> to vector<1x32xf32>
    %227 = vector.shape_cast %226 : vector<1x32xf32> to vector<32xf32>
    %228 = vector.extract_strided_slice %218 {offsets = [3, 0], sizes = [1, 32], strides = [1, 1]} : vector<8x96xf32> to vector<1x32xf32>
    %229 = vector.shape_cast %228 : vector<1x32xf32> to vector<32xf32>
    %230 = vector.extract_strided_slice %218 {offsets = [4, 0], sizes = [1, 64], strides = [1, 1]} : vector<8x96xf32> to vector<1x64xf32>
    %231 = vector.shape_cast %230 : vector<1x64xf32> to vector<64xf32>
    %232 = vector.extract_strided_slice %218 {offsets = [5, 0], sizes = [1, 32], strides = [1, 1]} : vector<8x96xf32> to vector<1x32xf32>
    %233 = vector.shape_cast %232 : vector<1x32xf32> to vector<32xf32>
    %234 = vector.extract_strided_slice %218 {offsets = [6, 0], sizes = [1, 32], strides = [1, 1]} : vector<8x96xf32> to vector<1x32xf32>
    %235 = vector.shape_cast %234 : vector<1x32xf32> to vector<32xf32>
    %236 = vector.extract_strided_slice %218 {offsets = [7, 0], sizes = [1, 32], strides = [1, 1]} : vector<8x96xf32> to vector<1x32xf32>
    %237 = vector.shape_cast %236 : vector<1x32xf32> to vector<32xf32>
    %cst_70 = arith.constant dense<0.000000e+00> : vector<16x96xf32>
    %238 = tpu.matmul %214, %219, %cst_70 {dimension_numbers = #tpu.dot_dimension_numbers<[1], [0], [0], [1], [0, 0, 1, 1], [], []>} : vector<16x32xf32>, vector<32x96xf32>, vector<16x96xf32> -> vector<16x96xf32>
    %239 = vector.shape_cast %223 : vector<96xf32> to vector<1x96xf32>
    %240 = vector.broadcast %239 : vector<1x96xf32> to vector<16x96xf32>
    %241 = arith.addf %238, %240 : vector<16x96xf32>
    %242 = vector.extract_strided_slice %241 {offsets = [0, 0], sizes = [16, 8], strides = [1, 1]} : vector<16x96xf32> to vector<16x8xf32>
    %243 = vector.extract_strided_slice %241 {offsets = [0, 32], sizes = [16, 8], strides = [1, 1]} : vector<16x96xf32> to vector<16x8xf32>
    %244 = vector.extract_strided_slice %241 {offsets = [0, 64], sizes = [16, 8], strides = [1, 1]} : vector<16x96xf32> to vector<16x8xf32>
    %245 = tpu.transpose %243, [1, 0] : vector<16x8xf32> -> vector<8x16xf32>
    %cst_71 = arith.constant dense<0.000000e+00> : vector<16x16xf32>
    %246 = tpu.matmul %242, %245, %cst_71 {dimension_numbers = #tpu.dot_dimension_numbers<[1], [0], [0], [1], [0, 0, 1, 1], [], []>} : vector<16x8xf32>, vector<8x16xf32>, vector<16x16xf32> -> vector<16x16xf32>
    %cst_72 = arith.constant 0.353553385 : f32
    %247 = vector.broadcast %cst_72 : f32 to vector<16x16xf32>
    %248 = arith.mulf %246, %247 : vector<16x16xf32>
    %249 = arith.addf %248, %29 : vector<16x16xf32>
    %cst_73 = arith.constant dense<0xFF800000> : vector<16xf32>
    %250 = vector.multi_reduction <maximumf>, %249, %cst_73 [1] : vector<16x16xf32> to vector<16xf32>
    %251 = vector.shape_cast %250 : vector<16xf32> to vector<16x1xf32>
    %252 = vector.broadcast %251 : vector<16x1xf32> to vector<16x16xf32>
    %253 = arith.subf %249, %252 : vector<16x16xf32>
    %254 = math.exp %253 : vector<16x16xf32>
    %cst_74 = arith.constant dense<0.000000e+00> : vector<16xf32>
    %255 = vector.multi_reduction <add>, %254, %cst_74 [1] : vector<16x16xf32> to vector<16xf32>
    %256 = vector.shape_cast %255 : vector<16xf32> to vector<16x1xf32>
    %257 = tpu.reciprocal %256 {approx = true} : vector<16x1xf32> -> vector<16x1xf32>
    %258 = vector.broadcast %257 : vector<16x1xf32> to vector<16x16xf32>
    %259 = arith.mulf %254, %258 : vector<16x16xf32>
    %cst_75 = arith.constant dense<0.000000e+00> : vector<16x8xf32>
    %260 = tpu.matmul %259, %244, %cst_75 {dimension_numbers = #tpu.dot_dimension_numbers<[1], [0], [0], [1], [0, 0, 1, 1], [], []>} : vector<16x16xf32>, vector<16x8xf32>, vector<16x8xf32> -> vector<16x8xf32>
    %c0_76 = arith.constant 0 : index
    %c0_77 = arith.constant 0 : index
    %261 = vector.load %arg8[%c0_76, %c0_77] : memref<16x32xf32, #tpu.memory_space<vmem>>, vector<16x8xf32>
    tpu.vector_store %arg8[%c0_76, %c0_77], %260 {strides = array<i32>} : memref<16x32xf32, #tpu.memory_space<vmem>>, vector<16x8xf32>,
    %262 = vector.extract_strided_slice %241 {offsets = [0, 8], sizes = [16, 8], strides = [1, 1]} : vector<16x96xf32> to vector<16x8xf32>
    %263 = vector.extract_strided_slice %241 {offsets = [0, 40], sizes = [16, 8], strides = [1, 1]} : vector<16x96xf32> to vector<16x8xf32>
    %264 = vector.extract_strided_slice %241 {offsets = [0, 72], sizes = [16, 8], strides = [1, 1]} : vector<16x96xf32> to vector<16x8xf32>
    %265 = tpu.transpose %263, [1, 0] : vector<16x8xf32> -> vector<8x16xf32>
    %cst_78 = arith.constant dense<0.000000e+00> : vector<16x16xf32>
    %266 = tpu.matmul %262, %265, %cst_78 {dimension_numbers = #tpu.dot_dimension_numbers<[1], [0], [0], [1], [0, 0, 1, 1], [], []>} : vector<16x8xf32>, vector<8x16xf32>, vector<16x16xf32> -> vector<16x16xf32>
    %cst_79 = arith.constant 0.353553385 : f32
    %267 = vector.broadcast %cst_79 : f32 to vector<16x16xf32>
    %268 = arith.mulf %266, %267 : vector<16x16xf32>
    %269 = arith.addf %268, %29 : vector<16x16xf32>
    %cst_80 = arith.constant dense<0xFF800000> : vector<16xf32>
    %270 = vector.multi_reduction <maximumf>, %269, %cst_80 [1] : vector<16x16xf32> to vector<16xf32>
    %271 = vector.shape_cast %270 : vector<16xf32> to vector<16x1xf32>
    %272 = vector.broadcast %271 : vector<16x1xf32> to vector<16x16xf32>
    %273 = arith.subf %269, %272 : vector<16x16xf32>
    %274 = math.exp %273 : vector<16x16xf32>
    %cst_81 = arith.constant dense<0.000000e+00> : vector<16xf32>
    %275 = vector.multi_reduction <add>, %274, %cst_81 [1] : vector<16x16xf32> to vector<16xf32>
    %276 = vector.shape_cast %275 : vector<16xf32> to vector<16x1xf32>
    %277 = tpu.reciprocal %276 {approx = true} : vector<16x1xf32> -> vector<16x1xf32>
    %278 = vector.broadcast %277 : vector<16x1xf32> to vector<16x16xf32>
    %279 = arith.mulf %274, %278 : vector<16x16xf32>
    %cst_82 = arith.constant dense<0.000000e+00> : vector<16x8xf32>
    %280 = tpu.matmul %279, %264, %cst_82 {dimension_numbers = #tpu.dot_dimension_numbers<[1], [0], [0], [1], [0, 0, 1, 1], [], []>} : vector<16x16xf32>, vector<16x8xf32>, vector<16x8xf32> -> vector<16x8xf32>
    %c0_83 = arith.constant 0 : index
    %c8_84 = arith.constant 8 : index
    %281 = vector.load %arg8[%c0_83, %c8_84] : memref<16x32xf32, #tpu.memory_space<vmem>>, vector<16x8xf32>
    tpu.vector_store %arg8[%c0_83, %c8_84], %280 {strides = array<i32>} : memref<16x32xf32, #tpu.memory_space<vmem>>, vector<16x8xf32>,
    %282 = vector.extract_strided_slice %241 {offsets = [0, 16], sizes = [16, 8], strides = [1, 1]} : vector<16x96xf32> to vector<16x8xf32>
    %283 = vector.extract_strided_slice %241 {offsets = [0, 48], sizes = [16, 8], strides = [1, 1]} : vector<16x96xf32> to vector<16x8xf32>
    %284 = vector.extract_strided_slice %241 {offsets = [0, 80], sizes = [16, 8], strides = [1, 1]} : vector<16x96xf32> to vector<16x8xf32>
    %285 = tpu.transpose %283, [1, 0] : vector<16x8xf32> -> vector<8x16xf32>
    %cst_85 = arith.constant dense<0.000000e+00> : vector<16x16xf32>
    %286 = tpu.matmul %282, %285, %cst_85 {dimension_numbers = #tpu.dot_dimension_numbers<[1], [0], [0], [1], [0, 0, 1, 1], [], []>} : vector<16x8xf32>, vector<8x16xf32>, vector<16x16xf32> -> vector<16x16xf32>
    %cst_86 = arith.constant 0.353553385 : f32
    %287 = vector.broadcast %cst_86 : f32 to vector<16x16xf32>
    %288 = arith.mulf %286, %287 : vector<16x16xf32>
    %289 = arith.addf %288, %29 : vector<16x16xf32>
    %cst_87 = arith.constant dense<0xFF800000> : vector<16xf32>
    %290 = vector.multi_reduction <maximumf>, %289, %cst_87 [1] : vector<16x16xf32> to vector<16xf32>
    %291 = vector.shape_cast %290 : vector<16xf32> to vector<16x1xf32>
    %292 = vector.broadcast %291 : vector<16x1xf32> to vector<16x16xf32>
    %293 = arith.subf %289, %292 : vector<16x16xf32>
    %294 = math.exp %293 : vector<16x16xf32>
    %cst_88 = arith.constant dense<0.000000e+00> : vector<16xf32>
    %295 = vector.multi_reduction <add>, %294, %cst_88 [1] : vector<16x16xf32> to vector<16xf32>
    %296 = vector.shape_cast %295 : vector<16xf32> to vector<16x1xf32>
    %297 = tpu.reciprocal %296 {approx = true} : vector<16x1xf32> -> vector<16x1xf32>
    %298 = vector.broadcast %297 : vector<16x1xf32> to vector<16x16xf32>
    %299 = arith.mulf %294, %298 : vector<16x16xf32>
    %cst_89 = arith.constant dense<0.000000e+00> : vector<16x8xf32>
    %300 = tpu.matmul %299, %284, %cst_89 {dimension_numbers = #tpu.dot_dimension_numbers<[1], [0], [0], [1], [0, 0, 1, 1], [], []>} : vector<16x16xf32>, vector<16x8xf32>, vector<16x8xf32> -> vector<16x8xf32>
    %c0_90 = arith.constant 0 : index
    %c16_91 = arith.constant 16 : index
    %301 = vector.load %arg8[%c0_90, %c16_91] : memref<16x32xf32, #tpu.memory_space<vmem>>, vector<16x8xf32>
    tpu.vector_store %arg8[%c0_90, %c16_91], %300 {strides = array<i32>} : memref<16x32xf32, #tpu.memory_space<vmem>>, vector<16x8xf32>,
    %302 = vector.extract_strided_slice %241 {offsets = [0, 24], sizes = [16, 8], strides = [1, 1]} : vector<16x96xf32> to vector<16x8xf32>
    %303 = vector.extract_strided_slice %241 {offsets = [0, 56], sizes = [16, 8], strides = [1, 1]} : vector<16x96xf32> to vector<16x8xf32>
    %304 = vector.extract_strided_slice %241 {offsets = [0, 88], sizes = [16, 8], strides = [1, 1]} : vector<16x96xf32> to vector<16x8xf32>
    %305 = tpu.transpose %303, [1, 0] : vector<16x8xf32> -> vector<8x16xf32>
    %cst_92 = arith.constant dense<0.000000e+00> : vector<16x16xf32>
    %306 = tpu.matmul %302, %305, %cst_92 {dimension_numbers = #tpu.dot_dimension_numbers<[1], [0], [0], [1], [0, 0, 1, 1], [], []>} : vector<16x8xf32>, vector<8x16xf32>, vector<16x16xf32> -> vector<16x16xf32>
    %cst_93 = arith.constant 0.353553385 : f32
    %307 = vector.broadcast %cst_93 : f32 to vector<16x16xf32>
    %308 = arith.mulf %306, %307 : vector<16x16xf32>
    %309 = arith.addf %308, %29 : vector<16x16xf32>
    %cst_94 = arith.constant dense<0xFF800000> : vector<16xf32>
    %310 = vector.multi_reduction <maximumf>, %309, %cst_94 [1] : vector<16x16xf32> to vector<16xf32>
    %311 = vector.shape_cast %310 : vector<16xf32> to vector<16x1xf32>
    %312 = vector.broadcast %311 : vector<16x1xf32> to vector<16x16xf32>
    %313 = arith.subf %309, %312 : vector<16x16xf32>
    %314 = math.exp %313 : vector<16x16xf32>
    %cst_95 = arith.constant dense<0.000000e+00> : vector<16xf32>
    %315 = vector.multi_reduction <add>, %314, %cst_95 [1] : vector<16x16xf32> to vector<16xf32>
    %316 = vector.shape_cast %315 : vector<16xf32> to vector<16x1xf32>
    %317 = tpu.reciprocal %316 {approx = true} : vector<16x1xf32> -> vector<16x1xf32>
    %318 = vector.broadcast %317 : vector<16x1xf32> to vector<16x16xf32>
    %319 = arith.mulf %314, %318 : vector<16x16xf32>
    %cst_96 = arith.constant dense<0.000000e+00> : vector<16x8xf32>
    %320 = tpu.matmul %319, %304, %cst_96 {dimension_numbers = #tpu.dot_dimension_numbers<[1], [0], [0], [1], [0, 0, 1, 1], [], []>} : vector<16x16xf32>, vector<16x8xf32>, vector<16x8xf32> -> vector<16x8xf32>
    %c0_97 = arith.constant 0 : index
    %c24_98 = arith.constant 24 : index
    %321 = vector.load %arg8[%c0_97, %c24_98] : memref<16x32xf32, #tpu.memory_space<vmem>>, vector<16x8xf32>
    tpu.vector_store %arg8[%c0_97, %c24_98], %320 {strides = array<i32>} : memref<16x32xf32, #tpu.memory_space<vmem>>, vector<16x8xf32>,
    %c0_99 = arith.constant 0 : index
    %c0_100 = arith.constant 0 : index
    %322 = vector.load %arg8[%c0_99, %c0_100] : memref<16x32xf32, #tpu.memory_space<vmem>>, vector<16x32xf32>
    %cst_101 = arith.constant dense<0.000000e+00> : vector<16x32xf32>
    %323 = tpu.matmul %322, %220, %cst_101 {dimension_numbers = #tpu.dot_dimension_numbers<[1], [0], [0], [1], [0, 0, 1, 1], [], []>} : vector<16x32xf32>, vector<32x32xf32>, vector<16x32xf32> -> vector<16x32xf32>
    %324 = vector.shape_cast %225 : vector<32xf32> to vector<1x32xf32>
    %325 = vector.broadcast %324 : vector<1x32xf32> to vector<16x32xf32>
    %326 = arith.addf %323, %325 : vector<16x32xf32>
    %327 = arith.addf %214, %326 : vector<16x32xf32>
    %cst_102 = arith.constant dense<0.000000e+00> : vector<16xf32>
    %328 = vector.multi_reduction <add>, %327, %cst_102 [1] : vector<16x32xf32> to vector<16xf32>
    %329 = vector.shape_cast %328 : vector<16xf32> to vector<16x1xf32>
    %cst_103 = arith.constant 3.200000e+01 : f32
    %330 = vector.broadcast %cst_103 : f32 to vector<16x1xf32>
    %331 = arith.divf %329, %330 : vector<16x1xf32>
    %332 = vector.broadcast %331 : vector<16x1xf32> to vector<16x32xf32>
    %333 = arith.subf %327, %332 : vector<16x32xf32>
    %334 = arith.mulf %333, %333 : vector<16x32xf32>
    %cst_104 = arith.constant dense<0.000000e+00> : vector<16xf32>
    %335 = vector.multi_reduction <add>, %334, %cst_104 [1] : vector<16x32xf32> to vector<16xf32>
    %336 = vector.shape_cast %335 : vector<16xf32> to vector<16x1xf32>
    %cst_105 = arith.constant 3.200000e+01 : f32
    %337 = vector.broadcast %cst_105 : f32 to vector<16x1xf32>
    %338 = arith.divf %336, %337 : vector<16x1xf32>
    %339 = vector.broadcast %331 : vector<16x1xf32> to vector<16x32xf32>
    %340 = arith.subf %327, %339 : vector<16x32xf32>
    %cst_106 = arith.constant 9.99999996E-13 : f32
    %341 = vector.broadcast %cst_106 : f32 to vector<16x1xf32>
    %342 = arith.addf %338, %341 : vector<16x1xf32>
    %343 = math.rsqrt %342 : vector<16x1xf32>
    %344 = vector.broadcast %343 : vector<16x1xf32> to vector<16x32xf32>
    %345 = arith.mulf %340, %344 : vector<16x32xf32>
    %346 = vector.shape_cast %227 : vector<32xf32> to vector<1x32xf32>
    %347 = vector.broadcast %346 : vector<1x32xf32> to vector<16x32xf32>
    %348 = arith.mulf %345, %347 : vector<16x32xf32>
    %349 = vector.shape_cast %229 : vector<32xf32> to vector<1x32xf32>
    %350 = vector.broadcast %349 : vector<1x32xf32> to vector<16x32xf32>
    %351 = arith.addf %348, %350 : vector<16x32xf32>
    %cst_107 = arith.constant dense<0.000000e+00> : vector<16x64xf32>
    %352 = tpu.matmul %351, %221, %cst_107 {dimension_numbers = #tpu.dot_dimension_numbers<[1], [0], [0], [1], [0, 0, 1, 1], [], []>} : vector<16x32xf32>, vector<32x64xf32>, vector<16x64xf32> -> vector<16x64xf32>
    %353 = vector.shape_cast %231 : vector<64xf32> to vector<1x64xf32>
    %354 = vector.broadcast %353 : vector<1x64xf32> to vector<16x64xf32>
    %355 = arith.addf %352, %354 : vector<16x64xf32>
    %cst_108 = arith.constant 5.000000e-01 : f32
    %356 = vector.broadcast %cst_108 : f32 to vector<16x64xf32>
    %357 = arith.mulf %356, %355 : vector<16x64xf32>
    %cst_109 = arith.constant 4.471500e-02 : f32
    %358 = vector.broadcast %cst_109 : f32 to vector<16x64xf32>
    %359 = arith.mulf %358, %355 : vector<16x64xf32>
    %360 = arith.mulf %359, %355 : vector<16x64xf32>
    %361 = arith.mulf %360, %355 : vector<16x64xf32>
    %362 = arith.addf %355, %361 : vector<16x64xf32>
    %cst_110 = arith.constant 0.797884583 : f32
    %363 = vector.broadcast %cst_110 : f32 to vector<16x64xf32>
    %364 = arith.mulf %363, %362 : vector<16x64xf32>
    %365 = math.tanh %364 : vector<16x64xf32>
    %cst_111 = arith.constant 1.000000e+00 : f32
    %366 = vector.broadcast %cst_111 : f32 to vector<16x64xf32>
    %367 = arith.addf %366, %365 : vector<16x64xf32>
    %368 = arith.mulf %357, %367 : vector<16x64xf32>
    %c1_112 = arith.constant 1 : index
    %c0_113 = arith.constant 0 : index
    %c0_114 = arith.constant 0 : index
    %369 = vector.load %arg5[%c1_112, %c0_113, %c0_114] : memref<2x64x32xf32, #tpu.memory_space<vmem>>, vector<1x64x32xf32>
    %370 = vector.shape_cast %369 : vector<1x64x32xf32> to vector<64x32xf32>
    %cst_115 = arith.constant dense<0.000000e+00> : vector<16x32xf32>
    %371 = tpu.matmul %368, %370, %cst_115 {dimension_numbers = #tpu.dot_dimension_numbers<[1], [0], [0], [1], [0, 0, 1, 1], [], []>} : vector<16x64xf32>, vector<64x32xf32>, vector<16x32xf32> -> vector<16x32xf32>
    %372 = vector.shape_cast %233 : vector<32xf32> to vector<1x32xf32>
    %373 = vector.broadcast %372 : vector<1x32xf32> to vector<16x32xf32>
    %374 = arith.addf %371, %373 : vector<16x32xf32>
    %375 = arith.addf %351, %374 : vector<16x32xf32>
    %cst_116 = arith.constant dense<0.000000e+00> : vector<16xf32>
    %376 = vector.multi_reduction <add>, %375, %cst_116 [1] : vector<16x32xf32> to vector<16xf32>
    %377 = vector.shape_cast %376 : vector<16xf32> to vector<16x1xf32>
    %cst_117 = arith.constant 3.200000e+01 : f32
    %378 = vector.broadcast %cst_117 : f32 to vector<16x1xf32>
    %379 = arith.divf %377, %378 : vector<16x1xf32>
    %380 = vector.broadcast %379 : vector<16x1xf32> to vector<16x32xf32>
    %381 = arith.subf %375, %380 : vector<16x32xf32>
    %382 = arith.mulf %381, %381 : vector<16x32xf32>
    %cst_118 = arith.constant dense<0.000000e+00> : vector<16xf32>
    %383 = vector.multi_reduction <add>, %382, %cst_118 [1] : vector<16x32xf32> to vector<16xf32>
    %384 = vector.shape_cast %383 : vector<16xf32> to vector<16x1xf32>
    %cst_119 = arith.constant 3.200000e+01 : f32
    %385 = vector.broadcast %cst_119 : f32 to vector<16x1xf32>
    %386 = arith.divf %384, %385 : vector<16x1xf32>
    %387 = vector.broadcast %379 : vector<16x1xf32> to vector<16x32xf32>
    %388 = arith.subf %375, %387 : vector<16x32xf32>
    %cst_120 = arith.constant 9.99999996E-13 : f32
    %389 = vector.broadcast %cst_120 : f32 to vector<16x1xf32>
    %390 = arith.addf %386, %389 : vector<16x1xf32>
    %391 = math.rsqrt %390 : vector<16x1xf32>
    %392 = vector.broadcast %391 : vector<16x1xf32> to vector<16x32xf32>
    %393 = arith.mulf %388, %392 : vector<16x32xf32>
    %394 = vector.shape_cast %235 : vector<32xf32> to vector<1x32xf32>
    %395 = vector.broadcast %394 : vector<1x32xf32> to vector<16x32xf32>
    %396 = arith.mulf %393, %395 : vector<16x32xf32>
    %397 = vector.shape_cast %237 : vector<32xf32> to vector<1x32xf32>
    %398 = vector.broadcast %397 : vector<1x32xf32> to vector<16x32xf32>
    %399 = arith.addf %396, %398 : vector<16x32xf32>
    %c0_121 = arith.constant 0 : index
    %c0_122 = arith.constant 0 : index
    %400 = vector.load %arg7[%c0_121, %c0_122] : memref<16x32xf32, #tpu.memory_space<vmem>>, vector<16x32xf32>
    tpu.vector_store %arg7[%c0_121, %c0_122], %399 {strides = array<i32>} : memref<16x32xf32, #tpu.memory_space<vmem>>, vector<16x32xf32>,
    return
  }
  func.func @transform_0(%arg0: i32) -> (i32, i32) {
    %c0_i32 = arith.constant 0 : i32
    %c0_i32_0 = arith.constant 0 : i32
    %c0_i32_1 = arith.constant 0 : i32
    return %c0_i32, %c0_i32_0 : i32, i32
  }
  func.func @transform_1(%arg0: i32) -> (i32, i32) {
    %c0_i32 = arith.constant 0 : i32
    %c0_i32_0 = arith.constant 0 : i32
    %c0_i32_1 = arith.constant 0 : i32
    return %c0_i32, %c0_i32_0 : i32, i32
  }
  func.func @transform_2(%arg0: i32) -> (i32, i32) {
    %c0_i32 = arith.constant 0 : i32
    %c0_i32_0 = arith.constant 0 : i32
    %c0_i32_1 = arith.constant 0 : i32
    return %c0_i32, %c0_i32_0 : i32, i32
  }
  func.func @transform_3(%arg0: i32) -> (i32, i32, i32) {
    %c0_i32 = arith.constant 0 : i32
    %c0_i32_0 = arith.constant 0 : i32
    %c0_i32_1 = arith.constant 0 : i32
    %c0_i32_2 = arith.constant 0 : i32
    return %c0_i32, %c0_i32_0, %c0_i32_1 : i32, i32, i32
  }
  func.func @transform_4(%arg0: i32) -> (i32, i32, i32) {
    %c0_i32 = arith.constant 0 : i32
    %c0_i32_0 = arith.constant 0 : i32
    %c0_i32_1 = arith.constant 0 : i32
    %c0_i32_2 = arith.constant 0 : i32
    return %c0_i32, %c0_i32_0, %c0_i32_1 : i32, i32, i32
  }
  func.func @transform_5(%arg0: i32) -> (i32, i32, i32) {
    %c0_i32 = arith.constant 0 : i32
    %c0_i32_0 = arith.constant 0 : i32
    %c0_i32_1 = arith.constant 0 : i32
    %c0_i32_2 = arith.constant 0 : i32
    return %c0_i32, %c0_i32_0, %c0_i32_1 : i32, i32, i32
  }
  func.func @transform_6(%arg0: i32) -> (i32, i32) {
    %c0_i32 = arith.constant 0 : i32
    %c0_i32_0 = arith.constant 0 : i32
    %c0_i32_1 = arith.constant 0 : i32
    return %c0_i32, %c0_i32_0 : i32, i32
  }
}

</mosaic_0001>

<llo_original>
// kernel: mul.8
$region0: #{mul.8}
  %s0 = inlined_call_operand.vmem [shape: f32[2,8], index: 0, kind: input, shape index: {}]
  %s1 = inlined_call_operand.vmem [shape: f32[16], index: 1, kind: output, shape index: {}]
  $region1: #{mul.8} parent=0
    #allocation0 [shape = 'u8[4096]{0}', space=vmem, size = 0x1000, scoped, tag = 'scoped mem for output reshape']
    #allocation1 [shape = 'u8[4096]{0}', space=vmem, size = 0x1000, scoped, tag = 'scoped mem for input reshape']
    %s3 = sshllo.u32 0, 2
    %v4 = vld [vmem:[%s0] sm:%s3]
    %5 = vst [vmem:[#allocation1] sm:%s3] %v4
    %v6 = vld [vmem:[#allocation1] sm:$0x1]
    %vm7 = vcmask 64512
    %8 = vst.msk [vmem:[#allocation0] sm:$0x1] %vm7, %v6
    %s9 = scalar_lea.vmem [#allocation1], 1
    %v10 = vld [vmem:[%s9] sm:$0x1]
    %11 = vrot.lane.b32.xlu0 %v10, 8
    %v12 = vpop.permute.xlu0 %11
    %vm13 = vcmask 130112
    %14 = vst.msk [vmem:[#allocation0] sm:$0x1] %vm13, %v12
    %s16 = sshllo.u32 0, 1
    %v18 = vld [vmem:[#allocation0] sm:%s16]
    %s19 = sshllo.u32 0, 1
    %20 = vst [vmem:[%s1] sm:%s19] %v18

// kernel: token_level_encoder.1
$region0: #{token_level_encoder.1}
  #allocation0 [shape = 'u32[]', space=smem, size = 0x4, offset = 0x4, fixed_abs, tag = 'smem constant byte address 0x4 - core index']
  #allocation1 [shape = 'u32[144,128]{1,0:T(1,128)}', space=vmem, size = 0x12000, scoped, tag = 'internal scratch']
  #allocation2 [shape = 'f32[16,32]{1,0:T(8,128)}', space=vmem, size = 0x2000, scoped, tag = 'scratch operand']
  %s0 = inlined_call_operand.vmem [shape: f32[16,32], index: 0, kind: input, shape index: {}]
  %s1 = inlined_call_operand.vmem [shape: f32[16,16], index: 1, kind: input, shape index: {}]
  %s2 = inlined_call_operand.vmem [shape: f32[2,32], index: 2, kind: input, shape index: {}]
  %s3 = inlined_call_operand.vmem [shape: f32[2,32,192], index: 3, kind: input, shape index: {}]
  %s4 = inlined_call_operand.vmem [shape: f32[2,64,32], index: 4, kind: input, shape index: {}]
  %s5 = inlined_call_operand.vmem [shape: f32[2,8,96], index: 5, kind: input, shape index: {}]
  %s6 = inlined_call_operand.hbm [shape: f32[16,32], index: 6, kind: output, shape index: {}]
  %s7 = sld [smem:[#allocation0]]
  $region34: #{token_level_encoder.1} parent=0
    _
  %s9 = ssub.s32 1, %s7
  %s10 = scalar_select 0, %s9, %s7
  $region1: #{token_level_encoder.1} parent=0
    #allocation3 [shape = 'u8[8192]{0}', space=vmem, size = 0x2000, scoped, tag = 'output window, operand 0, single buffered']
    #allocation4 [shape = 's32[1]{0}', space=sflag, size = 0x4, scoped, tag = 'scoped memory for token_level_encoder.1']
    %11 = vsyncpa [#allocation4], 0
    // Predicated region
    $region2: #{token_level_encoder.1} parent=1 // pred_check
      _
    $region3: #{token_level_encoder.1} parent=1 // pred_check_branch
      %13 = sbr.rel (0) target = $region5
    $region4: #{token_level_encoder.1} parent=1 // pred_region
      _
    $region5: #{token_level_encoder.1} parent=1 // pred_fallthru
      _
    // Predicated region
    $region6: #{token_level_encoder.1} parent=1 // pred_check
      _
    $region7: #{token_level_encoder.1} parent=1 // pred_check_branch
      %15 = sbr.rel (0) target = $region9
    $region8: #{token_level_encoder.1} parent=1 // pred_region
      _
    $region9: #{token_level_encoder.1} parent=1 // pred_fallthru
      _
    // Predicated region
    $region10: #{token_level_encoder.1} parent=1 // pred_check
      _
    $region11: #{token_level_encoder.1} parent=1 // pred_check_branch
      %17 = sbr.rel (0) target = $region13
    $region12: #{token_level_encoder.1} parent=1 // pred_region
      _
    $region13: #{token_level_encoder.1} parent=1 // pred_fallthru
      _
    // Predicated region
    $region14: #{token_level_encoder.1} parent=1 // pred_check
      _
    $region15: #{token_level_encoder.1} parent=1 // pred_check_branch
      %19 = sbr.rel (0) target = $region17
    $region16: #{token_level_encoder.1} parent=1 // pred_region
      _
    $region17: #{token_level_encoder.1} parent=1 // pred_fallthru
      _
    // Predicated region
    $region18: #{token_level_encoder.1} parent=1 // pred_check
      _
    $region19: #{token_level_encoder.1} parent=1 // pred_check_branch
      %21 = sbr.rel (0) target = $region21
    $region20: #{token_level_encoder.1} parent=1 // pred_region
      _
    $region21: #{token_level_encoder.1} parent=1 // pred_fallthru
      _
    // Predicated region
    $region22: #{token_level_encoder.1} parent=1 // pred_check
      _
    $region23: #{token_level_encoder.1} parent=1 // pred_check_branch
      %23 = sbr.rel (0) target = $region25
    $region24: #{token_level_encoder.1} parent=1 // pred_region
      _
    $region25: #{token_level_encoder.1} parent=1 // pred_fallthru
      _
    %v24 = vld [vmem:[%s0] sm:$0xff]
    %v25 = vld [vmem:[%s0 + $0x8] sm:$0xff]
    %v26 = vld [vmem:[%s2] sm:$0x1]
    %v27 = vld [vmem:[%s2 + $0x1] sm:$0x1]
    %vm28 = vcmask 261120
    %v29 = vsel %vm28, %v24, 0.0
    %30 = vadd.xlane.f32.xlu0 %v29
    %v31 = vpop.xlane.xlu0 %30
    %v32 = vsel %vm28, %v25, 0.0
    %33 = vadd.xlane.f32.xlu0 %v32
    %v34 = vpop.xlane.xlu0 %33
    %v35 = vrcp.pop 32.0
    %v36 = vmul.f32 %v31, %v35
    %v37 = vmul.f32 %v34, %v35
    %v38 = vsub.f32 %v24, %v36
    %v39 = vsub.f32 %v25, %v37
    %v40 = vmul.f32 %v38, %v38
    %v41 = vmul.f32 %v39, %v39
    %v42 = vsel %vm28, %v40, 0.0
    %43 = vadd.xlane.f32.xlu0 %v42
    %v44 = vpop.xlane.xlu0 %43
    %v45 = vsel %vm28, %v41, 0.0
    %46 = vadd.xlane.f32.xlu0 %v45
    %v47 = vpop.xlane.xlu0 %46
    %v48 = vmul.f32 %v44, %v35
    %v49 = vmul.f32 %v47, %v35
    %v50 = vadd.f32 %v48, 1e-12
    %v51 = vadd.f32 %v49, 1e-12
    %v52 = vrsqrt.pop %v50
    %v53 = vrsqrt.pop %v51
    %v54 = vmul.f32 %v38, %v52
    %v55 = vmul.f32 %v39, %v53
    %v56 = vlaneseq
    %v57 = vshrl.u32 %v56, 7
    %v58 = vsub.s32 0, %v57
    %v59 = vrot.slane %v26, %v58
    %v60 = vmul.f32 %v54, %v59
    %v61 = vmul.f32 %v55, %v59
    %v62 = vlaneseq
    %v63 = vshrl.u32 %v62, 7
    %v64 = vsub.s32 0, %v63
    %v65 = vrot.slane %v27, %v64
    %v66 = vadd.f32 %v60, %v65
    %v67 = vadd.f32 %v61, %v65
    %v68 = vld [vmem:[%s1] sm:$0xff]
    %v69 = vld [vmem:[%s1 + $0x8] sm:$0xff]
    %v70 = vld [vmem:[%s3] sm:$0xff]
    %v71 = vld [vmem:[%s3 + $0x8] sm:$0xff]
    %v72 = vld [vmem:[%s3 + $0x10] sm:$0xff]
    %v73 = vld [vmem:[%s3 + $0x18] sm:$0xff]
    %v74 = vld [vmem:[%s3 + $0x20] sm:$0xff]
    %v75 = vld [vmem:[%s3 + $0x28] sm:$0xff]
    %v76 = vld [vmem:[%s3 + $0x30] sm:$0xff]
    %v77 = vld [vmem:[%s3 + $0x38] sm:$0xff]
    %v78 = vld [vmem:[%s5] sm:$0xff]
    %v79 = vlaneseq
    %v80 = vshrl.u32 %v79, 7
    %v81 = vsub.s32 0, %v80
    %v82 = vrot.slane %v78, %v81
    %v84 = vsel %vm28, %v66, 0
    %v87 = vsel %vm28, %v67, 0
    %89 = vmatprep.subr.mxu0 0.0
    %90 = vmatpush1.msra.mxu0 %v70
    %91 = vmatprep.subr.mxu0 0.0
    %92 = vmatpush1.msra.mxu0 %v72
    %93 = vmatprep.subr.mxu0 0.0
    %94 = vmatpush1.msra.mxu0 %v74
    %95 = vmatprep.subr.mxu0 0.0
    %96 = vmatpush1.msra.mxu0 %v76
    %97 = vmatprep.subr.mxu0 0.0
    %98 = vmatpush1.msra.mxu0 0.0
    %99 = vmatprep.subr.mxu0 0.0
    %100 = vmatpush1.msra.mxu0 0.0
    %101 = vmatprep.subr.mxu0 0.0
    %102 = vmatpush1.msra.mxu0 0.0
    %103 = vmatprep.subr.mxu0 0.0
    %104 = vmatpush1.msra.mxu0 0.0
    %105 = vmatprep.subr.mxu0 0.0
    %106 = vmatpush1.msra.mxu0 0.0
    %107 = vmatprep.subr.mxu0 0.0
    %108 = vmatpush1.msra.mxu0 0.0
    %109 = vmatprep.subr.mxu0 0.0
    %110 = vmatpush1.msra.mxu0 0.0
    %111 = vmatprep.subr.mxu0 0.0
    %112 = vmatpush1.msra.mxu0 0.0
    %113 = vmatprep.subr.mxu0 0.0
    %114 = vmatpush1.msra.mxu0 0.0
    %115 = vmatprep.subr.mxu0 0.0
    %116 = vmatpush1.msra.mxu0 0.0
    %117 = vmatprep.subr.mxu0 0.0
    %118 = vmatpush1.msra.mxu0 0.0
    %119 = vmatprep.subr.mxu0 0.0
    %120 = vmatpush1.msra.mxu0 0.0
    %121 = vmatprep.subr.mxu0 0.0
    %122 = vmatpush1.msra.mxu0 0.0
    %123 = vmatprep.subr.mxu0 0.0
    %124 = vmatpush1.msra.mxu0 0.0
    %125 = vmatprep.subr.mxu0 0.0
    %126 = vmatpush1.msra.mxu0 0.0
    %127 = vmatprep.subr.mxu0 0.0
    %128 = vmatpush1.msra.mxu0 0.0
    %129 = vmatprep.subr.mxu0 0.0
    %130 = vmatpush1.msra.mxu0 0.0
    %131 = vmatprep.subr.mxu0 0.0
    %132 = vmatpush1.msra.mxu0 0.0
    %133 = vmatprep.subr.mxu0 0.0
    %134 = vmatpush1.msra.mxu0 0.0
    %135 = vmatprep.subr.mxu0 0.0
    %136 = vmatpush1.msra.mxu0 0.0
    %137 = vmatprep.subr.mxu0 0.0
    %138 = vmatpush1.msra.mxu0 0.0
    %139 = vmatprep.subr.mxu0 0.0
    %140 = vmatpush1.msra.mxu0 0.0
    %141 = vmatprep.subr.mxu0 0.0
    %142 = vmatpush1.msra.mxu0 0.0
    %143 = vmatprep.subr.mxu0 0.0
    %144 = vmatpush1.msra.mxu0 0.0
    %145 = vmatprep.subr.mxu0 0.0
    %146 = vmatpush1.msra.mxu0 0.0
    %147 = vmatprep.subr.mxu0 0.0
    %148 = vmatpush1.msra.mxu0 0.0
    %149 = vmatprep.subr.mxu0 0.0
    %150 = vmatpush1.msra.mxu0 0.0
    %151 = vmatprep.subr.mxu0 0.0
    %152 = vmatpush1.msra.mxu0 0.0
    %153 = vmatprep.mubr.f32.mxu0 0.0
    %154 = vmatmul.mubr.f32.gmra.mrb[0].mxu0 %v84
    %v155 = vpop.f32.mrb[0].mxu0
    %v156 = vadd.f32 %v82, %v155
    %v157 = vpop.f32.mrb[0].mxu0
    %158 = vmatprep.mubr.f32.mxu0 0.0
    %159 = vmatmul.mubr.f32.gmra.mrb[0].mxu0 %v87
    %v160 = vpop.f32.mrb[0].mxu0
    %v161 = vadd.f32 %v82, %v160
    %v162 = vpop.f32.mrb[0].mxu0
    %163 = vdwg.mxu0
    %166 = vrot.lane.b32.xlu0 %v156, 96
    %v167 = vpop.permute.xlu0 %166
    %168 = vrot.lane.b32.xlu0 %v161, 96
    %v169 = vpop.permute.xlu0 %168
    %vm170 = vcmask 64512
    %v171 = vsel %vm170, %v156, 0
    %v173 = vsel %vm170, %v161, 0
    %v175 = vsel %vm170, %v167, 0
    %v177 = vsel %vm170, %v169, 0
    %179 = vmatprep.subr.mxu0 0.0
    %180 = vmatpush1.xpose.msra.mxu0 %v175
    %181 = vmatprep.subr.mxu0 0.0
    %182 = vmatpush1.xpose.msra.mxu0 %v177
    %183 = vmatprep.subr.mxu0 0.0
    %184 = vmatpush1.xpose.msra.mxu0 0.0
    %185 = vmatprep.subr.mxu0 0.0
    %186 = vmatpush1.xpose.msra.mxu0 0.0
    %187 = vmatprep.subr.mxu0 0.0
    %188 = vmatpush1.xpose.msra.mxu0 0.0
    %189 = vmatprep.subr.mxu0 0.0
    %190 = vmatpush1.xpose.msra.mxu0 0.0
    %191 = vmatprep.subr.mxu0 0.0
    %192 = vmatpush1.xpose.msra.mxu0 0.0
    %193 = vmatprep.subr.mxu0 0.0
    %194 = vmatpush1.xpose.msra.mxu0 0.0
    %195 = vmatprep.subr.mxu0 0.0
    %196 = vmatpush1.xpose.msra.mxu0 0.0
    %197 = vmatprep.subr.mxu0 0.0
    %198 = vmatpush1.xpose.msra.mxu0 0.0
    %199 = vmatprep.subr.mxu0 0.0
    %200 = vmatpush1.xpose.msra.mxu0 0.0
    %201 = vmatprep.subr.mxu0 0.0
    %202 = vmatpush1.xpose.msra.mxu0 0.0
    %203 = vmatprep.subr.mxu0 0.0
    %204 = vmatpush1.xpose.msra.mxu0 0.0
    %205 = vmatprep.subr.mxu0 0.0
    %206 = vmatpush1.xpose.msra.mxu0 0.0
    %207 = vmatprep.subr.mxu0 0.0
    %208 = vmatpush1.xpose.msra.mxu0 0.0
    %209 = vmatprep.subr.mxu0 0.0
    %210 = vmatpush1.xpose.msra.mxu0 0.0
    %211 = vmatprep.subr.mxu0 0.0
    %212 = vmatpush1.xpose.msra.mxu0 0.0
    %213 = vmatprep.subr.mxu0 0.0
    %214 = vmatpush1.xpose.msra.mxu0 0.0
    %215 = vmatprep.subr.mxu0 0.0
    %216 = vmatpush1.xpose.msra.mxu0 0.0
    %217 = vmatprep.subr.mxu0 0.0
    %218 = vmatpush1.xpose.msra.mxu0 0.0
    %219 = vmatprep.subr.mxu0 0.0
    %220 = vmatpush1.xpose.msra.mxu0 0.0
    %221 = vmatprep.subr.mxu0 0.0
    %222 = vmatpush1.xpose.msra.mxu0 0.0
    %223 = vmatprep.subr.mxu0 0.0
    %224 = vmatpush1.xpose.msra.mxu0 0.0
    %225 = vmatprep.subr.mxu0 0.0
    %226 = vmatpush1.xpose.msra.mxu0 0.0
    %227 = vmatprep.subr.mxu0 0.0
    %228 = vmatpush1.xpose.msra.mxu0 0.0
    %229 = vmatprep.subr.mxu0 0.0
    %230 = vmatpush1.xpose.msra.mxu0 0.0
    %231 = vmatprep.subr.mxu0 0.0
    %232 = vmatpush1.xpose.msra.mxu0 0.0
    %233 = vmatprep.subr.mxu0 0.0
    %234 = vmatpush1.xpose.msra.mxu0 0.0
    %235 = vmatprep.subr.mxu0 0.0
    %236 = vmatpush1.xpose.msra.mxu0 0.0
    %237 = vmatprep.subr.mxu0 0.0
    %238 = vmatpush1.xpose.msra.mxu0 0.0
    %239 = vmatprep.subr.mxu0 0.0
    %240 = vmatpush1.xpose.msra.mxu0 0.0
    %241 = vmatprep.subr.mxu0 0.0
    %242 = vmatpush1.xpose.msra.mxu0 0.0
    %243 = vmatprep.mubr.f32.mxu0 0.0
    %244 = vmatmul.mubr.f32.gmra.mrb[0].mxu0 %v171
    %v245 = vpop.f32.mrb[0].mxu0
    %v246 = vadd.f32 0.0, %v245
    %v247 = vpop.f32.mrb[0].mxu0
    %248 = vmatprep.mubr.f32.mxu0 0.0
    %249 = vmatmul.mubr.f32.gmra.mrb[0].mxu0 %v173
    %v250 = vpop.f32.mrb[0].mxu0
    %v251 = vadd.f32 0.0, %v250
    %v252 = vpop.f32.mrb[0].mxu0
    %253 = vdwg.mxu0
    %v254 = vmul.f32 %v246, 0.35355338
    %v255 = vmul.f32 %v251, 0.35355338
    %v256 = vadd.f32 %v254, %v68
    %v257 = vadd.f32 %v255, %v69
    %vm258 = vcmask 130048
    %v259 = vsel %vm258, %v256, -inf
    %260 = vmax.xlane.f32.xlu0 %v259
    %v261 = vpop.xlane.xlu0 %260
    %v262 = vsel %vm258, %v257, -inf
    %263 = vmax.xlane.f32.xlu0 %v262
    %v264 = vpop.xlane.xlu0 %263
    %v265 = vsub.f32 %v256, %v261
    %v266 = vsub.f32 %v257, %v264
    %v267 = vmul.f32 %v265, 1.442695
    %v268 = vpow.pop %v267
    %v269 = vmul.f32 %v266, 1.442695
    %v270 = vpow.pop %v269
    %v271 = vsel %vm258, %v268, 0.0
    %272 = vadd.xlane.f32.xlu0 %v271
    %v273 = vpop.xlane.xlu0 %272
    %v274 = vsel %vm258, %v270, 0.0
    %275 = vadd.xlane.f32.xlu0 %v274
    %v276 = vpop.xlane.xlu0 %275
    %v277 = vrcp.pop %v273
    %v278 = vrcp.pop %v276
    %v279 = vmul.f32 %v268, %v277
    %v280 = vmul.f32 %v270, %v278
    %281 = vrot.lane.b32.xlu0 %v156, 64
    %v282 = vpop.permute.xlu0 %281
    %283 = vrot.lane.b32.xlu0 %v161, 64
    %v284 = vpop.permute.xlu0 %283
    %v288 = vsel %vm258, %v279, 0
    %v291 = vsel %vm258, %v280, 0
    %293 = vmatprep.subr.mxu0 0.0
    %294 = vmatpush1.msra.mxu0 %v282
    %295 = vmatprep.subr.mxu0 0.0
    %296 = vmatpush1.msra.mxu0 %v284
    %297 = vmatprep.subr.mxu0 0.0
    %298 = vmatpush1.msra.mxu0 0.0
    %299 = vmatprep.subr.mxu0 0.0
    %300 = vmatpush1.msra.mxu0 0.0
    %301 = vmatprep.subr.mxu0 0.0
    %302 = vmatpush1.msra.mxu0 0.0
    %303 = vmatprep.subr.mxu0 0.0
    %304 = vmatpush1.msra.mxu0 0.0
    %305 = vmatprep.subr.mxu0 0.0
    %306 = vmatpush1.msra.mxu0 0.0
    %307 = vmatprep.subr.mxu0 0.0
    %308 = vmatpush1.msra.mxu0 0.0
    %309 = vmatprep.subr.mxu0 0.0
    %310 = vmatpush1.msra.mxu0 0.0
    %311 = vmatprep.subr.mxu0 0.0
    %312 = vmatpush1.msra.mxu0 0.0
    %313 = vmatprep.subr.mxu0 0.0
    %314 = vmatpush1.msra.mxu0 0.0
    %315 = vmatprep.subr.mxu0 0.0
    %316 = vmatpush1.msra.mxu0 0.0
    %317 = vmatprep.subr.mxu0 0.0
    %318 = vmatpush1.msra.mxu0 0.0
    %319 = vmatprep.subr.mxu0 0.0
    %320 = vmatpush1.msra.mxu0 0.0
    %321 = vmatprep.subr.mxu0 0.0
    %322 = vmatpush1.msra.mxu0 0.0
    %323 = vmatprep.subr.mxu0 0.0
    %324 = vmatpush1.msra.mxu0 0.0
    %325 = vmatprep.subr.mxu0 0.0
    %326 = vmatpush1.msra.mxu0 0.0
    %327 = vmatprep.subr.mxu0 0.0
    %328 = vmatpush1.msra.mxu0 0.0
    %329 = vmatprep.subr.mxu0 0.0
    %330 = vmatpush1.msra.mxu0 0.0
    %331 = vmatprep.subr.mxu0 0.0
    %332 = vmatpush1.msra.mxu0 0.0
    %333 = vmatprep.subr.mxu0 0.0
    %334 = vmatpush1.msra.mxu0 0.0
    %335 = vmatprep.subr.mxu0 0.0
    %336 = vmatpush1.msra.mxu0 0.0
    %337 = vmatprep.subr.mxu0 0.0
    %338 = vmatpush1.msra.mxu0 0.0
    %339 = vmatprep.subr.mxu0 0.0
    %340 = vmatpush1.msra.mxu0 0.0
    %341 = vmatprep.subr.mxu0 0.0
    %342 = vmatpush1.msra.mxu0 0.0
    %343 = vmatprep.subr.mxu0 0.0
    %344 = vmatpush1.msra.mxu0 0.0
    %345 = vmatprep.subr.mxu0 0.0
    %346 = vmatpush1.msra.mxu0 0.0
    %347 = vmatprep.subr.mxu0 0.0
    %348 = vmatpush1.msra.mxu0 0.0
    %349 = vmatprep.subr.mxu0 0.0
    %350 = vmatpush1.msra.mxu0 0.0
    %351 = vmatprep.subr.mxu0 0.0
    %352 = vmatpush1.msra.mxu0 0.0
    %353 = vmatprep.subr.mxu0 0.0
    %354 = vmatpush1.msra.mxu0 0.0
    %355 = vmatprep.subr.mxu0 0.0
    %356 = vmatpush1.msra.mxu0 0.0
    %357 = vmatprep.mubr.f32.mxu0 0.0
    %358 = vmatmul.mubr.f32.gmra.mrb[0].mxu0 %v288
    %v359 = vpop.f32.mrb[0].mxu0
    %v360 = vadd.f32 0.0, %v359
    %v361 = vpop.f32.mrb[0].mxu0
    %362 = vmatprep.mubr.f32.mxu0 0.0
    %363 = vmatmul.mubr.f32.gmra.mrb[0].mxu0 %v291
    %v364 = vpop.f32.mrb[0].mxu0
    %v365 = vadd.f32 0.0, %v364
    %v366 = vpop.f32.mrb[0].mxu0
    %367 = vdwg.mxu0
    %368 = vst.msk [vmem:[#allocation2] sm:$0xff] %vm170, %v360
    %369 = vst.msk [vmem:[#allocation2 + $0x8] sm:$0xff] %vm170, %v365
    %370 = vrot.lane.b32.xlu0 %v156, 120
    %v371 = vpop.permute.xlu0 %370
    %372 = vrot.lane.b32.xlu0 %v161, 120
    %v373 = vpop.permute.xlu0 %372
    %374 = vrot.lane.b32.xlu0 %v156, 88
    %v375 = vpop.permute.xlu0 %374
    %376 = vrot.lane.b32.xlu0 %v161, 88
    %v377 = vpop.permute.xlu0 %376
    %v378 = vsel %vm170, %v371, 0
    %v380 = vsel %vm170, %v373, 0
    %v382 = vsel %vm170, %v375, 0
    %v384 = vsel %vm170, %v377, 0
    %386 = vmatprep.subr.mxu0 0.0
    %387 = vmatpush1.xpose.msra.mxu0 %v382
    %388 = vmatprep.subr.mxu0 0.0
    %389 = vmatpush1.xpose.msra.mxu0 %v384
    %390 = vmatprep.subr.mxu0 0.0
    %391 = vmatpush1.xpose.msra.mxu0 0.0
    %392 = vmatprep.subr.mxu0 0.0
    %393 = vmatpush1.xpose.msra.mxu0 0.0
    %394 = vmatprep.subr.mxu0 0.0
    %395 = vmatpush1.xpose.msra.mxu0 0.0
    %396 = vmatprep.subr.mxu0 0.0
    %397 = vmatpush1.xpose.msra.mxu0 0.0
    %398 = vmatprep.subr.mxu0 0.0
    %399 = vmatpush1.xpose.msra.mxu0 0.0
    %400 = vmatprep.subr.mxu0 0.0
    %401 = vmatpush1.xpose.msra.mxu0 0.0
    %402 = vmatprep.subr.mxu0 0.0
    %403 = vmatpush1.xpose.msra.mxu0 0.0
    %404 = vmatprep.subr.mxu0 0.0
    %405 = vmatpush1.xpose.msra.mxu0 0.0
    %406 = vmatprep.subr.mxu0 0.0
    %407 = vmatpush1.xpose.msra.mxu0 0.0
    %408 = vmatprep.subr.mxu0 0.0
    %409 = vmatpush1.xpose.msra.mxu0 0.0
    %410 = vmatprep.subr.mxu0 0.0
    %411 = vmatpush1.xpose.msra.mxu0 0.0
    %412 = vmatprep.subr.mxu0 0.0
    %413 = vmatpush1.xpose.msra.mxu0 0.0
    %414 = vmatprep.subr.mxu0 0.0
    %415 = vmatpush1.xpose.msra.mxu0 0.0
    %416 = vmatprep.subr.mxu0 0.0
    %417 = vmatpush1.xpose.msra.mxu0 0.0
    %418 = vmatprep.subr.mxu0 0.0
    %419 = vmatpush1.xpose.msra.mxu0 0.0
    %420 = vmatprep.subr.mxu0 0.0
    %421 = vmatpush1.xpose.msra.mxu0 0.0
    %422 = vmatprep.subr.mxu0 0.0
    %423 = vmatpush1.xpose.msra.mxu0 0.0
    %424 = vmatprep.subr.mxu0 0.0
    %425 = vmatpush1.xpose.msra.mxu0 0.0
    %426 = vmatprep.subr.mxu0 0.0
    %427 = vmatpush1.xpose.msra.mxu0 0.0
    %428 = vmatprep.subr.mxu0 0.0
    %429 = vmatpush1.xpose.msra.mxu0 0.0
    %430 = vmatprep.subr.mxu0 0.0
    %431 = vmatpush1.xpose.msra.mxu0 0.0
    %432 = vmatprep.subr.mxu0 0.0
    %433 = vmatpush1.xpose.msra.mxu0 0.0
    %434 = vmatprep.subr.mxu0 0.0
    %435 = vmatpush1.xpose.msra.mxu0 0.0
    %436 = vmatprep.subr.mxu0 0.0
    %437 = vmatpush1.xpose.msra.mxu0 0.0
    %438 = vmatprep.subr.mxu0 0.0
    %439 = vmatpush1.xpose.msra.mxu0 0.0
    %440 = vmatprep.subr.mxu0 0.0
    %441 = vmatpush1.xpose.msra.mxu0 0.0
    %442 = vmatprep.subr.mxu0 0.0
    %443 = vmatpush1.xpose.msra.mxu0 0.0
    %444 = vmatprep.subr.mxu0 0.0
    %445 = vmatpush1.xpose.msra.mxu0 0.0
    %446 = vmatprep.subr.mxu0 0.0
    %447 = vmatpush1.xpose.msra.mxu0 0.0
    %448 = vmatprep.subr.mxu0 0.0
    %449 = vmatpush1.xpose.msra.mxu0 0.0
    %450 = vmatprep.mubr.f32.mxu0 0.0
    %451 = vmatmul.mubr.f32.gmra.mrb[0].mxu0 %v378
    %v452 = vpop.f32.mrb[0].mxu0
    %v453 = vadd.f32 0.0, %v452
    %v454 = vpop.f32.mrb[0].mxu0
    %455 = vmatprep.mubr.f32.mxu0 0.0
    %456 = vmatmul.mubr.f32.gmra.mrb[0].mxu0 %v380
    %v457 = vpop.f32.mrb[0].mxu0
    %v458 = vadd.f32 0.0, %v457
    %v459 = vpop.f32.mrb[0].mxu0
    %460 = vdwg.mxu0
    %v461 = vmul.f32 %v453, 0.35355338
    %v462 = vmul.f32 %v458, 0.35355338
    %v463 = vadd.f32 %v461, %v68
    %v464 = vadd.f32 %v462, %v69
    %v465 = vsel %vm258, %v463, -inf
    %466 = vmax.xlane.f32.xlu0 %v465
    %v467 = vpop.xlane.xlu0 %466
    %v468 = vsel %vm258, %v464, -inf
    %469 = vmax.xlane.f32.xlu0 %v468
    %v470 = vpop.xlane.xlu0 %469
    %v471 = vsub.f32 %v463, %v467
    %v472 = vsub.f32 %v464, %v470
    %v473 = vmul.f32 %v471, 1.442695
    %v474 = vpow.pop %v473
    %v475 = vmul.f32 %v472, 1.442695
    %v476 = vpow.pop %v475
    %v477 = vsel %vm258, %v474, 0.0
    %478 = vadd.xlane.f32.xlu0 %v477
    %v479 = vpop.xlane.xlu0 %478
    %v480 = vsel %vm258, %v476, 0.0
    %481 = vadd.xlane.f32.xlu0 %v480
    %v482 = vpop.xlane.xlu0 %481
    %v483 = vrcp.pop %v479
    %v484 = vrcp.pop %v482
    %v485 = vmul.f32 %v474, %v483
    %v486 = vmul.f32 %v476, %v484
    %487 = vrot.lane.b32.xlu0 %v156, 56
    %v488 = vpop.permute.xlu0 %487
    %489 = vrot.lane.b32.xlu0 %v161, 56
    %v490 = vpop.permute.xlu0 %489
    %v494 = vsel %vm258, %v485, 0
    %v497 = vsel %vm258, %v486, 0
    %499 = vmatprep.subr.mxu0 0.0
    %500 = vmatpush1.msra.mxu0 %v488
    %501 = vmatprep.subr.mxu0 0.0
    %502 = vmatpush1.msra.mxu0 %v490
    %503 = vmatprep.subr.mxu0 0.0
    %504 = vmatpush1.msra.mxu0 0.0
    %505 = vmatprep.subr.mxu0 0.0
    %506 = vmatpush1.msra.mxu0 0.0
    %507 = vmatprep.subr.mxu0 0.0
    %508 = vmatpush1.msra.mxu0 0.0
    %509 = vmatprep.subr.mxu0 0.0
    %510 = vmatpush1.msra.mxu0 0.0
    %511 = vmatprep.subr.mxu0 0.0
    %512 = vmatpush1.msra.mxu0 0.0
    %513 = vmatprep.subr.mxu0 0.0
    %514 = vmatpush1.msra.mxu0 0.0
    %515 = vmatprep.subr.mxu0 0.0
    %516 = vmatpush1.msra.mxu0 0.0
    %517 = vmatprep.subr.mxu0 0.0
    %518 = vmatpush1.msra.mxu0 0.0
    %519 = vmatprep.subr.mxu0 0.0
    %520 = vmatpush1.msra.mxu0 0.0
    %521 = vmatprep.subr.mxu0 0.0
    %522 = vmatpush1.msra.mxu0 0.0
    %523 = vmatprep.subr.mxu0 0.0
    %524 = vmatpush1.msra.mxu0 0.0
    %525 = vmatprep.subr.mxu0 0.0
    %526 = vmatpush1.msra.mxu0 0.0
    %527 = vmatprep.subr.mxu0 0.0
    %528 = vmatpush1.msra.mxu0 0.0
    %529 = vmatprep.subr.mxu0 0.0
    %530 = vmatpush1.msra.mxu0 0.0
    %531 = vmatprep.subr.mxu0 0.0
    %532 = vmatpush1.msra.mxu0 0.0
    %533 = vmatprep.subr.mxu0 0.0
    %534 = vmatpush1.msra.mxu0 0.0
    %535 = vmatprep.subr.mxu0 0.0
    %536 = vmatpush1.msra.mxu0 0.0
    %537 = vmatprep.subr.mxu0 0.0
    %538 = vmatpush1.msra.mxu0 0.0
    %539 = vmatprep.subr.mxu0 0.0
    %540 = vmatpush1.msra.mxu0 0.0
    %541 = vmatprep.subr.mxu0 0.0
    %542 = vmatpush1.msra.mxu0 0.0
    %543 = vmatprep.subr.mxu0 0.0
    %544 = vmatpush1.msra.mxu0 0.0
    %545 = vmatprep.subr.mxu0 0.0
    %546 = vmatpush1.msra.mxu0 0.0
    %547 = vmatprep.subr.mxu0 0.0
    %548 = vmatpush1.msra.mxu0 0.0
    %549 = vmatprep.subr.mxu0 0.0
    %550 = vmatpush1.msra.mxu0 0.0
    %551 = vmatprep.subr.mxu0 0.0
    %552 = vmatpush1.msra.mxu0 0.0
    %553 = vmatprep.subr.mxu0 0.0
    %554 = vmatpush1.msra.mxu0 0.0
    %555 = vmatprep.subr.mxu0 0.0
    %556 = vmatpush1.msra.mxu0 0.0
    %557 = vmatprep.subr.mxu0 0.0
    %558 = vmatpush1.msra.mxu0 0.0
    %559 = vmatprep.subr.mxu0 0.0
    %560 = vmatpush1.msra.mxu0 0.0
    %561 = vmatprep.subr.mxu0 0.0
    %562 = vmatpush1.msra.mxu0 0.0
    %563 = vmatprep.mubr.f32.mxu0 0.0
    %564 = vmatmul.mubr.f32.gmra.mrb[0].mxu0 %v494
    %v565 = vpop.f32.mrb[0].mxu0
    %v566 = vadd.f32 0.0, %v565
    %v567 = vpop.f32.mrb[0].mxu0
    %568 = vmatprep.mubr.f32.mxu0 0.0
    %569 = vmatmul.mubr.f32.gmra.mrb[0].mxu0 %v497
    %v570 = vpop.f32.mrb[0].mxu0
    %v571 = vadd.f32 0.0, %v570
    %v572 = vpop.f32.mrb[0].mxu0
    %573 = vdwg.mxu0
    %576 = vrot.lane.b32.xlu0 %v566, 8
    %v577 = vpop.permute.xlu0 %576
    %578 = vrot.lane.b32.xlu0 %v571, 8
    %v579 = vpop.permute.xlu0 %578
    %vm582 = vcmask 130112
    %583 = vst.msk [vmem:[#allocation2] sm:$0xff] %vm582, %v577
    %584 = vst.msk [vmem:[#allocation2 + $0x8] sm:$0xff] %vm582, %v579
    %585 = vrot.lane.b32.xlu0 %v156, 112
    %v586 = vpop.permute.xlu0 %585
    %587 = vrot.lane.b32.xlu0 %v161, 112
    %v588 = vpop.permute.xlu0 %587
    %589 = vrot.lane.b32.xlu0 %v156, 80
    %v590 = vpop.permute.xlu0 %589
    %591 = vrot.lane.b32.xlu0 %v161, 80
    %v592 = vpop.permute.xlu0 %591
    %v593 = vsel %vm170, %v586, 0
    %v595 = vsel %vm170, %v588, 0
    %v597 = vsel %vm170, %v590, 0
    %v599 = vsel %vm170, %v592, 0
    %601 = vmatprep.subr.mxu0 0.0
    %602 = vmatpush1.xpose.msra.mxu0 %v597
    %603 = vmatprep.subr.mxu0 0.0
    %604 = vmatpush1.xpose.msra.mxu0 %v599
    %605 = vmatprep.subr.mxu0 0.0
    %606 = vmatpush1.xpose.msra.mxu0 0.0
    %607 = vmatprep.subr.mxu0 0.0
    %608 = vmatpush1.xpose.msra.mxu0 0.0
    %609 = vmatprep.subr.mxu0 0.0
    %610 = vmatpush1.xpose.msra.mxu0 0.0
    %611 = vmatprep.subr.mxu0 0.0
    %612 = vmatpush1.xpose.msra.mxu0 0.0
    %613 = vmatprep.subr.mxu0 0.0
    %614 = vmatpush1.xpose.msra.mxu0 0.0
    %615 = vmatprep.subr.mxu0 0.0
    %616 = vmatpush1.xpose.msra.mxu0 0.0
    %617 = vmatprep.subr.mxu0 0.0
    %618 = vmatpush1.xpose.msra.mxu0 0.0
    %619 = vmatprep.subr.mxu0 0.0
    %620 = vmatpush1.xpose.msra.mxu0 0.0
    %621 = vmatprep.subr.mxu0 0.0
    %622 = vmatpush1.xpose.msra.mxu0 0.0
    %623 = vmatprep.subr.mxu0 0.0
    %624 = vmatpush1.xpose.msra.mxu0 0.0
    %625 = vmatprep.subr.mxu0 0.0
    %626 = vmatpush1.xpose.msra.mxu0 0.0
    %627 = vmatprep.subr.mxu0 0.0
    %628 = vmatpush1.xpose.msra.mxu0 0.0
    %629 = vmatprep.subr.mxu0 0.0
    %630 = vmatpush1.xpose.msra.mxu0 0.0
    %631 = vmatprep.subr.mxu0 0.0
    %632 = vmatpush1.xpose.msra.mxu0 0.0
    %633 = vmatprep.subr.mxu0 0.0
    %634 = vmatpush1.xpose.msra.mxu0 0.0
    %635 = vmatprep.subr.mxu0 0.0
    %636 = vmatpush1.xpose.msra.mxu0 0.0
    %637 = vmatprep.subr.mxu0 0.0
    %638 = vmatpush1.xpose.msra.mxu0 0.0
    %639 = vmatprep.subr.mxu0 0.0
    %640 = vmatpush1.xpose.msra.mxu0 0.0
    %641 = vmatprep.subr.mxu0 0.0
    %642 = vmatpush1.xpose.msra.mxu0 0.0
    %643 = vmatprep.subr.mxu0 0.0
    %644 = vmatpush1.xpose.msra.mxu0 0.0
    %645 = vmatprep.subr.mxu0 0.0
    %646 = vmatpush1.xpose.msra.mxu0 0.0
    %647 = vmatprep.subr.mxu0 0.0
    %648 = vmatpush1.xpose.msra.mxu0 0.0
    %649 = vmatprep.subr.mxu0 0.0
    %650 = vmatpush1.xpose.msra.mxu0 0.0
    %651 = vmatprep.subr.mxu0 0.0
    %652 = vmatpush1.xpose.msra.mxu0 0.0
    %653 = vmatprep.subr.mxu0 0.0
    %654 = vmatpush1.xpose.msra.mxu0 0.0
    %655 = vmatprep.subr.mxu0 0.0
    %656 = vmatpush1.xpose.msra.mxu0 0.0
    %657 = vmatprep.subr.mxu0 0.0
    %658 = vmatpush1.xpose.msra.mxu0 0.0
    %659 = vmatprep.subr.mxu0 0.0
    %660 = vmatpush1.xpose.msra.mxu0 0.0
    %661 = vmatprep.subr.mxu0 0.0
    %662 = vmatpush1.xpose.msra.mxu0 0.0
    %663 = vmatprep.subr.mxu0 0.0
    %664 = vmatpush1.xpose.msra.mxu0 0.0
    %665 = vmatprep.mubr.f32.mxu0 0.0
    %666 = vmatmul.mubr.f32.gmra.mrb[0].mxu0 %v593
    %v667 = vpop.f32.mrb[0].mxu0
    %v668 = vadd.f32 0.0, %v667
    %v669 = vpop.f32.mrb[0].mxu0
    %670 = vmatprep.mubr.f32.mxu0 0.0
    %671 = vmatmul.mubr.f32.gmra.mrb[0].mxu0 %v595
    %v672 = vpop.f32.mrb[0].mxu0
    %v673 = vadd.f32 0.0, %v672
    %v674 = vpop.f32.mrb[0].mxu0
    %675 = vdwg.mxu0
    %v676 = vmul.f32 %v668, 0.35355338
    %v677 = vmul.f32 %v673, 0.35355338
    %v678 = vadd.f32 %v676, %v68
    %v679 = vadd.f32 %v677, %v69
    %v680 = vsel %vm258, %v678, -inf
    %681 = vmax.xlane.f32.xlu0 %v680
    %v682 = vpop.xlane.xlu0 %681
    %v683 = vsel %vm258, %v679, -inf
    %684 = vmax.xlane.f32.xlu0 %v683
    %v685 = vpop.xlane.xlu0 %684
    %v686 = vsub.f32 %v678, %v682
    %v687 = vsub.f32 %v679, %v685
    %v688 = vmul.f32 %v686, 1.442695
    %v689 = vpow.pop %v688
    %v690 = vmul.f32 %v687, 1.442695
    %v691 = vpow.pop %v690
    %v692 = vsel %vm258, %v689, 0.0
    %693 = vadd.xlane.f32.xlu0 %v692
    %v694 = vpop.xlane.xlu0 %693
    %v695 = vsel %vm258, %v691, 0.0
    %696 = vadd.xlane.f32.xlu0 %v695
    %v697 = vpop.xlane.xlu0 %696
    %v698 = vrcp.pop %v694
    %v699 = vrcp.pop %v697
    %v700 = vmul.f32 %v689, %v698
    %v701 = vmul.f32 %v691, %v699
    %702 = vrot.lane.b32.xlu0 %v156, 48
    %v703 = vpop.permute.xlu0 %702
    %704 = vrot.lane.b32.xlu0 %v161, 48
    %v705 = vpop.permute.xlu0 %704
    %v709 = vsel %vm258, %v700, 0
    %v712 = vsel %vm258, %v701, 0
    %714 = vmatprep.subr.mxu0 0.0
    %715 = vmatpush1.msra.mxu0 %v703
    %716 = vmatprep.subr.mxu0 0.0
    %717 = vmatpush1.msra.mxu0 %v705
    %718 = vmatprep.subr.mxu0 0.0
    %719 = vmatpush1.msra.mxu0 0.0
    %720 = vmatprep.subr.mxu0 0.0
    %721 = vmatpush1.msra.mxu0 0.0
    %722 = vmatprep.subr.mxu0 0.0
    %723 = vmatpush1.msra.mxu0 0.0
    %724 = vmatprep.subr.mxu0 0.0
    %725 = vmatpush1.msra.mxu0 0.0
    %726 = vmatprep.subr.mxu0 0.0
    %727 = vmatpush1.msra.mxu0 0.0
    %728 = vmatprep.subr.mxu0 0.0
    %729 = vmatpush1.msra.mxu0 0.0
    %730 = vmatprep.subr.mxu0 0.0
    %731 = vmatpush1.msra.mxu0 0.0
    %732 = vmatprep.subr.mxu0 0.0
    %733 = vmatpush1.msra.mxu0 0.0
    %734 = vmatprep.subr.mxu0 0.0
    %735 = vmatpush1.msra.mxu0 0.0
    %736 = vmatprep.subr.mxu0 0.0
    %737 = vmatpush1.msra.mxu0 0.0
    %738 = vmatprep.subr.mxu0 0.0
    %739 = vmatpush1.msra.mxu0 0.0
    %740 = vmatprep.subr.mxu0 0.0
    %741 = vmatpush1.msra.mxu0 0.0
    %742 = vmatprep.subr.mxu0 0.0
    %743 = vmatpush1.msra.mxu0 0.0
    %744 = vmatprep.subr.mxu0 0.0
    %745 = vmatpush1.msra.mxu0 0.0
    %746 = vmatprep.subr.mxu0 0.0
    %747 = vmatpush1.msra.mxu0 0.0
    %748 = vmatprep.subr.mxu0 0.0
    %749 = vmatpush1.msra.mxu0 0.0
    %750 = vmatprep.subr.mxu0 0.0
    %751 = vmatpush1.msra.mxu0 0.0
    %752 = vmatprep.subr.mxu0 0.0
    %753 = vmatpush1.msra.mxu0 0.0
    %754 = vmatprep.subr.mxu0 0.0
    %755 = vmatpush1.msra.mxu0 0.0
    %756 = vmatprep.subr.mxu0 0.0
    %757 = vmatpush1.msra.mxu0 0.0
    %758 = vmatprep.subr.mxu0 0.0
    %759 = vmatpush1.msra.mxu0 0.0
    %760 = vmatprep.subr.mxu0 0.0
    %761 = vmatpush1.msra.mxu0 0.0
    %762 = vmatprep.subr.mxu0 0.0
    %763 = vmatpush1.msra.mxu0 0.0
    %764 = vmatprep.subr.mxu0 0.0
    %765 = vmatpush1.msra.mxu0 0.0
    %766 = vmatprep.subr.mxu0 0.0
    %767 = vmatpush1.msra.mxu0 0.0
    %768 = vmatprep.subr.mxu0 0.0
    %769 = vmatpush1.msra.mxu0 0.0
    %770 = vmatprep.subr.mxu0 0.0
    %771 = vmatpush1.msra.mxu0 0.0
    %772 = vmatprep.subr.mxu0 0.0
    %773 = vmatpush1.msra.mxu0 0.0
    %774 = vmatprep.subr.mxu0 0.0
    %775 = vmatpush1.msra.mxu0 0.0
    %776 = vmatprep.subr.mxu0 0.0
    %777 = vmatpush1.msra.mxu0 0.0
    %778 = vmatprep.mubr.f32.mxu0 0.0
    %779 = vmatmul.mubr.f32.gmra.mrb[0].mxu0 %v709
    %v780 = vpop.f32.mrb[0].mxu0
    %v781 = vadd.f32 0.0, %v780
    %v782 = vpop.f32.mrb[0].mxu0
    %783 = vmatprep.mubr.f32.mxu0 0.0
    %784 = vmatmul.mubr.f32.gmra.mrb[0].mxu0 %v712
    %v785 = vpop.f32.mrb[0].mxu0
    %v786 = vadd.f32 0.0, %v785
    %v787 = vpop.f32.mrb[0].mxu0
    %788 = vdwg.mxu0
    %791 = vrot.lane.b32.xlu0 %v781, 16
    %v792 = vpop.permute.xlu0 %791
    %793 = vrot.lane.b32.xlu0 %v786, 16
    %v794 = vpop.permute.xlu0 %793
    %vm797 = vcmask 195712
    %798 = vst.msk [vmem:[#allocation2] sm:$0xff] %vm797, %v792
    %799 = vst.msk [vmem:[#allocation2 + $0x8] sm:$0xff] %vm797, %v794
    %800 = vrot.lane.b32.xlu0 %v156, 104
    %v801 = vpop.permute.xlu0 %800
    %802 = vrot.lane.b32.xlu0 %v161, 104
    %v803 = vpop.permute.xlu0 %802
    %804 = vrot.lane.b32.xlu0 %v156, 72
    %v805 = vpop.permute.xlu0 %804
    %806 = vrot.lane.b32.xlu0 %v161, 72
    %v807 = vpop.permute.xlu0 %806
    %v808 = vsel %vm170, %v801, 0
    %v810 = vsel %vm170, %v803, 0
    %v812 = vsel %vm170, %v805, 0
    %v814 = vsel %vm170, %v807, 0
    %816 = vmatprep.subr.mxu0 0.0
    %817 = vmatpush1.xpose.msra.mxu0 %v812
    %818 = vmatprep.subr.mxu0 0.0
    %819 = vmatpush1.xpose.msra.mxu0 %v814
    %820 = vmatprep.subr.mxu0 0.0
    %821 = vmatpush1.xpose.msra.mxu0 0.0
    %822 = vmatprep.subr.mxu0 0.0
    %823 = vmatpush1.xpose.msra.mxu0 0.0
    %824 = vmatprep.subr.mxu0 0.0
    %825 = vmatpush1.xpose.msra.mxu0 0.0
    %826 = vmatprep.subr.mxu0 0.0
    %827 = vmatpush1.xpose.msra.mxu0 0.0
    %828 = vmatprep.subr.mxu0 0.0
    %829 = vmatpush1.xpose.msra.mxu0 0.0
    %830 = vmatprep.subr.mxu0 0.0
    %831 = vmatpush1.xpose.msra.mxu0 0.0
    %832 = vmatprep.subr.mxu0 0.0
    %833 = vmatpush1.xpose.msra.mxu0 0.0
    %834 = vmatprep.subr.mxu0 0.0
    %835 = vmatpush1.xpose.msra.mxu0 0.0
    %836 = vmatprep.subr.mxu0 0.0
    %837 = vmatpush1.xpose.msra.mxu0 0.0
    %838 = vmatprep.subr.mxu0 0.0
    %839 = vmatpush1.xpose.msra.mxu0 0.0
    %840 = vmatprep.subr.mxu0 0.0
    %841 = vmatpush1.xpose.msra.mxu0 0.0
    %842 = vmatprep.subr.mxu0 0.0
    %843 = vmatpush1.xpose.msra.mxu0 0.0
    %844 = vmatprep.subr.mxu0 0.0
    %845 = vmatpush1.xpose.msra.mxu0 0.0
    %846 = vmatprep.subr.mxu0 0.0
    %847 = vmatpush1.xpose.msra.mxu0 0.0
    %848 = vmatprep.subr.mxu0 0.0
    %849 = vmatpush1.xpose.msra.mxu0 0.0
    %850 = vmatprep.subr.mxu0 0.0
    %851 = vmatpush1.xpose.msra.mxu0 0.0
    %852 = vmatprep.subr.mxu0 0.0
    %853 = vmatpush1.xpose.msra.mxu0 0.0
    %854 = vmatprep.subr.mxu0 0.0
    %855 = vmatpush1.xpose.msra.mxu0 0.0
    %856 = vmatprep.subr.mxu0 0.0
    %857 = vmatpush1.xpose.msra.mxu0 0.0
    %858 = vmatprep.subr.mxu0 0.0
    %859 = vmatpush1.xpose.msra.mxu0 0.0
    %860 = vmatprep.subr.mxu0 0.0
    %861 = vmatpush1.xpose.msra.mxu0 0.0
    %862 = vmatprep.subr.mxu0 0.0
    %863 = vmatpush1.xpose.msra.mxu0 0.0
    %864 = vmatprep.subr.mxu0 0.0
    %865 = vmatpush1.xpose.msra.mxu0 0.0
    %866 = vmatprep.subr.mxu0 0.0
    %867 = vmatpush1.xpose.msra.mxu0 0.0
    %868 = vmatprep.subr.mxu0 0.0
    %869 = vmatpush1.xpose.msra.mxu0 0.0
    %870 = vmatprep.subr.mxu0 0.0
    %871 = vmatpush1.xpose.msra.mxu0 0.0
    %872 = vmatprep.subr.mxu0 0.0
    %873 = vmatpush1.xpose.msra.mxu0 0.0
    %874 = vmatprep.subr.mxu0 0.0
    %875 = vmatpush1.xpose.msra.mxu0 0.0
    %876 = vmatprep.subr.mxu0 0.0
    %877 = vmatpush1.xpose.msra.mxu0 0.0
    %878 = vmatprep.subr.mxu0 0.0
    %879 = vmatpush1.xpose.msra.mxu0 0.0
    %880 = vmatprep.mubr.f32.mxu0 0.0
    %881 = vmatmul.mubr.f32.gmra.mrb[0].mxu0 %v808
    %v882 = vpop.f32.mrb[0].mxu0
    %v883 = vadd.f32 0.0, %v882
    %v884 = vpop.f32.mrb[0].mxu0
    %885 = vmatprep.mubr.f32.mxu0 0.0
    %886 = vmatmul.mubr.f32.gmra.mrb[0].mxu0 %v810
    %v887 = vpop.f32.mrb[0].mxu0
    %v888 = vadd.f32 0.0, %v887
    %v889 = vpop.f32.mrb[0].mxu0
    %890 = vdwg.mxu0
    %v891 = vmul.f32 %v883, 0.35355338
    %v892 = vmul.f32 %v888, 0.35355338
    %v893 = vadd.f32 %v891, %v68
    %v894 = vadd.f32 %v892, %v69
    %v895 = vsel %vm258, %v893, -inf
    %896 = vmax.xlane.f32.xlu0 %v895
    %v897 = vpop.xlane.xlu0 %896
    %v898 = vsel %vm258, %v894, -inf
    %899 = vmax.xlane.f32.xlu0 %v898
    %v900 = vpop.xlane.xlu0 %899
    %v901 = vsub.f32 %v893, %v897
    %v902 = vsub.f32 %v894, %v900
    %v903 = vmul.f32 %v901, 1.442695
    %v904 = vpow.pop %v903
    %v905 = vmul.f32 %v902, 1.442695
    %v906 = vpow.pop %v905
    %v907 = vsel %vm258, %v904, 0.0
    %908 = vadd.xlane.f32.xlu0 %v907
    %v909 = vpop.xlane.xlu0 %908
    %v910 = vsel %vm258, %v906, 0.0
    %911 = vadd.xlane.f32.xlu0 %v910
    %v912 = vpop.xlane.xlu0 %911
    %v913 = vrcp.pop %v909
    %v914 = vrcp.pop %v912
    %v915 = vmul.f32 %v904, %v913
    %v916 = vmul.f32 %v906, %v914
    %917 = vrot.lane.b32.xlu0 %v156, 40
    %v918 = vpop.permute.xlu0 %917
    %919 = vrot.lane.b32.xlu0 %v161, 40
    %v920 = vpop.permute.xlu0 %919
    %v924 = vsel %vm258, %v915, 0
    %v927 = vsel %vm258, %v916, 0
    %929 = vmatprep.subr.mxu0 0.0
    %930 = vmatpush1.msra.mxu0 %v918
    %931 = vmatprep.subr.mxu0 0.0
    %932 = vmatpush1.msra.mxu0 %v920
    %933 = vmatprep.subr.mxu0 0.0
    %934 = vmatpush1.msra.mxu0 0.0
    %935 = vmatprep.subr.mxu0 0.0
    %936 = vmatpush1.msra.mxu0 0.0
    %937 = vmatprep.subr.mxu0 0.0
    %938 = vmatpush1.msra.mxu0 0.0
    %939 = vmatprep.subr.mxu0 0.0
    %940 = vmatpush1.msra.mxu0 0.0
    %941 = vmatprep.subr.mxu0 0.0
    %942 = vmatpush1.msra.mxu0 0.0
    %943 = vmatprep.subr.mxu0 0.0
    %944 = vmatpush1.msra.mxu0 0.0
    %945 = vmatprep.subr.mxu0 0.0
    %946 = vmatpush1.msra.mxu0 0.0
    %947 = vmatprep.subr.mxu0 0.0
    %948 = vmatpush1.msra.mxu0 0.0
    %949 = vmatprep.subr.mxu0 0.0
    %950 = vmatpush1.msra.mxu0 0.0
    %951 = vmatprep.subr.mxu0 0.0
    %952 = vmatpush1.msra.mxu0 0.0
    %953 = vmatprep.subr.mxu0 0.0
    %954 = vmatpush1.msra.mxu0 0.0
    %955 = vmatprep.subr.mxu0 0.0
    %956 = vmatpush1.msra.mxu0 0.0
    %957 = vmatprep.subr.mxu0 0.0
    %958 = vmatpush1.msra.mxu0 0.0
    %959 = vmatprep.subr.mxu0 0.0
    %960 = vmatpush1.msra.mxu0 0.0
    %961 = vmatprep.subr.mxu0 0.0
    %962 = vmatpush1.msra.mxu0 0.0
    %963 = vmatprep.subr.mxu0 0.0
    %964 = vmatpush1.msra.mxu0 0.0
    %965 = vmatprep.subr.mxu0 0.0
    %966 = vmatpush1.msra.mxu0 0.0
    %967 = vmatprep.subr.mxu0 0.0
    %968 = vmatpush1.msra.mxu0 0.0
    %969 = vmatprep.subr.mxu0 0.0
    %970 = vmatpush1.msra.mxu0 0.0
    %971 = vmatprep.subr.mxu0 0.0
    %972 = vmatpush1.msra.mxu0 0.0
    %973 = vmatprep.subr.mxu0 0.0
    %974 = vmatpush1.msra.mxu0 0.0
    %975 = vmatprep.subr.mxu0 0.0
    %976 = vmatpush1.msra.mxu0 0.0
    %977 = vmatprep.subr.mxu0 0.0
    %978 = vmatpush1.msra.mxu0 0.0
    %979 = vmatprep.subr.mxu0 0.0
    %980 = vmatpush1.msra.mxu0 0.0
    %981 = vmatprep.subr.mxu0 0.0
    %982 = vmatpush1.msra.mxu0 0.0
    %983 = vmatprep.subr.mxu0 0.0
    %984 = vmatpush1.msra.mxu0 0.0
    %985 = vmatprep.subr.mxu0 0.0
    %986 = vmatpush1.msra.mxu0 0.0
    %987 = vmatprep.subr.mxu0 0.0
    %988 = vmatpush1.msra.mxu0 0.0
    %989 = vmatprep.subr.mxu0 0.0
    %990 = vmatpush1.msra.mxu0 0.0
    %991 = vmatprep.subr.mxu0 0.0
    %992 = vmatpush1.msra.mxu0 0.0
    %993 = vmatprep.mubr.f32.mxu0 0.0
    %994 = vmatmul.mubr.f32.gmra.mrb[0].mxu0 %v924
    %v995 = vpop.f32.mrb[0].mxu0
    %v996 = vadd.f32 0.0, %v995
    %v997 = vpop.f32.mrb[0].mxu0
    %998 = vmatprep.mubr.f32.mxu0 0.0
    %999 = vmatmul.mubr.f32.gmra.mrb[0].mxu0 %v927
    %v1000 = vpop.f32.mrb[0].mxu0
    %v1001 = vadd.f32 0.0, %v1000
    %v1002 = vpop.f32.mrb[0].mxu0
    %1003 = vdwg.mxu0
    %1006 = vrot.lane.b32.xlu0 %v996, 24
    %v1007 = vpop.permute.xlu0 %1006
    %1008 = vrot.lane.b32.xlu0 %v1001, 24
    %v1009 = vpop.permute.xlu0 %1008
    %vm1012 = vcmask 261312
    %1013 = vst.msk [vmem:[#allocation2] sm:$0xff] %vm1012, %v1007
    %1014 = vst.msk [vmem:[#allocation2 + $0x8] sm:$0xff] %vm1012, %v1009
    %v1015 = vld [vmem:[#allocation2] sm:$0xff]
    %v1016 = vld [vmem:[#allocation2 + $0x8] sm:$0xff]
    %v1017 = vlaneseq
    %v1018 = vshrl.u32 %v1017, 7
    %v1019 = vsub.s32 1, %v1018
    %v1020 = vrot.slane %v78, %v1019
    %1025 = vrot.lane.b32.xlu0 %v70, 32
    %v1026 = vpop.permute.xlu0 %1025
    %1027 = vrot.lane.b32.xlu0 %v72, 32
    %v1028 = vpop.permute.xlu0 %1027
    %1029 = vrot.lane.b32.xlu0 %v74, 32
    %v1030 = vpop.permute.xlu0 %1029
    %1031 = vrot.lane.b32.xlu0 %v76, 32
    %v1032 = vpop.permute.xlu0 %1031
    %v1038 = vsel %vm28, %v1015, 0
    %v1041 = vsel %vm28, %v1016, 0
    %1043 = vmatprep.subr.mxu0 0.0
    %1044 = vmatpush1.msra.mxu0 %v1026
    %1045 = vmatprep.subr.mxu0 0.0
    %1046 = vmatpush1.msra.mxu0 %v1028
    %1047 = vmatprep.subr.mxu0 0.0
    %1048 = vmatpush1.msra.mxu0 %v1030
    %1049 = vmatprep.subr.mxu0 0.0
    %1050 = vmatpush1.msra.mxu0 %v1032
    %1051 = vmatprep.subr.mxu0 0.0
    %1052 = vmatpush1.msra.mxu0 0.0
    %1053 = vmatprep.subr.mxu0 0.0
    %1054 = vmatpush1.msra.mxu0 0.0
    %1055 = vmatprep.subr.mxu0 0.0
    %1056 = vmatpush1.msra.mxu0 0.0
    %1057 = vmatprep.subr.mxu0 0.0
    %1058 = vmatpush1.msra.mxu0 0.0
    %1059 = vmatprep.subr.mxu0 0.0
    %1060 = vmatpush1.msra.mxu0 0.0
    %1061 = vmatprep.subr.mxu0 0.0
    %1062 = vmatpush1.msra.mxu0 0.0
    %1063 = vmatprep.subr.mxu0 0.0
    %1064 = vmatpush1.msra.mxu0 0.0
    %1065 = vmatprep.subr.mxu0 0.0
    %1066 = vmatpush1.msra.mxu0 0.0
    %1067 = vmatprep.subr.mxu0 0.0
    %1068 = vmatpush1.msra.mxu0 0.0
    %1069 = vmatprep.subr.mxu0 0.0
    %1070 = vmatpush1.msra.mxu0 0.0
    %1071 = vmatprep.subr.mxu0 0.0
    %1072 = vmatpush1.msra.mxu0 0.0
    %1073 = vmatprep.subr.mxu0 0.0
    %1074 = vmatpush1.msra.mxu0 0.0
    %1075 = vmatprep.subr.mxu0 0.0
    %1076 = vmatpush1.msra.mxu0 0.0
    %1077 = vmatprep.subr.mxu0 0.0
    %1078 = vmatpush1.msra.mxu0 0.0
    %1079 = vmatprep.subr.mxu0 0.0
    %1080 = vmatpush1.msra.mxu0 0.0
    %1081 = vmatprep.subr.mxu0 0.0
    %1082 = vmatpush1.msra.mxu0 0.0
    %1083 = vmatprep.subr.mxu0 0.0
    %1084 = vmatpush1.msra.mxu0 0.0
    %1085 = vmatprep.subr.mxu0 0.0
    %1086 = vmatpush1.msra.mxu0 0.0
    %1087 = vmatprep.subr.mxu0 0.0
    %1088 = vmatpush1.msra.mxu0 0.0
    %1089 = vmatprep.subr.mxu0 0.0
    %1090 = vmatpush1.msra.mxu0 0.0
    %1091 = vmatprep.subr.mxu0 0.0
    %1092 = vmatpush1.msra.mxu0 0.0
    %1093 = vmatprep.subr.mxu0 0.0
    %1094 = vmatpush1.msra.mxu0 0.0
    %1095 = vmatprep.subr.mxu0 0.0
    %1096 = vmatpush1.msra.mxu0 0.0
    %1097 = vmatprep.subr.mxu0 0.0
    %1098 = vmatpush1.msra.mxu0 0.0
    %1099 = vmatprep.subr.mxu0 0.0
    %1100 = vmatpush1.msra.mxu0 0.0
    %1101 = vmatprep.subr.mxu0 0.0
    %1102 = vmatpush1.msra.mxu0 0.0
    %1103 = vmatprep.subr.mxu0 0.0
    %1104 = vmatpush1.msra.mxu0 0.0
    %1105 = vmatprep.subr.mxu0 0.0
    %1106 = vmatpush1.msra.mxu0 0.0
    %1107 = vmatprep.mubr.f32.mxu0 0.0
    %1108 = vmatmul.mubr.f32.gmra.mrb[0].mxu0 %v1038
    %v1109 = vpop.f32.mrb[0].mxu0
    %v1110 = vadd.f32 %v1020, %v1109
    %v1111 = vpop.f32.mrb[0].mxu0
    %1112 = vmatprep.mubr.f32.mxu0 0.0
    %1113 = vmatmul.mubr.f32.gmra.mrb[0].mxu0 %v1041
    %v1114 = vpop.f32.mrb[0].mxu0
    %v1115 = vadd.f32 %v1020, %v1114
    %v1116 = vpop.f32.mrb[0].mxu0
    %1117 = vdwg.mxu0
    %v1118 = vadd.f32 %v66, %v1110
    %v1119 = vadd.f32 %v67, %v1115
    %v1120 = vsel %vm28, %v1118, 0.0
    %1121 = vadd.xlane.f32.xlu0 %v1120
    %v1122 = vpop.xlane.xlu0 %1121
    %v1123 = vsel %vm28, %v1119, 0.0
    %1124 = vadd.xlane.f32.xlu0 %v1123
    %v1125 = vpop.xlane.xlu0 %1124
    %v1126 = vmul.f32 %v1122, %v35
    %v1127 = vmul.f32 %v1125, %v35
    %v1128 = vsub.f32 %v1118, %v1126
    %v1129 = vsub.f32 %v1119, %v1127
    %v1130 = vmul.f32 %v1128, %v1128
    %v1131 = vmul.f32 %v1129, %v1129
    %v1132 = vsel %vm28, %v1130, 0.0
    %1133 = vadd.xlane.f32.xlu0 %v1132
    %v1134 = vpop.xlane.xlu0 %1133
    %v1135 = vsel %vm28, %v1131, 0.0
    %1136 = vadd.xlane.f32.xlu0 %v1135
    %v1137 = vpop.xlane.xlu0 %1136
    %v1138 = vmul.f32 %v1134, %v35
    %v1139 = vmul.f32 %v1137, %v35
    %v1140 = vadd.f32 %v1138, 1e-12
    %v1141 = vadd.f32 %v1139, 1e-12
    %v1142 = vrsqrt.pop %v1140
    %v1143 = vrsqrt.pop %v1141
    %v1144 = vmul.f32 %v1128, %v1142
    %v1145 = vmul.f32 %v1129, %v1143
    %v1146 = vlaneseq
    %v1147 = vshrl.u32 %v1146, 7
    %v1148 = vsub.s32 2, %v1147
    %v1149 = vrot.slane %v78, %v1148
    %v1150 = vmul.f32 %v1144, %v1149
    %v1151 = vmul.f32 %v1145, %v1149
    %v1152 = vlaneseq
    %v1153 = vshrl.u32 %v1152, 7
    %v1154 = vsub.s32 3, %v1153
    %v1155 = vrot.slane %v78, %v1154
    %v1156 = vadd.f32 %v1150, %v1155
    %v1157 = vadd.f32 %v1151, %v1155
    %v1158 = vlaneseq
    %v1159 = vshrl.u32 %v1158, 7
    %v1160 = vsub.s32 4, %v1159
    %v1161 = vrot.slane %v78, %v1160
    %v1163 = vsel %vm28, %v1156, 0
    %v1166 = vsel %vm28, %v1157, 0
    %1168 = vmatprep.subr.mxu0 0.0
    %1169 = vmatpush1.msra.mxu0 %v71
    %1170 = vmatprep.subr.mxu0 0.0
    %1171 = vmatpush1.msra.mxu0 %v73
    %1172 = vmatprep.subr.mxu0 0.0
    %1173 = vmatpush1.msra.mxu0 %v75
    %1174 = vmatprep.subr.mxu0 0.0
    %1175 = vmatpush1.msra.mxu0 %v77
    %1176 = vmatprep.subr.mxu0 0.0
    %1177 = vmatpush1.msra.mxu0 0.0
    %1178 = vmatprep.subr.mxu0 0.0
    %1179 = vmatpush1.msra.mxu0 0.0
    %1180 = vmatprep.subr.mxu0 0.0
    %1181 = vmatpush1.msra.mxu0 0.0
    %1182 = vmatprep.subr.mxu0 0.0
    %1183 = vmatpush1.msra.mxu0 0.0
    %1184 = vmatprep.subr.mxu0 0.0
    %1185 = vmatpush1.msra.mxu0 0.0
    %1186 = vmatprep.subr.mxu0 0.0
    %1187 = vmatpush1.msra.mxu0 0.0
    %1188 = vmatprep.subr.mxu0 0.0
    %1189 = vmatpush1.msra.mxu0 0.0
    %1190 = vmatprep.subr.mxu0 0.0
    %1191 = vmatpush1.msra.mxu0 0.0
    %1192 = vmatprep.subr.mxu0 0.0
    %1193 = vmatpush1.msra.mxu0 0.0
    %1194 = vmatprep.subr.mxu0 0.0
    %1195 = vmatpush1.msra.mxu0 0.0
    %1196 = vmatprep.subr.mxu0 0.0
    %1197 = vmatpush1.msra.mxu0 0.0
    %1198 = vmatprep.subr.mxu0 0.0
    %1199 = vmatpush1.msra.mxu0 0.0
    %1200 = vmatprep.subr.mxu0 0.0
    %1201 = vmatpush1.msra.mxu0 0.0
    %1202 = vmatprep.subr.mxu0 0.0
    %1203 = vmatpush1.msra.mxu0 0.0
    %1204 = vmatprep.subr.mxu0 0.0
    %1205 = vmatpush1.msra.mxu0 0.0
    %1206 = vmatprep.subr.mxu0 0.0
    %1207 = vmatpush1.msra.mxu0 0.0
    %1208 = vmatprep.subr.mxu0 0.0
    %1209 = vmatpush1.msra.mxu0 0.0
    %1210 = vmatprep.subr.mxu0 0.0
    %1211 = vmatpush1.msra.mxu0 0.0
    %1212 = vmatprep.subr.mxu0 0.0
    %1213 = vmatpush1.msra.mxu0 0.0
    %1214 = vmatprep.subr.mxu0 0.0
    %1215 = vmatpush1.msra.mxu0 0.0
    %1216 = vmatprep.subr.mxu0 0.0
    %1217 = vmatpush1.msra.mxu0 0.0
    %1218 = vmatprep.subr.mxu0 0.0
    %1219 = vmatpush1.msra.mxu0 0.0
    %1220 = vmatprep.subr.mxu0 0.0
    %1221 = vmatpush1.msra.mxu0 0.0
    %1222 = vmatprep.subr.mxu0 0.0
    %1223 = vmatpush1.msra.mxu0 0.0
    %1224 = vmatprep.subr.mxu0 0.0
    %1225 = vmatpush1.msra.mxu0 0.0
    %1226 = vmatprep.subr.mxu0 0.0
    %1227 = vmatpush1.msra.mxu0 0.0
    %1228 = vmatprep.subr.mxu0 0.0
    %1229 = vmatpush1.msra.mxu0 0.0
    %1230 = vmatprep.subr.mxu0 0.0
    %1231 = vmatpush1.msra.mxu0 0.0
    %1232 = vmatprep.mubr.f32.mxu0 0.0
    %1233 = vmatmul.mubr.f32.gmra.mrb[0].mxu0 %v1163
    %v1234 = vpop.f32.mrb[0].mxu0
    %v1235 = vadd.f32 %v1161, %v1234
    %v1236 = vpop.f32.mrb[0].mxu0
    %1237 = vmatprep.mubr.f32.mxu0 0.0
    %1238 = vmatmul.mubr.f32.gmra.mrb[0].mxu0 %v1166
    %v1239 = vpop.f32.mrb[0].mxu0
    %v1240 = vadd.f32 %v1161, %v1239
    %v1241 = vpop.f32.mrb[0].mxu0
    %1242 = vdwg.mxu0
    %v1243 = vmul.f32 %v1235, 0.5
    %v1244 = vmul.f32 %v1240, 0.5
    %v1245 = vmul.f32 %v1235, 0.044715
    %v1246 = vmul.f32 %v1240, 0.044715
    %v1247 = vmul.f32 %v1245, %v1235
    %v1248 = vmul.f32 %v1246, %v1240
    %v1249 = vmul.f32 %v1247, %v1235
    %v1250 = vmul.f32 %v1248, %v1240
    %v1251 = vadd.f32 %v1235, %v1249
    %v1252 = vadd.f32 %v1240, %v1250
    %v1253 = vmul.f32 %v1251, 0.7978846
    %v1254 = vmul.f32 %v1252, 0.7978846
    %v1255 = vtanh.pop %v1253
    %v1256 = vtanh.pop %v1254
    %v1257 = vadd.f32 %v1255, 1.0
    %v1258 = vadd.f32 %v1256, 1.0
    %v1259 = vmul.f32 %v1243, %v1257
    %v1260 = vmul.f32 %v1244, %v1258
    %v1261 = vld [vmem:[%s4] sm:$0xff]
    %v1262 = vld [vmem:[%s4 + $0x8] sm:$0xff]
    %v1263 = vld [vmem:[%s4 + $0x10] sm:$0xff]
    %v1264 = vld [vmem:[%s4 + $0x18] sm:$0xff]
    %v1265 = vld [vmem:[%s4 + $0x20] sm:$0xff]
    %v1266 = vld [vmem:[%s4 + $0x28] sm:$0xff]
    %v1267 = vld [vmem:[%s4 + $0x30] sm:$0xff]
    %v1268 = vld [vmem:[%s4 + $0x38] sm:$0xff]
    %v1269 = vlaneseq
    %v1270 = vshrl.u32 %v1269, 7
    %v1271 = vsub.s32 5, %v1270
    %v1272 = vrot.slane %v78, %v1271
    %vm1273 = vcmask 523264
    %v1275 = vsel %vm1273, %v1259, 0
    %v1278 = vsel %vm1273, %v1260, 0
    %1280 = vmatprep.subr.mxu0 0.0
    %1281 = vmatpush1.msra.mxu0 %v1261
    %1282 = vmatprep.subr.mxu0 0.0
    %1283 = vmatpush1.msra.mxu0 %v1262
    %1284 = vmatprep.subr.mxu0 0.0
    %1285 = vmatpush1.msra.mxu0 %v1263
    %1286 = vmatprep.subr.mxu0 0.0
    %1287 = vmatpush1.msra.mxu0 %v1264
    %1288 = vmatprep.subr.mxu0 0.0
    %1289 = vmatpush1.msra.mxu0 %v1265
    %1290 = vmatprep.subr.mxu0 0.0
    %1291 = vmatpush1.msra.mxu0 %v1266
    %1292 = vmatprep.subr.mxu0 0.0
    %1293 = vmatpush1.msra.mxu0 %v1267
    %1294 = vmatprep.subr.mxu0 0.0
    %1295 = vmatpush1.msra.mxu0 %v1268
    %1296 = vmatprep.subr.mxu0 0.0
    %1297 = vmatpush1.msra.mxu0 0.0
    %1298 = vmatprep.subr.mxu0 0.0
    %1299 = vmatpush1.msra.mxu0 0.0
    %1300 = vmatprep.subr.mxu0 0.0
    %1301 = vmatpush1.msra.mxu0 0.0
    %1302 = vmatprep.subr.mxu0 0.0
    %1303 = vmatpush1.msra.mxu0 0.0
    %1304 = vmatprep.subr.mxu0 0.0
    %1305 = vmatpush1.msra.mxu0 0.0
    %1306 = vmatprep.subr.mxu0 0.0
    %1307 = vmatpush1.msra.mxu0 0.0
    %1308 = vmatprep.subr.mxu0 0.0
    %1309 = vmatpush1.msra.mxu0 0.0
    %1310 = vmatprep.subr.mxu0 0.0
    %1311 = vmatpush1.msra.mxu0 0.0
    %1312 = vmatprep.subr.mxu0 0.0
    %1313 = vmatpush1.msra.mxu0 0.0
    %1314 = vmatprep.subr.mxu0 0.0
    %1315 = vmatpush1.msra.mxu0 0.0
    %1316 = vmatprep.subr.mxu0 0.0
    %1317 = vmatpush1.msra.mxu0 0.0
    %1318 = vmatprep.subr.mxu0 0.0
    %1319 = vmatpush1.msra.mxu0 0.0
    %1320 = vmatprep.subr.mxu0 0.0
    %1321 = vmatpush1.msra.mxu0 0.0
    %1322 = vmatprep.subr.mxu0 0.0
    %1323 = vmatpush1.msra.mxu0 0.0
    %1324 = vmatprep.subr.mxu0 0.0
    %1325 = vmatpush1.msra.mxu0 0.0
    %1326 = vmatprep.subr.mxu0 0.0
    %1327 = vmatpush1.msra.mxu0 0.0
    %1328 = vmatprep.subr.mxu0 0.0
    %1329 = vmatpush1.msra.mxu0 0.0
    %1330 = vmatprep.subr.mxu0 0.0
    %1331 = vmatpush1.msra.mxu0 0.0
    %1332 = vmatprep.subr.mxu0 0.0
    %1333 = vmatpush1.msra.mxu0 0.0
    %1334 = vmatprep.subr.mxu0 0.0
    %1335 = vmatpush1.msra.mxu0 0.0
    %1336 = vmatprep.subr.mxu0 0.0
    %1337 = vmatpush1.msra.mxu0 0.0
    %1338 = vmatprep.subr.mxu0 0.0
    %1339 = vmatpush1.msra.mxu0 0.0
    %1340 = vmatprep.subr.mxu0 0.0
    %1341 = vmatpush1.msra.mxu0 0.0
    %1342 = vmatprep.subr.mxu0 0.0
    %1343 = vmatpush1.msra.mxu0 0.0
    %1344 = vmatprep.mubr.f32.mxu0 0.0
    %1345 = vmatmul.mubr.f32.gmra.mrb[0].mxu0 %v1275
    %v1346 = vpop.f32.mrb[0].mxu0
    %v1347 = vadd.f32 %v1272, %v1346
    %v1348 = vpop.f32.mrb[0].mxu0
    %1349 = vmatprep.mubr.f32.mxu0 0.0
    %1350 = vmatmul.mubr.f32.gmra.mrb[0].mxu0 %v1278
    %v1351 = vpop.f32.mrb[0].mxu0
    %v1352 = vadd.f32 %v1272, %v1351
    %v1353 = vpop.f32.mrb[0].mxu0
    %1354 = vdwg.mxu0
    %v1355 = vadd.f32 %v1156, %v1347
    %v1356 = vadd.f32 %v1157, %v1352
    %v1357 = vsel %vm28, %v1355, 0.0
    %1358 = vadd.xlane.f32.xlu0 %v1357
    %v1359 = vpop.xlane.xlu0 %1358
    %v1360 = vsel %vm28, %v1356, 0.0
    %1361 = vadd.xlane.f32.xlu0 %v1360
    %v1362 = vpop.xlane.xlu0 %1361
    %v1363 = vmul.f32 %v1359, %v35
    %v1364 = vmul.f32 %v1362, %v35
    %v1365 = vsub.f32 %v1355, %v1363
    %v1366 = vsub.f32 %v1356, %v1364
    %v1367 = vmul.f32 %v1365, %v1365
    %v1368 = vmul.f32 %v1366, %v1366
    %v1369 = vsel %vm28, %v1367, 0.0
    %1370 = vadd.xlane.f32.xlu0 %v1369
    %v1371 = vpop.xlane.xlu0 %1370
    %v1372 = vsel %vm28, %v1368, 0.0
    %1373 = vadd.xlane.f32.xlu0 %v1372
    %v1374 = vpop.xlane.xlu0 %1373
    %v1375 = vmul.f32 %v1371, %v35
    %v1376 = vmul.f32 %v1374, %v35
    %v1377 = vadd.f32 %v1375, 1e-12
    %v1378 = vadd.f32 %v1376, 1e-12
    %v1379 = vrsqrt.pop %v1377
    %v1380 = vrsqrt.pop %v1378
    %v1381 = vmul.f32 %v1365, %v1379
    %v1382 = vmul.f32 %v1366, %v1380
    %v1383 = vlaneseq
    %v1384 = vshrl.u32 %v1383, 7
    %v1385 = vsub.s32 6, %v1384
    %v1386 = vrot.slane %v78, %v1385
    %v1387 = vmul.f32 %v1381, %v1386
    %v1388 = vmul.f32 %v1382, %v1386
    %v1389 = vlaneseq
    %v1390 = vshrl.u32 %v1389, 7
    %v1391 = vsub.s32 7, %v1390
    %v1392 = vrot.slane %v78, %v1391
    %v1393 = vadd.f32 %v1387, %v1392
    %v1394 = vadd.f32 %v1388, %v1392
    %s1395 = scalar_lea.vmem %s3, 64
    %v1396 = vld [vmem:[%s1395] sm:$0xff]
    %v1397 = vld [vmem:[%s1395 + $0x8] sm:$0xff]
    %v1398 = vld [vmem:[%s1395 + $0x10] sm:$0xff]
    %v1399 = vld [vmem:[%s1395 + $0x18] sm:$0xff]
    %v1400 = vld [vmem:[%s1395 + $0x20] sm:$0xff]
    %v1401 = vld [vmem:[%s1395 + $0x28] sm:$0xff]
    %v1402 = vld [vmem:[%s1395 + $0x30] sm:$0xff]
    %v1403 = vld [vmem:[%s1395 + $0x38] sm:$0xff]
    %s1404 = scalar_lea.vmem %s5, 8
    %v1405 = vld [vmem:[%s1404] sm:$0xff]
    %v1406 = vlaneseq
    %v1407 = vshrl.u32 %v1406, 7
    %v1408 = vsub.s32 0, %v1407
    %v1409 = vrot.slane %v1405, %v1408
    %v1411 = vsel %vm28, %v1393, 0
    %v1414 = vsel %vm28, %v1394, 0
    %1416 = vmatprep.subr.mxu0 0.0
    %1417 = vmatpush1.msra.mxu0 %v1396
    %1418 = vmatprep.subr.mxu0 0.0
    %1419 = vmatpush1.msra.mxu0 %v1398
    %1420 = vmatprep.subr.mxu0 0.0
    %1421 = vmatpush1.msra.mxu0 %v1400
    %1422 = vmatprep.subr.mxu0 0.0
    %1423 = vmatpush1.msra.mxu0 %v1402
    %1424 = vmatprep.subr.mxu0 0.0
    %1425 = vmatpush1.msra.mxu0 0.0
    %1426 = vmatprep.subr.mxu0 0.0
    %1427 = vmatpush1.msra.mxu0 0.0
    %1428 = vmatprep.subr.mxu0 0.0
    %1429 = vmatpush1.msra.mxu0 0.0
    %1430 = vmatprep.subr.mxu0 0.0
    %1431 = vmatpush1.msra.mxu0 0.0
    %1432 = vmatprep.subr.mxu0 0.0
    %1433 = vmatpush1.msra.mxu0 0.0
    %1434 = vmatprep.subr.mxu0 0.0
    %1435 = vmatpush1.msra.mxu0 0.0
    %1436 = vmatprep.subr.mxu0 0.0
    %1437 = vmatpush1.msra.mxu0 0.0
    %1438 = vmatprep.subr.mxu0 0.0
    %1439 = vmatpush1.msra.mxu0 0.0
    %1440 = vmatprep.subr.mxu0 0.0
    %1441 = vmatpush1.msra.mxu0 0.0
    %1442 = vmatprep.subr.mxu0 0.0
    %1443 = vmatpush1.msra.mxu0 0.0
    %1444 = vmatprep.subr.mxu0 0.0
    %1445 = vmatpush1.msra.mxu0 0.0
    %1446 = vmatprep.subr.mxu0 0.0
    %1447 = vmatpush1.msra.mxu0 0.0
    %1448 = vmatprep.subr.mxu0 0.0
    %1449 = vmatpush1.msra.mxu0 0.0
    %1450 = vmatprep.subr.mxu0 0.0
    %1451 = vmatpush1.msra.mxu0 0.0
    %1452 = vmatprep.subr.mxu0 0.0
    %1453 = vmatpush1.msra.mxu0 0.0
    %1454 = vmatprep.subr.mxu0 0.0
    %1455 = vmatpush1.msra.mxu0 0.0
    %1456 = vmatprep.subr.mxu0 0.0
    %1457 = vmatpush1.msra.mxu0 0.0
    %1458 = vmatprep.subr.mxu0 0.0
    %1459 = vmatpush1.msra.mxu0 0.0
    %1460 = vmatprep.subr.mxu0 0.0
    %1461 = vmatpush1.msra.mxu0 0.0
    %1462 = vmatprep.subr.mxu0 0.0
    %1463 = vmatpush1.msra.mxu0 0.0
    %1464 = vmatprep.subr.mxu0 0.0
    %1465 = vmatpush1.msra.mxu0 0.0
    %1466 = vmatprep.subr.mxu0 0.0
    %1467 = vmatpush1.msra.mxu0 0.0
    %1468 = vmatprep.subr.mxu0 0.0
    %1469 = vmatpush1.msra.mxu0 0.0
    %1470 = vmatprep.subr.mxu0 0.0
    %1471 = vmatpush1.msra.mxu0 0.0
    %1472 = vmatprep.subr.mxu0 0.0
    %1473 = vmatpush1.msra.mxu0 0.0
    %1474 = vmatprep.subr.mxu0 0.0
    %1475 = vmatpush1.msra.mxu0 0.0
    %1476 = vmatprep.subr.mxu0 0.0
    %1477 = vmatpush1.msra.mxu0 0.0
    %1478 = vmatprep.subr.mxu0 0.0
    %1479 = vmatpush1.msra.mxu0 0.0
    %1480 = vmatprep.mubr.f32.mxu0 0.0
    %1481 = vmatmul.mubr.f32.gmra.mrb[0].mxu0 %v1411
    %v1482 = vpop.f32.mrb[0].mxu0
    %v1483 = vadd.f32 %v1409, %v1482
    %v1484 = vpop.f32.mrb[0].mxu0
    %1485 = vmatprep.mubr.f32.mxu0 0.0
    %1486 = vmatmul.mubr.f32.gmra.mrb[0].mxu0 %v1414
    %v1487 = vpop.f32.mrb[0].mxu0
    %v1488 = vadd.f32 %v1409, %v1487
    %v1489 = vpop.f32.mrb[0].mxu0
    %1490 = vdwg.mxu0
    %1493 = vrot.lane.b32.xlu0 %v1483, 96
    %v1494 = vpop.permute.xlu0 %1493
    %1495 = vrot.lane.b32.xlu0 %v1488, 96
    %v1496 = vpop.permute.xlu0 %1495
    %v1497 = vsel %vm170, %v1483, 0
    %v1499 = vsel %vm170, %v1488, 0
    %v1501 = vsel %vm170, %v1494, 0
    %v1503 = vsel %vm170, %v1496, 0
    %1505 = vmatprep.subr.mxu0 0.0
    %1506 = vmatpush1.xpose.msra.mxu0 %v1501
    %1507 = vmatprep.subr.mxu0 0.0
    %1508 = vmatpush1.xpose.msra.mxu0 %v1503
    %1509 = vmatprep.subr.mxu0 0.0
    %1510 = vmatpush1.xpose.msra.mxu0 0.0
    %1511 = vmatprep.subr.mxu0 0.0
    %1512 = vmatpush1.xpose.msra.mxu0 0.0
    %1513 = vmatprep.subr.mxu0 0.0
    %1514 = vmatpush1.xpose.msra.mxu0 0.0
    %1515 = vmatprep.subr.mxu0 0.0
    %1516 = vmatpush1.xpose.msra.mxu0 0.0
    %1517 = vmatprep.subr.mxu0 0.0
    %1518 = vmatpush1.xpose.msra.mxu0 0.0
    %1519 = vmatprep.subr.mxu0 0.0
    %1520 = vmatpush1.xpose.msra.mxu0 0.0
    %1521 = vmatprep.subr.mxu0 0.0
    %1522 = vmatpush1.xpose.msra.mxu0 0.0
    %1523 = vmatprep.subr.mxu0 0.0
    %1524 = vmatpush1.xpose.msra.mxu0 0.0
    %1525 = vmatprep.subr.mxu0 0.0
    %1526 = vmatpush1.xpose.msra.mxu0 0.0
    %1527 = vmatprep.subr.mxu0 0.0
    %1528 = vmatpush1.xpose.msra.mxu0 0.0
    %1529 = vmatprep.subr.mxu0 0.0
    %1530 = vmatpush1.xpose.msra.mxu0 0.0
    %1531 = vmatprep.subr.mxu0 0.0
    %1532 = vmatpush1.xpose.msra.mxu0 0.0
    %1533 = vmatprep.subr.mxu0 0.0
    %1534 = vmatpush1.xpose.msra.mxu0 0.0
    %1535 = vmatprep.subr.mxu0 0.0
    %1536 = vmatpush1.xpose.msra.mxu0 0.0
    %1537 = vmatprep.subr.mxu0 0.0
    %1538 = vmatpush1.xpose.msra.mxu0 0.0
    %1539 = vmatprep.subr.mxu0 0.0
    %1540 = vmatpush1.xpose.msra.mxu0 0.0
    %1541 = vmatprep.subr.mxu0 0.0
    %1542 = vmatpush1.xpose.msra.mxu0 0.0
    %1543 = vmatprep.subr.mxu0 0.0
    %1544 = vmatpush1.xpose.msra.mxu0 0.0
    %1545 = vmatprep.subr.mxu0 0.0
    %1546 = vmatpush1.xpose.msra.mxu0 0.0
    %1547 = vmatprep.subr.mxu0 0.0
    %1548 = vmatpush1.xpose.msra.mxu0 0.0
    %1549 = vmatprep.subr.mxu0 0.0
    %1550 = vmatpush1.xpose.msra.mxu0 0.0
    %1551 = vmatprep.subr.mxu0 0.0
    %1552 = vmatpush1.xpose.msra.mxu0 0.0
    %1553 = vmatprep.subr.mxu0 0.0
    %1554 = vmatpush1.xpose.msra.mxu0 0.0
    %1555 = vmatprep.subr.mxu0 0.0
    %1556 = vmatpush1.xpose.msra.mxu0 0.0
    %1557 = vmatprep.subr.mxu0 0.0
    %1558 = vmatpush1.xpose.msra.mxu0 0.0
    %1559 = vmatprep.subr.mxu0 0.0
    %1560 = vmatpush1.xpose.msra.mxu0 0.0
    %1561 = vmatprep.subr.mxu0 0.0
    %1562 = vmatpush1.xpose.msra.mxu0 0.0
    %1563 = vmatprep.subr.mxu0 0.0
    %1564 = vmatpush1.xpose.msra.mxu0 0.0
    %1565 = vmatprep.subr.mxu0 0.0
    %1566 = vmatpush1.xpose.msra.mxu0 0.0
    %1567 = vmatprep.subr.mxu0 0.0
    %1568 = vmatpush1.xpose.msra.mxu0 0.0
    %1569 = vmatprep.mubr.f32.mxu0 0.0
    %1570 = vmatmul.mubr.f32.gmra.mrb[0].mxu0 %v1497
    %v1571 = vpop.f32.mrb[0].mxu0
    %v1572 = vadd.f32 0.0, %v1571
    %v1573 = vpop.f32.mrb[0].mxu0
    %1574 = vmatprep.mubr.f32.mxu0 0.0
    %1575 = vmatmul.mubr.f32.gmra.mrb[0].mxu0 %v1499
    %v1576 = vpop.f32.mrb[0].mxu0
    %v1577 = vadd.f32 0.0, %v1576
    %v1578 = vpop.f32.mrb[0].mxu0
    %1579 = vdwg.mxu0
    %v1580 = vmul.f32 %v1572, 0.35355338
    %v1581 = vmul.f32 %v1577, 0.35355338
    %v1582 = vadd.f32 %v1580, %v68
    %v1583 = vadd.f32 %v1581, %v69
    %v1584 = vsel %vm258, %v1582, -inf
    %1585 = vmax.xlane.f32.xlu0 %v1584
    %v1586 = vpop.xlane.xlu0 %1585
    %v1587 = vsel %vm258, %v1583, -inf
    %1588 = vmax.xlane.f32.xlu0 %v1587
    %v1589 = vpop.xlane.xlu0 %1588
    %v1590 = vsub.f32 %v1582, %v1586
    %v1591 = vsub.f32 %v1583, %v1589
    %v1592 = vmul.f32 %v1590, 1.442695
    %v1593 = vpow.pop %v1592
    %v1594 = vmul.f32 %v1591, 1.442695
    %v1595 = vpow.pop %v1594
    %v1596 = vsel %vm258, %v1593, 0.0
    %1597 = vadd.xlane.f32.xlu0 %v1596
    %v1598 = vpop.xlane.xlu0 %1597
    %v1599 = vsel %vm258, %v1595, 0.0
    %1600 = vadd.xlane.f32.xlu0 %v1599
    %v1601 = vpop.xlane.xlu0 %1600
    %v1602 = vrcp.pop %v1598
    %v1603 = vrcp.pop %v1601
    %v1604 = vmul.f32 %v1593, %v1602
    %v1605 = vmul.f32 %v1595, %v1603
    %1606 = vrot.lane.b32.xlu0 %v1483, 64
    %v1607 = vpop.permute.xlu0 %1606
    %1608 = vrot.lane.b32.xlu0 %v1488, 64
    %v1609 = vpop.permute.xlu0 %1608
    %v1613 = vsel %vm258, %v1604, 0
    %v1616 = vsel %vm258, %v1605, 0
    %1618 = vmatprep.subr.mxu0 0.0
    %1619 = vmatpush1.msra.mxu0 %v1607
    %1620 = vmatprep.subr.mxu0 0.0
    %1621 = vmatpush1.msra.mxu0 %v1609
    %1622 = vmatprep.subr.mxu0 0.0
    %1623 = vmatpush1.msra.mxu0 0.0
    %1624 = vmatprep.subr.mxu0 0.0
    %1625 = vmatpush1.msra.mxu0 0.0
    %1626 = vmatprep.subr.mxu0 0.0
    %1627 = vmatpush1.msra.mxu0 0.0
    %1628 = vmatprep.subr.mxu0 0.0
    %1629 = vmatpush1.msra.mxu0 0.0
    %1630 = vmatprep.subr.mxu0 0.0
    %1631 = vmatpush1.msra.mxu0 0.0
    %1632 = vmatprep.subr.mxu0 0.0
    %1633 = vmatpush1.msra.mxu0 0.0
    %1634 = vmatprep.subr.mxu0 0.0
    %1635 = vmatpush1.msra.mxu0 0.0
    %1636 = vmatprep.subr.mxu0 0.0
    %1637 = vmatpush1.msra.mxu0 0.0
    %1638 = vmatprep.subr.mxu0 0.0
    %1639 = vmatpush1.msra.mxu0 0.0
    %1640 = vmatprep.subr.mxu0 0.0
    %1641 = vmatpush1.msra.mxu0 0.0
    %1642 = vmatprep.subr.mxu0 0.0
    %1643 = vmatpush1.msra.mxu0 0.0
    %1644 = vmatprep.subr.mxu0 0.0
    %1645 = vmatpush1.msra.mxu0 0.0
    %1646 = vmatprep.subr.mxu0 0.0
    %1647 = vmatpush1.msra.mxu0 0.0
    %1648 = vmatprep.subr.mxu0 0.0
    %1649 = vmatpush1.msra.mxu0 0.0
    %1650 = vmatprep.subr.mxu0 0.0
    %1651 = vmatpush1.msra.mxu0 0.0
    %1652 = vmatprep.subr.mxu0 0.0
    %1653 = vmatpush1.msra.mxu0 0.0
    %1654 = vmatprep.subr.mxu0 0.0
    %1655 = vmatpush1.msra.mxu0 0.0
    %1656 = vmatprep.subr.mxu0 0.0
    %1657 = vmatpush1.msra.mxu0 0.0
    %1658 = vmatprep.subr.mxu0 0.0
    %1659 = vmatpush1.msra.mxu0 0.0
    %1660 = vmatprep.subr.mxu0 0.0
    %1661 = vmatpush1.msra.mxu0 0.0
    %1662 = vmatprep.subr.mxu0 0.0
    %1663 = vmatpush1.msra.mxu0 0.0
    %1664 = vmatprep.subr.mxu0 0.0
    %1665 = vmatpush1.msra.mxu0 0.0
    %1666 = vmatprep.subr.mxu0 0.0
    %1667 = vmatpush1.msra.mxu0 0.0
    %1668 = vmatprep.subr.mxu0 0.0
    %1669 = vmatpush1.msra.mxu0 0.0
    %1670 = vmatprep.subr.mxu0 0.0
    %1671 = vmatpush1.msra.mxu0 0.0
    %1672 = vmatprep.subr.mxu0 0.0
    %1673 = vmatpush1.msra.mxu0 0.0
    %1674 = vmatprep.subr.mxu0 0.0
    %1675 = vmatpush1.msra.mxu0 0.0
    %1676 = vmatprep.subr.mxu0 0.0
    %1677 = vmatpush1.msra.mxu0 0.0
    %1678 = vmatprep.subr.mxu0 0.0
    %1679 = vmatpush1.msra.mxu0 0.0
    %1680 = vmatprep.subr.mxu0 0.0
    %1681 = vmatpush1.msra.mxu0 0.0
    %1682 = vmatprep.mubr.f32.mxu0 0.0
    %1683 = vmatmul.mubr.f32.gmra.mrb[0].mxu0 %v1613
    %v1684 = vpop.f32.mrb[0].mxu0
    %v1685 = vadd.f32 0.0, %v1684
    %v1686 = vpop.f32.mrb[0].mxu0
    %1687 = vmatprep.mubr.f32.mxu0 0.0
    %1688 = vmatmul.mubr.f32.gmra.mrb[0].mxu0 %v1616
    %v1689 = vpop.f32.mrb[0].mxu0
    %v1690 = vadd.f32 0.0, %v1689
    %v1691 = vpop.f32.mrb[0].mxu0
    %1692 = vdwg.mxu0
    %1693 = vst.msk [vmem:[#allocation2] sm:$0xff] %vm170, %v1685
    %1694 = vst.msk [vmem:[#allocation2 + $0x8] sm:$0xff] %vm170, %v1690
    %1695 = vrot.lane.b32.xlu0 %v1483, 120
    %v1696 = vpop.permute.xlu0 %1695
    %1697 = vrot.lane.b32.xlu0 %v1488, 120
    %v1698 = vpop.permute.xlu0 %1697
    %1699 = vrot.lane.b32.xlu0 %v1483, 88
    %v1700 = vpop.permute.xlu0 %1699
    %1701 = vrot.lane.b32.xlu0 %v1488, 88
    %v1702 = vpop.permute.xlu0 %1701
    %v1703 = vsel %vm170, %v1696, 0
    %v1705 = vsel %vm170, %v1698, 0
    %v1707 = vsel %vm170, %v1700, 0
    %v1709 = vsel %vm170, %v1702, 0
    %1711 = vmatprep.subr.mxu0 0.0
    %1712 = vmatpush1.xpose.msra.mxu0 %v1707
    %1713 = vmatprep.subr.mxu0 0.0
    %1714 = vmatpush1.xpose.msra.mxu0 %v1709
    %1715 = vmatprep.subr.mxu0 0.0
    %1716 = vmatpush1.xpose.msra.mxu0 0.0
    %1717 = vmatprep.subr.mxu0 0.0
    %1718 = vmatpush1.xpose.msra.mxu0 0.0
    %1719 = vmatprep.subr.mxu0 0.0
    %1720 = vmatpush1.xpose.msra.mxu0 0.0
    %1721 = vmatprep.subr.mxu0 0.0
    %1722 = vmatpush1.xpose.msra.mxu0 0.0
    %1723 = vmatprep.subr.mxu0 0.0
    %1724 = vmatpush1.xpose.msra.mxu0 0.0
    %1725 = vmatprep.subr.mxu0 0.0
    %1726 = vmatpush1.xpose.msra.mxu0 0.0
    %1727 = vmatprep.subr.mxu0 0.0
    %1728 = vmatpush1.xpose.msra.mxu0 0.0
    %1729 = vmatprep.subr.mxu0 0.0
    %1730 = vmatpush1.xpose.msra.mxu0 0.0
    %1731 = vmatprep.subr.mxu0 0.0
    %1732 = vmatpush1.xpose.msra.mxu0 0.0
    %1733 = vmatprep.subr.mxu0 0.0
    %1734 = vmatpush1.xpose.msra.mxu0 0.0
    %1735 = vmatprep.subr.mxu0 0.0
    %1736 = vmatpush1.xpose.msra.mxu0 0.0
    %1737 = vmatprep.subr.mxu0 0.0
    %1738 = vmatpush1.xpose.msra.mxu0 0.0
    %1739 = vmatprep.subr.mxu0 0.0
    %1740 = vmatpush1.xpose.msra.mxu0 0.0
    %1741 = vmatprep.subr.mxu0 0.0
    %1742 = vmatpush1.xpose.msra.mxu0 0.0
    %1743 = vmatprep.subr.mxu0 0.0
    %1744 = vmatpush1.xpose.msra.mxu0 0.0
    %1745 = vmatprep.subr.mxu0 0.0
    %1746 = vmatpush1.xpose.msra.mxu0 0.0
    %1747 = vmatprep.subr.mxu0 0.0
    %1748 = vmatpush1.xpose.msra.mxu0 0.0
    %1749 = vmatprep.subr.mxu0 0.0
    %1750 = vmatpush1.xpose.msra.mxu0 0.0
    %1751 = vmatprep.subr.mxu0 0.0
    %1752 = vmatpush1.xpose.msra.mxu0 0.0
    %1753 = vmatprep.subr.mxu0 0.0
    %1754 = vmatpush1.xpose.msra.mxu0 0.0
    %1755 = vmatprep.subr.mxu0 0.0
    %1756 = vmatpush1.xpose.msra.mxu0 0.0
    %1757 = vmatprep.subr.mxu0 0.0
    %1758 = vmatpush1.xpose.msra.mxu0 0.0
    %1759 = vmatprep.subr.mxu0 0.0
    %1760 = vmatpush1.xpose.msra.mxu0 0.0
    %1761 = vmatprep.subr.mxu0 0.0
    %1762 = vmatpush1.xpose.msra.mxu0 0.0
    %1763 = vmatprep.subr.mxu0 0.0
    %1764 = vmatpush1.xpose.msra.mxu0 0.0
    %1765 = vmatprep.subr.mxu0 0.0
    %1766 = vmatpush1.xpose.msra.mxu0 0.0
    %1767 = vmatprep.subr.mxu0 0.0
    %1768 = vmatpush1.xpose.msra.mxu0 0.0
    %1769 = vmatprep.subr.mxu0 0.0
    %1770 = vmatpush1.xpose.msra.mxu0 0.0
    %1771 = vmatprep.subr.mxu0 0.0
    %1772 = vmatpush1.xpose.msra.mxu0 0.0
    %1773 = vmatprep.subr.mxu0 0.0
    %1774 = vmatpush1.xpose.msra.mxu0 0.0
    %1775 = vmatprep.mubr.f32.mxu0 0.0
    %1776 = vmatmul.mubr.f32.gmra.mrb[0].mxu0 %v1703
    %v1777 = vpop.f32.mrb[0].mxu0
    %v1778 = vadd.f32 0.0, %v1777
    %v1779 = vpop.f32.mrb[0].mxu0
    %1780 = vmatprep.mubr.f32.mxu0 0.0
    %1781 = vmatmul.mubr.f32.gmra.mrb[0].mxu0 %v1705
    %v1782 = vpop.f32.mrb[0].mxu0
    %v1783 = vadd.f32 0.0, %v1782
    %v1784 = vpop.f32.mrb[0].mxu0
    %1785 = vdwg.mxu0
    %v1786 = vmul.f32 %v1778, 0.35355338
    %v1787 = vmul.f32 %v1783, 0.35355338
    %v1788 = vadd.f32 %v1786, %v68
    %v1789 = vadd.f32 %v1787, %v69
    %v1790 = vsel %vm258, %v1788, -inf
    %1791 = vmax.xlane.f32.xlu0 %v1790
    %v1792 = vpop.xlane.xlu0 %1791
    %v1793 = vsel %vm258, %v1789, -inf
    %1794 = vmax.xlane.f32.xlu0 %v1793
    %v1795 = vpop.xlane.xlu0 %1794
    %v1796 = vsub.f32 %v1788, %v1792
    %v1797 = vsub.f32 %v1789, %v1795
    %v1798 = vmul.f32 %v1796, 1.442695
    %v1799 = vpow.pop %v1798
    %v1800 = vmul.f32 %v1797, 1.442695
    %v1801 = vpow.pop %v1800
    %v1802 = vsel %vm258, %v1799, 0.0
    %1803 = vadd.xlane.f32.xlu0 %v1802
    %v1804 = vpop.xlane.xlu0 %1803
    %v1805 = vsel %vm258, %v1801, 0.0
    %1806 = vadd.xlane.f32.xlu0 %v1805
    %v1807 = vpop.xlane.xlu0 %1806
    %v1808 = vrcp.pop %v1804
    %v1809 = vrcp.pop %v1807
    %v1810 = vmul.f32 %v1799, %v1808
    %v1811 = vmul.f32 %v1801, %v1809
    %1812 = vrot.lane.b32.xlu0 %v1483, 56
    %v1813 = vpop.permute.xlu0 %1812
    %1814 = vrot.lane.b32.xlu0 %v1488, 56
    %v1815 = vpop.permute.xlu0 %1814
    %v1819 = vsel %vm258, %v1810, 0
    %v1822 = vsel %vm258, %v1811, 0
    %1824 = vmatprep.subr.mxu0 0.0
    %1825 = vmatpush1.msra.mxu0 %v1813
    %1826 = vmatprep.subr.mxu0 0.0
    %1827 = vmatpush1.msra.mxu0 %v1815
    %1828 = vmatprep.subr.mxu0 0.0
    %1829 = vmatpush1.msra.mxu0 0.0
    %1830 = vmatprep.subr.mxu0 0.0
    %1831 = vmatpush1.msra.mxu0 0.0
    %1832 = vmatprep.subr.mxu0 0.0
    %1833 = vmatpush1.msra.mxu0 0.0
    %1834 = vmatprep.subr.mxu0 0.0
    %1835 = vmatpush1.msra.mxu0 0.0
    %1836 = vmatprep.subr.mxu0 0.0
    %1837 = vmatpush1.msra.mxu0 0.0
    %1838 = vmatprep.subr.mxu0 0.0
    %1839 = vmatpush1.msra.mxu0 0.0
    %1840 = vmatprep.subr.mxu0 0.0
    %1841 = vmatpush1.msra.mxu0 0.0
    %1842 = vmatprep.subr.mxu0 0.0
    %1843 = vmatpush1.msra.mxu0 0.0
    %1844 = vmatprep.subr.mxu0 0.0
    %1845 = vmatpush1.msra.mxu0 0.0
    %1846 = vmatprep.subr.mxu0 0.0
    %1847 = vmatpush1.msra.mxu0 0.0
    %1848 = vmatprep.subr.mxu0 0.0
    %1849 = vmatpush1.msra.mxu0 0.0
    %1850 = vmatprep.subr.mxu0 0.0
    %1851 = vmatpush1.msra.mxu0 0.0
    %1852 = vmatprep.subr.mxu0 0.0
    %1853 = vmatpush1.msra.mxu0 0.0
    %1854 = vmatprep.subr.mxu0 0.0
    %1855 = vmatpush1.msra.mxu0 0.0
    %1856 = vmatprep.subr.mxu0 0.0
    %1857 = vmatpush1.msra.mxu0 0.0
    %1858 = vmatprep.subr.mxu0 0.0
    %1859 = vmatpush1.msra.mxu0 0.0
    %1860 = vmatprep.subr.mxu0 0.0
    %1861 = vmatpush1.msra.mxu0 0.0
    %1862 = vmatprep.subr.mxu0 0.0
    %1863 = vmatpush1.msra.mxu0 0.0
    %1864 = vmatprep.subr.mxu0 0.0
    %1865 = vmatpush1.msra.mxu0 0.0
    %1866 = vmatprep.subr.mxu0 0.0
    %1867 = vmatpush1.msra.mxu0 0.0
    %1868 = vmatprep.subr.mxu0 0.0
    %1869 = vmatpush1.msra.mxu0 0.0
    %1870 = vmatprep.subr.mxu0 0.0
    %1871 = vmatpush1.msra.mxu0 0.0
    %1872 = vmatprep.subr.mxu0 0.0
    %1873 = vmatpush1.msra.mxu0 0.0
    %1874 = vmatprep.subr.mxu0 0.0
    %1875 = vmatpush1.msra.mxu0 0.0
    %1876 = vmatprep.subr.mxu0 0.0
    %1877 = vmatpush1.msra.mxu0 0.0
    %1878 = vmatprep.subr.mxu0 0.0
    %1879 = vmatpush1.msra.mxu0 0.0
    %1880 = vmatprep.subr.mxu0 0.0
    %1881 = vmatpush1.msra.mxu0 0.0
    %1882 = vmatprep.subr.mxu0 0.0
    %1883 = vmatpush1.msra.mxu0 0.0
    %1884 = vmatprep.subr.mxu0 0.0
    %1885 = vmatpush1.msra.mxu0 0.0
    %1886 = vmatprep.subr.mxu0 0.0
    %1887 = vmatpush1.msra.mxu0 0.0
    %1888 = vmatprep.mubr.f32.mxu0 0.0
    %1889 = vmatmul.mubr.f32.gmra.mrb[0].mxu0 %v1819
    %v1890 = vpop.f32.mrb[0].mxu0
    %v1891 = vadd.f32 0.0, %v1890
    %v1892 = vpop.f32.mrb[0].mxu0
    %1893 = vmatprep.mubr.f32.mxu0 0.0
    %1894 = vmatmul.mubr.f32.gmra.mrb[0].mxu0 %v1822
    %v1895 = vpop.f32.mrb[0].mxu0
    %v1896 = vadd.f32 0.0, %v1895
    %v1897 = vpop.f32.mrb[0].mxu0
    %1898 = vdwg.mxu0
    %1901 = vrot.lane.b32.xlu0 %v1891, 8
    %v1902 = vpop.permute.xlu0 %1901
    %1903 = vrot.lane.b32.xlu0 %v1896, 8
    %v1904 = vpop.permute.xlu0 %1903
    %1907 = vst.msk [vmem:[#allocation2] sm:$0xff] %vm582, %v1902
    %1908 = vst.msk [vmem:[#allocation2 + $0x8] sm:$0xff] %vm582, %v1904
    %1909 = vrot.lane.b32.xlu0 %v1483, 112
    %v1910 = vpop.permute.xlu0 %1909
    %1911 = vrot.lane.b32.xlu0 %v1488, 112
    %v1912 = vpop.permute.xlu0 %1911
    %1913 = vrot.lane.b32.xlu0 %v1483, 80
    %v1914 = vpop.permute.xlu0 %1913
    %1915 = vrot.lane.b32.xlu0 %v1488, 80
    %v1916 = vpop.permute.xlu0 %1915
    %v1917 = vsel %vm170, %v1910, 0
    %v1919 = vsel %vm170, %v1912, 0
    %v1921 = vsel %vm170, %v1914, 0
    %v1923 = vsel %vm170, %v1916, 0
    %1925 = vmatprep.subr.mxu0 0.0
    %1926 = vmatpush1.xpose.msra.mxu0 %v1921
    %1927 = vmatprep.subr.mxu0 0.0
    %1928 = vmatpush1.xpose.msra.mxu0 %v1923
    %1929 = vmatprep.subr.mxu0 0.0
    %1930 = vmatpush1.xpose.msra.mxu0 0.0
    %1931 = vmatprep.subr.mxu0 0.0
    %1932 = vmatpush1.xpose.msra.mxu0 0.0
    %1933 = vmatprep.subr.mxu0 0.0
    %1934 = vmatpush1.xpose.msra.mxu0 0.0
    %1935 = vmatprep.subr.mxu0 0.0
    %1936 = vmatpush1.xpose.msra.mxu0 0.0
    %1937 = vmatprep.subr.mxu0 0.0
    %1938 = vmatpush1.xpose.msra.mxu0 0.0
    %1939 = vmatprep.subr.mxu0 0.0
    %1940 = vmatpush1.xpose.msra.mxu0 0.0
    %1941 = vmatprep.subr.mxu0 0.0
    %1942 = vmatpush1.xpose.msra.mxu0 0.0
    %1943 = vmatprep.subr.mxu0 0.0
    %1944 = vmatpush1.xpose.msra.mxu0 0.0
    %1945 = vmatprep.subr.mxu0 0.0
    %1946 = vmatpush1.xpose.msra.mxu0 0.0
    %1947 = vmatprep.subr.mxu0 0.0
    %1948 = vmatpush1.xpose.msra.mxu0 0.0
    %1949 = vmatprep.subr.mxu0 0.0
    %1950 = vmatpush1.xpose.msra.mxu0 0.0
    %1951 = vmatprep.subr.mxu0 0.0
    %1952 = vmatpush1.xpose.msra.mxu0 0.0
    %1953 = vmatprep.subr.mxu0 0.0
    %1954 = vmatpush1.xpose.msra.mxu0 0.0
    %1955 = vmatprep.subr.mxu0 0.0
    %1956 = vmatpush1.xpose.msra.mxu0 0.0
    %1957 = vmatprep.subr.mxu0 0.0
    %1958 = vmatpush1.xpose.msra.mxu0 0.0
    %1959 = vmatprep.subr.mxu0 0.0
    %1960 = vmatpush1.xpose.msra.mxu0 0.0
    %1961 = vmatprep.subr.mxu0 0.0
    %1962 = vmatpush1.xpose.msra.mxu0 0.0
    %1963 = vmatprep.subr.mxu0 0.0
    %1964 = vmatpush1.xpose.msra.mxu0 0.0
    %1965 = vmatprep.subr.mxu0 0.0
    %1966 = vmatpush1.xpose.msra.mxu0 0.0
    %1967 = vmatprep.subr.mxu0 0.0
    %1968 = vmatpush1.xpose.msra.mxu0 0.0
    %1969 = vmatprep.subr.mxu0 0.0
    %1970 = vmatpush1.xpose.msra.mxu0 0.0
    %1971 = vmatprep.subr.mxu0 0.0
    %1972 = vmatpush1.xpose.msra.mxu0 0.0
    %1973 = vmatprep.subr.mxu0 0.0
    %1974 = vmatpush1.xpose.msra.mxu0 0.0
    %1975 = vmatprep.subr.mxu0 0.0
    %1976 = vmatpush1.xpose.msra.mxu0 0.0
    %1977 = vmatprep.subr.mxu0 0.0
    %1978 = vmatpush1.xpose.msra.mxu0 0.0
    %1979 = vmatprep.subr.mxu0 0.0
    %1980 = vmatpush1.xpose.msra.mxu0 0.0
    %1981 = vmatprep.subr.mxu0 0.0
    %1982 = vmatpush1.xpose.msra.mxu0 0.0
    %1983 = vmatprep.subr.mxu0 0.0
    %1984 = vmatpush1.xpose.msra.mxu0 0.0
    %1985 = vmatprep.subr.mxu0 0.0
    %1986 = vmatpush1.xpose.msra.mxu0 0.0
    %1987 = vmatprep.subr.mxu0 0.0
    %1988 = vmatpush1.xpose.msra.mxu0 0.0
    %1989 = vmatprep.mubr.f32.mxu0 0.0
    %1990 = vmatmul.mubr.f32.gmra.mrb[0].mxu0 %v1917
    %v1991 = vpop.f32.mrb[0].mxu0
    %v1992 = vadd.f32 0.0, %v1991
    %v1993 = vpop.f32.mrb[0].mxu0
    %1994 = vmatprep.mubr.f32.mxu0 0.0
    %1995 = vmatmul.mubr.f32.gmra.mrb[0].mxu0 %v1919
    %v1996 = vpop.f32.mrb[0].mxu0
    %v1997 = vadd.f32 0.0, %v1996
    %v1998 = vpop.f32.mrb[0].mxu0
    %1999 = vdwg.mxu0
    %v2000 = vmul.f32 %v1992, 0.35355338
    %v2001 = vmul.f32 %v1997, 0.35355338
    %v2002 = vadd.f32 %v2000, %v68
    %v2003 = vadd.f32 %v2001, %v69
    %v2004 = vsel %vm258, %v2002, -inf
    %2005 = vmax.xlane.f32.xlu0 %v2004
    %v2006 = vpop.xlane.xlu0 %2005
    %v2007 = vsel %vm258, %v2003, -inf
    %2008 = vmax.xlane.f32.xlu0 %v2007
    %v2009 = vpop.xlane.xlu0 %2008
    %v2010 = vsub.f32 %v2002, %v2006
    %v2011 = vsub.f32 %v2003, %v2009
    %v2012 = vmul.f32 %v2010, 1.442695
    %v2013 = vpow.pop %v2012
    %v2014 = vmul.f32 %v2011, 1.442695
    %v2015 = vpow.pop %v2014
    %v2016 = vsel %vm258, %v2013, 0.0
    %2017 = vadd.xlane.f32.xlu0 %v2016
    %v2018 = vpop.xlane.xlu0 %2017
    %v2019 = vsel %vm258, %v2015, 0.0
    %2020 = vadd.xlane.f32.xlu0 %v2019
    %v2021 = vpop.xlane.xlu0 %2020
    %v2022 = vrcp.pop %v2018
    %v2023 = vrcp.pop %v2021
    %v2024 = vmul.f32 %v2013, %v2022
    %v2025 = vmul.f32 %v2015, %v2023
    %2026 = vrot.lane.b32.xlu0 %v1483, 48
    %v2027 = vpop.permute.xlu0 %2026
    %2028 = vrot.lane.b32.xlu0 %v1488, 48
    %v2029 = vpop.permute.xlu0 %2028
    %v2033 = vsel %vm258, %v2024, 0
    %v2036 = vsel %vm258, %v2025, 0
    %2038 = vmatprep.subr.mxu0 0.0
    %2039 = vmatpush1.msra.mxu0 %v2027
    %2040 = vmatprep.subr.mxu0 0.0
    %2041 = vmatpush1.msra.mxu0 %v2029
    %2042 = vmatprep.subr.mxu0 0.0
    %2043 = vmatpush1.msra.mxu0 0.0
    %2044 = vmatprep.subr.mxu0 0.0
    %2045 = vmatpush1.msra.mxu0 0.0
    %2046 = vmatprep.subr.mxu0 0.0
    %2047 = vmatpush1.msra.mxu0 0.0
    %2048 = vmatprep.subr.mxu0 0.0
    %2049 = vmatpush1.msra.mxu0 0.0
    %2050 = vmatprep.subr.mxu0 0.0
    %2051 = vmatpush1.msra.mxu0 0.0
    %2052 = vmatprep.subr.mxu0 0.0
    %2053 = vmatpush1.msra.mxu0 0.0
    %2054 = vmatprep.subr.mxu0 0.0
    %2055 = vmatpush1.msra.mxu0 0.0
    %2056 = vmatprep.subr.mxu0 0.0
    %2057 = vmatpush1.msra.mxu0 0.0
    %2058 = vmatprep.subr.mxu0 0.0
    %2059 = vmatpush1.msra.mxu0 0.0
    %2060 = vmatprep.subr.mxu0 0.0
    %2061 = vmatpush1.msra.mxu0 0.0
    %2062 = vmatprep.subr.mxu0 0.0
    %2063 = vmatpush1.msra.mxu0 0.0
    %2064 = vmatprep.subr.mxu0 0.0
    %2065 = vmatpush1.msra.mxu0 0.0
    %2066 = vmatprep.subr.mxu0 0.0
    %2067 = vmatpush1.msra.mxu0 0.0
    %2068 = vmatprep.subr.mxu0 0.0
    %2069 = vmatpush1.msra.mxu0 0.0
    %2070 = vmatprep.subr.mxu0 0.0
    %2071 = vmatpush1.msra.mxu0 0.0
    %2072 = vmatprep.subr.mxu0 0.0
    %2073 = vmatpush1.msra.mxu0 0.0
    %2074 = vmatprep.subr.mxu0 0.0
    %2075 = vmatpush1.msra.mxu0 0.0
    %2076 = vmatprep.subr.mxu0 0.0
    %2077 = vmatpush1.msra.mxu0 0.0
    %2078 = vmatprep.subr.mxu0 0.0
    %2079 = vmatpush1.msra.mxu0 0.0
    %2080 = vmatprep.subr.mxu0 0.0
    %2081 = vmatpush1.msra.mxu0 0.0
    %2082 = vmatprep.subr.mxu0 0.0
    %2083 = vmatpush1.msra.mxu0 0.0
    %2084 = vmatprep.subr.mxu0 0.0
    %2085 = vmatpush1.msra.mxu0 0.0
    %2086 = vmatprep.subr.mxu0 0.0
    %2087 = vmatpush1.msra.mxu0 0.0
    %2088 = vmatprep.subr.mxu0 0.0
    %2089 = vmatpush1.msra.mxu0 0.0
    %2090 = vmatprep.subr.mxu0 0.0
    %2091 = vmatpush1.msra.mxu0 0.0
    %2092 = vmatprep.subr.mxu0 0.0
    %2093 = vmatpush1.msra.mxu0 0.0
    %2094 = vmatprep.subr.mxu0 0.0
    %2095 = vmatpush1.msra.mxu0 0.0
    %2096 = vmatprep.subr.mxu0 0.0
    %2097 = vmatpush1.msra.mxu0 0.0
    %2098 = vmatprep.subr.mxu0 0.0
    %2099 = vmatpush1.msra.mxu0 0.0
    %2100 = vmatprep.subr.mxu0 0.0
    %2101 = vmatpush1.msra.mxu0 0.0
    %2102 = vmatprep.mubr.f32.mxu0 0.0
    %2103 = vmatmul.mubr.f32.gmra.mrb[0].mxu0 %v2033
    %v2104 = vpop.f32.mrb[0].mxu0
    %v2105 = vadd.f32 0.0, %v2104
    %v2106 = vpop.f32.mrb[0].mxu0
    %2107 = vmatprep.mubr.f32.mxu0 0.0
    %2108 = vmatmul.mubr.f32.gmra.mrb[0].mxu0 %v2036
    %v2109 = vpop.f32.mrb[0].mxu0
    %v2110 = vadd.f32 0.0, %v2109
    %v2111 = vpop.f32.mrb[0].mxu0
    %2112 = vdwg.mxu0
    %2115 = vrot.lane.b32.xlu0 %v2105, 16
    %v2116 = vpop.permute.xlu0 %2115
    %2117 = vrot.lane.b32.xlu0 %v2110, 16
    %v2118 = vpop.permute.xlu0 %2117
    %2121 = vst.msk [vmem:[#allocation2] sm:$0xff] %vm797, %v2116
    %2122 = vst.msk [vmem:[#allocation2 + $0x8] sm:$0xff] %vm797, %v2118
    %2123 = vrot.lane.b32.xlu0 %v1483, 104
    %v2124 = vpop.permute.xlu0 %2123
    %2125 = vrot.lane.b32.xlu0 %v1488, 104
    %v2126 = vpop.permute.xlu0 %2125
    %2127 = vrot.lane.b32.xlu0 %v1483, 72
    %v2128 = vpop.permute.xlu0 %2127
    %2129 = vrot.lane.b32.xlu0 %v1488, 72
    %v2130 = vpop.permute.xlu0 %2129
    %v2131 = vsel %vm170, %v2124, 0
    %v2133 = vsel %vm170, %v2126, 0
    %v2135 = vsel %vm170, %v2128, 0
    %v2137 = vsel %vm170, %v2130, 0
    %2139 = vmatprep.subr.mxu0 0.0
    %2140 = vmatpush1.xpose.msra.mxu0 %v2135
    %2141 = vmatprep.subr.mxu0 0.0
    %2142 = vmatpush1.xpose.msra.mxu0 %v2137
    %2143 = vmatprep.subr.mxu0 0.0
    %2144 = vmatpush1.xpose.msra.mxu0 0.0
    %2145 = vmatprep.subr.mxu0 0.0
    %2146 = vmatpush1.xpose.msra.mxu0 0.0
    %2147 = vmatprep.subr.mxu0 0.0
    %2148 = vmatpush1.xpose.msra.mxu0 0.0
    %2149 = vmatprep.subr.mxu0 0.0
    %2150 = vmatpush1.xpose.msra.mxu0 0.0
    %2151 = vmatprep.subr.mxu0 0.0
    %2152 = vmatpush1.xpose.msra.mxu0 0.0
    %2153 = vmatprep.subr.mxu0 0.0
    %2154 = vmatpush1.xpose.msra.mxu0 0.0
    %2155 = vmatprep.subr.mxu0 0.0
    %2156 = vmatpush1.xpose.msra.mxu0 0.0
    %2157 = vmatprep.subr.mxu0 0.0
    %2158 = vmatpush1.xpose.msra.mxu0 0.0
    %2159 = vmatprep.subr.mxu0 0.0
    %2160 = vmatpush1.xpose.msra.mxu0 0.0
    %2161 = vmatprep.subr.mxu0 0.0
    %2162 = vmatpush1.xpose.msra.mxu0 0.0
    %2163 = vmatprep.subr.mxu0 0.0
    %2164 = vmatpush1.xpose.msra.mxu0 0.0
    %2165 = vmatprep.subr.mxu0 0.0
    %2166 = vmatpush1.xpose.msra.mxu0 0.0
    %2167 = vmatprep.subr.mxu0 0.0
    %2168 = vmatpush1.xpose.msra.mxu0 0.0
    %2169 = vmatprep.subr.mxu0 0.0
    %2170 = vmatpush1.xpose.msra.mxu0 0.0
    %2171 = vmatprep.subr.mxu0 0.0
    %2172 = vmatpush1.xpose.msra.mxu0 0.0
    %2173 = vmatprep.subr.mxu0 0.0
    %2174 = vmatpush1.xpose.msra.mxu0 0.0
    %2175 = vmatprep.subr.mxu0 0.0
    %2176 = vmatpush1.xpose.msra.mxu0 0.0
    %2177 = vmatprep.subr.mxu0 0.0
    %2178 = vmatpush1.xpose.msra.mxu0 0.0
    %2179 = vmatprep.subr.mxu0 0.0
    %2180 = vmatpush1.xpose.msra.mxu0 0.0
    %2181 = vmatprep.subr.mxu0 0.0
    %2182 = vmatpush1.xpose.msra.mxu0 0.0
    %2183 = vmatprep.subr.mxu0 0.0
    %2184 = vmatpush1.xpose.msra.mxu0 0.0
    %2185 = vmatprep.subr.mxu0 0.0
    %2186 = vmatpush1.xpose.msra.mxu0 0.0
    %2187 = vmatprep.subr.mxu0 0.0
    %2188 = vmatpush1.xpose.msra.mxu0 0.0
    %2189 = vmatprep.subr.mxu0 0.0
    %2190 = vmatpush1.xpose.msra.mxu0 0.0
    %2191 = vmatprep.subr.mxu0 0.0
    %2192 = vmatpush1.xpose.msra.mxu0 0.0
    %2193 = vmatprep.subr.mxu0 0.0
    %2194 = vmatpush1.xpose.msra.mxu0 0.0
    %2195 = vmatprep.subr.mxu0 0.0
    %2196 = vmatpush1.xpose.msra.mxu0 0.0
    %2197 = vmatprep.subr.mxu0 0.0
    %2198 = vmatpush1.xpose.msra.mxu0 0.0
    %2199 = vmatprep.subr.mxu0 0.0
    %2200 = vmatpush1.xpose.msra.mxu0 0.0
    %2201 = vmatprep.subr.mxu0 0.0
    %2202 = vmatpush1.xpose.msra.mxu0 0.0
    %2203 = vmatprep.mubr.f32.mxu0 0.0
    %2204 = vmatmul.mubr.f32.gmra.mrb[0].mxu0 %v2131
    %v2205 = vpop.f32.mrb[0].mxu0
    %v2206 = vadd.f32 0.0, %v2205
    %v2207 = vpop.f32.mrb[0].mxu0
    %2208 = vmatprep.mubr.f32.mxu0 0.0
    %2209 = vmatmul.mubr.f32.gmra.mrb[0].mxu0 %v2133
    %v2210 = vpop.f32.mrb[0].mxu0
    %v2211 = vadd.f32 0.0, %v2210
    %v2212 = vpop.f32.mrb[0].mxu0
    %2213 = vdwg.mxu0
    %v2214 = vmul.f32 %v2206, 0.35355338
    %v2215 = vmul.f32 %v2211, 0.35355338
    %v2216 = vadd.f32 %v2214, %v68
    %v2217 = vadd.f32 %v2215, %v69
    %v2218 = vsel %vm258, %v2216, -inf
    %2219 = vmax.xlane.f32.xlu0 %v2218
    %v2220 = vpop.xlane.xlu0 %2219
    %v2221 = vsel %vm258, %v2217, -inf
    %2222 = vmax.xlane.f32.xlu0 %v2221
    %v2223 = vpop.xlane.xlu0 %2222
    %v2224 = vsub.f32 %v2216, %v2220
    %v2225 = vsub.f32 %v2217, %v2223
    %v2226 = vmul.f32 %v2224, 1.442695
    %v2227 = vpow.pop %v2226
    %v2228 = vmul.f32 %v2225, 1.442695
    %v2229 = vpow.pop %v2228
    %v2230 = vsel %vm258, %v2227, 0.0
    %2231 = vadd.xlane.f32.xlu0 %v2230
    %v2232 = vpop.xlane.xlu0 %2231
    %v2233 = vsel %vm258, %v2229, 0.0
    %2234 = vadd.xlane.f32.xlu0 %v2233
    %v2235 = vpop.xlane.xlu0 %2234
    %v2236 = vrcp.pop %v2232
    %v2237 = vrcp.pop %v2235
    %v2238 = vmul.f32 %v2227, %v2236
    %v2239 = vmul.f32 %v2229, %v2237
    %2240 = vrot.lane.b32.xlu0 %v1483, 40
    %v2241 = vpop.permute.xlu0 %2240
    %2242 = vrot.lane.b32.xlu0 %v1488, 40
    %v2243 = vpop.permute.xlu0 %2242
    %v2247 = vsel %vm258, %v2238, 0
    %v2250 = vsel %vm258, %v2239, 0
    %2252 = vmatprep.subr.mxu0 0.0
    %2253 = vmatpush1.msra.mxu0 %v2241
    %2254 = vmatprep.subr.mxu0 0.0
    %2255 = vmatpush1.msra.mxu0 %v2243
    %2256 = vmatprep.subr.mxu0 0.0
    %2257 = vmatpush1.msra.mxu0 0.0
    %2258 = vmatprep.subr.mxu0 0.0
    %2259 = vmatpush1.msra.mxu0 0.0
    %2260 = vmatprep.subr.mxu0 0.0
    %2261 = vmatpush1.msra.mxu0 0.0
    %2262 = vmatprep.subr.mxu0 0.0
    %2263 = vmatpush1.msra.mxu0 0.0
    %2264 = vmatprep.subr.mxu0 0.0
    %2265 = vmatpush1.msra.mxu0 0.0
    %2266 = vmatprep.subr.mxu0 0.0
    %2267 = vmatpush1.msra.mxu0 0.0
    %2268 = vmatprep.subr.mxu0 0.0
    %2269 = vmatpush1.msra.mxu0 0.0
    %2270 = vmatprep.subr.mxu0 0.0
    %2271 = vmatpush1.msra.mxu0 0.0
    %2272 = vmatprep.subr.mxu0 0.0
    %2273 = vmatpush1.msra.mxu0 0.0
    %2274 = vmatprep.subr.mxu0 0.0
    %2275 = vmatpush1.msra.mxu0 0.0
    %2276 = vmatprep.subr.mxu0 0.0
    %2277 = vmatpush1.msra.mxu0 0.0
    %2278 = vmatprep.subr.mxu0 0.0
    %2279 = vmatpush1.msra.mxu0 0.0
    %2280 = vmatprep.subr.mxu0 0.0
    %2281 = vmatpush1.msra.mxu0 0.0
    %2282 = vmatprep.subr.mxu0 0.0
    %2283 = vmatpush1.msra.mxu0 0.0
    %2284 = vmatprep.subr.mxu0 0.0
    %2285 = vmatpush1.msra.mxu0 0.0
    %2286 = vmatprep.subr.mxu0 0.0
    %2287 = vmatpush1.msra.mxu0 0.0
    %2288 = vmatprep.subr.mxu0 0.0
    %2289 = vmatpush1.msra.mxu0 0.0
    %2290 = vmatprep.subr.mxu0 0.0
    %2291 = vmatpush1.msra.mxu0 0.0
    %2292 = vmatprep.subr.mxu0 0.0
    %2293 = vmatpush1.msra.mxu0 0.0
    %2294 = vmatprep.subr.mxu0 0.0
    %2295 = vmatpush1.msra.mxu0 0.0
    %2296 = vmatprep.subr.mxu0 0.0
    %2297 = vmatpush1.msra.mxu0 0.0
    %2298 = vmatprep.subr.mxu0 0.0
    %2299 = vmatpush1.msra.mxu0 0.0
    %2300 = vmatprep.subr.mxu0 0.0
    %2301 = vmatpush1.msra.mxu0 0.0
    %2302 = vmatprep.subr.mxu0 0.0
    %2303 = vmatpush1.msra.mxu0 0.0
    %2304 = vmatprep.subr.mxu0 0.0
    %2305 = vmatpush1.msra.mxu0 0.0
    %2306 = vmatprep.subr.mxu0 0.0
    %2307 = vmatpush1.msra.mxu0 0.0
    %2308 = vmatprep.subr.mxu0 0.0
    %2309 = vmatpush1.msra.mxu0 0.0
    %2310 = vmatprep.subr.mxu0 0.0
    %2311 = vmatpush1.msra.mxu0 0.0
    %2312 = vmatprep.subr.mxu0 0.0
    %2313 = vmatpush1.msra.mxu0 0.0
    %2314 = vmatprep.subr.mxu0 0.0
    %2315 = vmatpush1.msra.mxu0 0.0
    %2316 = vmatprep.mubr.f32.mxu0 0.0
    %2317 = vmatmul.mubr.f32.gmra.mrb[0].mxu0 %v2247
    %v2318 = vpop.f32.mrb[0].mxu0
    %v2319 = vadd.f32 0.0, %v2318
    %v2320 = vpop.f32.mrb[0].mxu0
    %2321 = vmatprep.mubr.f32.mxu0 0.0
    %2322 = vmatmul.mubr.f32.gmra.mrb[0].mxu0 %v2250
    %v2323 = vpop.f32.mrb[0].mxu0
    %v2324 = vadd.f32 0.0, %v2323
    %v2325 = vpop.f32.mrb[0].mxu0
    %2326 = vdwg.mxu0
    %2329 = vrot.lane.b32.xlu0 %v2319, 24
    %v2330 = vpop.permute.xlu0 %2329
    %2331 = vrot.lane.b32.xlu0 %v2324, 24
    %v2332 = vpop.permute.xlu0 %2331
    %2335 = vst.msk [vmem:[#allocation2] sm:$0xff] %vm1012, %v2330
    %2336 = vst.msk [vmem:[#allocation2 + $0x8] sm:$0xff] %vm1012, %v2332
    %v2337 = vld [vmem:[#allocation2] sm:$0xff]
    %v2338 = vld [vmem:[#allocation2 + $0x8] sm:$0xff]
    %v2339 = vlaneseq
    %v2340 = vshrl.u32 %v2339, 7
    %v2341 = vsub.s32 1, %v2340
    %v2342 = vrot.slane %v1405, %v2341
    %2347 = vrot.lane.b32.xlu0 %v1396, 32
    %v2348 = vpop.permute.xlu0 %2347
    %2349 = vrot.lane.b32.xlu0 %v1398, 32
    %v2350 = vpop.permute.xlu0 %2349
    %2351 = vrot.lane.b32.xlu0 %v1400, 32
    %v2352 = vpop.permute.xlu0 %2351
    %2353 = vrot.lane.b32.xlu0 %v1402, 32
    %v2354 = vpop.permute.xlu0 %2353
    %v2360 = vsel %vm28, %v2337, 0
    %v2363 = vsel %vm28, %v2338, 0
    %2365 = vmatprep.subr.mxu0 0.0
    %2366 = vmatpush1.msra.mxu0 %v2348
    %2367 = vmatprep.subr.mxu0 0.0
    %2368 = vmatpush1.msra.mxu0 %v2350
    %2369 = vmatprep.subr.mxu0 0.0
    %2370 = vmatpush1.msra.mxu0 %v2352
    %2371 = vmatprep.subr.mxu0 0.0
    %2372 = vmatpush1.msra.mxu0 %v2354
    %2373 = vmatprep.subr.mxu0 0.0
    %2374 = vmatpush1.msra.mxu0 0.0
    %2375 = vmatprep.subr.mxu0 0.0
    %2376 = vmatpush1.msra.mxu0 0.0
    %2377 = vmatprep.subr.mxu0 0.0
    %2378 = vmatpush1.msra.mxu0 0.0
    %2379 = vmatprep.subr.mxu0 0.0
    %2380 = vmatpush1.msra.mxu0 0.0
    %2381 = vmatprep.subr.mxu0 0.0
    %2382 = vmatpush1.msra.mxu0 0.0
    %2383 = vmatprep.subr.mxu0 0.0
    %2384 = vmatpush1.msra.mxu0 0.0
    %2385 = vmatprep.subr.mxu0 0.0
    %2386 = vmatpush1.msra.mxu0 0.0
    %2387 = vmatprep.subr.mxu0 0.0
    %2388 = vmatpush1.msra.mxu0 0.0
    %2389 = vmatprep.subr.mxu0 0.0
    %2390 = vmatpush1.msra.mxu0 0.0
    %2391 = vmatprep.subr.mxu0 0.0
    %2392 = vmatpush1.msra.mxu0 0.0
    %2393 = vmatprep.subr.mxu0 0.0
    %2394 = vmatpush1.msra.mxu0 0.0
    %2395 = vmatprep.subr.mxu0 0.0
    %2396 = vmatpush1.msra.mxu0 0.0
    %2397 = vmatprep.subr.mxu0 0.0
    %2398 = vmatpush1.msra.mxu0 0.0
    %2399 = vmatprep.subr.mxu0 0.0
    %2400 = vmatpush1.msra.mxu0 0.0
    %2401 = vmatprep.subr.mxu0 0.0
    %2402 = vmatpush1.msra.mxu0 0.0
    %2403 = vmatprep.subr.mxu0 0.0
    %2404 = vmatpush1.msra.mxu0 0.0
    %2405 = vmatprep.subr.mxu0 0.0
    %2406 = vmatpush1.msra.mxu0 0.0
    %2407 = vmatprep.subr.mxu0 0.0
    %2408 = vmatpush1.msra.mxu0 0.0
    %2409 = vmatprep.subr.mxu0 0.0
    %2410 = vmatpush1.msra.mxu0 0.0
    %2411 = vmatprep.subr.mxu0 0.0
    %2412 = vmatpush1.msra.mxu0 0.0
    %2413 = vmatprep.subr.mxu0 0.0
    %2414 = vmatpush1.msra.mxu0 0.0
    %2415 = vmatprep.subr.mxu0 0.0
    %2416 = vmatpush1.msra.mxu0 0.0
    %2417 = vmatprep.subr.mxu0 0.0
    %2418 = vmatpush1.msra.mxu0 0.0
    %2419 = vmatprep.subr.mxu0 0.0
    %2420 = vmatpush1.msra.mxu0 0.0
    %2421 = vmatprep.subr.mxu0 0.0
    %2422 = vmatpush1.msra.mxu0 0.0
    %2423 = vmatprep.subr.mxu0 0.0
    %2424 = vmatpush1.msra.mxu0 0.0
    %2425 = vmatprep.subr.mxu0 0.0
    %2426 = vmatpush1.msra.mxu0 0.0
    %2427 = vmatprep.subr.mxu0 0.0
    %2428 = vmatpush1.msra.mxu0 0.0
    %2429 = vmatprep.mubr.f32.mxu0 0.0
    %2430 = vmatmul.mubr.f32.gmra.mrb[0].mxu0 %v2360
    %v2431 = vpop.f32.mrb[0].mxu0
    %v2432 = vadd.f32 %v2342, %v2431
    %v2433 = vpop.f32.mrb[0].mxu0
    %2434 = vmatprep.mubr.f32.mxu0 0.0
    %2435 = vmatmul.mubr.f32.gmra.mrb[0].mxu0 %v2363
    %v2436 = vpop.f32.mrb[0].mxu0
    %v2437 = vadd.f32 %v2342, %v2436
    %v2438 = vpop.f32.mrb[0].mxu0
    %2439 = vdwg.mxu0
    %v2440 = vadd.f32 %v1393, %v2432
    %v2441 = vadd.f32 %v1394, %v2437
    %v2442 = vsel %vm28, %v2440, 0.0
    %2443 = vadd.xlane.f32.xlu0 %v2442
    %v2444 = vpop.xlane.xlu0 %2443
    %v2445 = vsel %vm28, %v2441, 0.0
    %2446 = vadd.xlane.f32.xlu0 %v2445
    %v2447 = vpop.xlane.xlu0 %2446
    %v2448 = vmul.f32 %v2444, %v35
    %v2449 = vmul.f32 %v2447, %v35
    %v2450 = vsub.f32 %v2440, %v2448
    %v2451 = vsub.f32 %v2441, %v2449
    %v2452 = vmul.f32 %v2450, %v2450
    %v2453 = vmul.f32 %v2451, %v2451
    %v2454 = vsel %vm28, %v2452, 0.0
    %2455 = vadd.xlane.f32.xlu0 %v2454
    %v2456 = vpop.xlane.xlu0 %2455
    %v2457 = vsel %vm28, %v2453, 0.0
    %2458 = vadd.xlane.f32.xlu0 %v2457
    %v2459 = vpop.xlane.xlu0 %2458
    %v2460 = vmul.f32 %v2456, %v35
    %v2461 = vmul.f32 %v2459, %v35
    %v2462 = vadd.f32 %v2460, 1e-12
    %v2463 = vadd.f32 %v2461, 1e-12
    %v2464 = vrsqrt.pop %v2462
    %v2465 = vrsqrt.pop %v2463
    %v2466 = vmul.f32 %v2450, %v2464
    %v2467 = vmul.f32 %v2451, %v2465
    %v2468 = vlaneseq
    %v2469 = vshrl.u32 %v2468, 7
    %v2470 = vsub.s32 2, %v2469
    %v2471 = vrot.slane %v1405, %v2470
    %v2472 = vmul.f32 %v2466, %v2471
    %v2473 = vmul.f32 %v2467, %v2471
    %v2474 = vlaneseq
    %v2475 = vshrl.u32 %v2474, 7
    %v2476 = vsub.s32 3, %v2475
    %v2477 = vrot.slane %v1405, %v2476
    %v2478 = vadd.f32 %v2472, %v2477
    %v2479 = vadd.f32 %v2473, %v2477
    %v2480 = vlaneseq
    %v2481 = vshrl.u32 %v2480, 7
    %v2482 = vsub.s32 4, %v2481
    %v2483 = vrot.slane %v1405, %v2482
    %v2485 = vsel %vm28, %v2478, 0
    %v2488 = vsel %vm28, %v2479, 0
    %2490 = vmatprep.subr.mxu0 0.0
    %2491 = vmatpush1.msra.mxu0 %v1397
    %2492 = vmatprep.subr.mxu0 0.0
    %2493 = vmatpush1.msra.mxu0 %v1399
    %2494 = vmatprep.subr.mxu0 0.0
    %2495 = vmatpush1.msra.mxu0 %v1401
    %2496 = vmatprep.subr.mxu0 0.0
    %2497 = vmatpush1.msra.mxu0 %v1403
    %2498 = vmatprep.subr.mxu0 0.0
    %2499 = vmatpush1.msra.mxu0 0.0
    %2500 = vmatprep.subr.mxu0 0.0
    %2501 = vmatpush1.msra.mxu0 0.0
    %2502 = vmatprep.subr.mxu0 0.0
    %2503 = vmatpush1.msra.mxu0 0.0
    %2504 = vmatprep.subr.mxu0 0.0
    %2505 = vmatpush1.msra.mxu0 0.0
    %2506 = vmatprep.subr.mxu0 0.0
    %2507 = vmatpush1.msra.mxu0 0.0
    %2508 = vmatprep.subr.mxu0 0.0
    %2509 = vmatpush1.msra.mxu0 0.0
    %2510 = vmatprep.subr.mxu0 0.0
    %2511 = vmatpush1.msra.mxu0 0.0
    %2512 = vmatprep.subr.mxu0 0.0
    %2513 = vmatpush1.msra.mxu0 0.0
    %2514 = vmatprep.subr.mxu0 0.0
    %2515 = vmatpush1.msra.mxu0 0.0
    %2516 = vmatprep.subr.mxu0 0.0
    %2517 = vmatpush1.msra.mxu0 0.0
    %2518 = vmatprep.subr.mxu0 0.0
    %2519 = vmatpush1.msra.mxu0 0.0
    %2520 = vmatprep.subr.mxu0 0.0
    %2521 = vmatpush1.msra.mxu0 0.0
    %2522 = vmatprep.subr.mxu0 0.0
    %2523 = vmatpush1.msra.mxu0 0.0
    %2524 = vmatprep.subr.mxu0 0.0
    %2525 = vmatpush1.msra.mxu0 0.0
    %2526 = vmatprep.subr.mxu0 0.0
    %2527 = vmatpush1.msra.mxu0 0.0
    %2528 = vmatprep.subr.mxu0 0.0
    %2529 = vmatpush1.msra.mxu0 0.0
    %2530 = vmatprep.subr.mxu0 0.0
    %2531 = vmatpush1.msra.mxu0 0.0
    %2532 = vmatprep.subr.mxu0 0.0
    %2533 = vmatpush1.msra.mxu0 0.0
    %2534 = vmatprep.subr.mxu0 0.0
    %2535 = vmatpush1.msra.mxu0 0.0
    %2536 = vmatprep.subr.mxu0 0.0
    %2537 = vmatpush1.msra.mxu0 0.0
    %2538 = vmatprep.subr.mxu0 0.0
    %2539 = vmatpush1.msra.mxu0 0.0
    %2540 = vmatprep.subr.mxu0 0.0
    %2541 = vmatpush1.msra.mxu0 0.0
    %2542 = vmatprep.subr.mxu0 0.0
    %2543 = vmatpush1.msra.mxu0 0.0
    %2544 = vmatprep.subr.mxu0 0.0
    %2545 = vmatpush1.msra.mxu0 0.0
    %2546 = vmatprep.subr.mxu0 0.0
    %2547 = vmatpush1.msra.mxu0 0.0
    %2548 = vmatprep.subr.mxu0 0.0
    %2549 = vmatpush1.msra.mxu0 0.0
    %2550 = vmatprep.subr.mxu0 0.0
    %2551 = vmatpush1.msra.mxu0 0.0
    %2552 = vmatprep.subr.mxu0 0.0
    %2553 = vmatpush1.msra.mxu0 0.0
    %2554 = vmatprep.mubr.f32.mxu0 0.0
    %2555 = vmatmul.mubr.f32.gmra.mrb[0].mxu0 %v2485
    %v2556 = vpop.f32.mrb[0].mxu0
    %v2557 = vadd.f32 %v2483, %v2556
    %v2558 = vpop.f32.mrb[0].mxu0
    %2559 = vmatprep.mubr.f32.mxu0 0.0
    %2560 = vmatmul.mubr.f32.gmra.mrb[0].mxu0 %v2488
    %v2561 = vpop.f32.mrb[0].mxu0
    %v2562 = vadd.f32 %v2483, %v2561
    %v2563 = vpop.f32.mrb[0].mxu0
    %2564 = vdwg.mxu0
    %v2565 = vmul.f32 %v2557, 0.5
    %v2566 = vmul.f32 %v2562, 0.5
    %v2567 = vmul.f32 %v2557, 0.044715
    %v2568 = vmul.f32 %v2562, 0.044715
    %v2569 = vmul.f32 %v2567, %v2557
    %v2570 = vmul.f32 %v2568, %v2562
    %v2571 = vmul.f32 %v2569, %v2557
    %v2572 = vmul.f32 %v2570, %v2562
    %v2573 = vadd.f32 %v2557, %v2571
    %v2574 = vadd.f32 %v2562, %v2572
    %v2575 = vmul.f32 %v2573, 0.7978846
    %v2576 = vmul.f32 %v2574, 0.7978846
    %v2577 = vtanh.pop %v2575
    %v2578 = vtanh.pop %v2576
    %v2579 = vadd.f32 %v2577, 1.0
    %v2580 = vadd.f32 %v2578, 1.0
    %v2581 = vmul.f32 %v2565, %v2579
    %v2582 = vmul.f32 %v2566, %v2580
    %s2583 = scalar_lea.vmem %s4, 64
    %v2584 = vld [vmem:[%s2583] sm:$0xff]
    %v2585 = vld [vmem:[%s2583 + $0x8] sm:$0xff]
    %v2586 = vld [vmem:[%s2583 + $0x10] sm:$0xff]
    %v2587 = vld [vmem:[%s2583 + $0x18] sm:$0xff]
    %v2588 = vld [vmem:[%s2583 + $0x20] sm:$0xff]
    %v2589 = vld [vmem:[%s2583 + $0x28] sm:$0xff]
    %v2590 = vld [vmem:[%s2583 + $0x30] sm:$0xff]
    %v2591 = vld [vmem:[%s2583 + $0x38] sm:$0xff]
    %v2592 = vlaneseq
    %v2593 = vshrl.u32 %v2592, 7
    %v2594 = vsub.s32 5, %v2593
    %v2595 = vrot.slane %v1405, %v2594
    %v2597 = vsel %vm1273, %v2581, 0
    %v2600 = vsel %vm1273, %v2582, 0
    %2602 = vmatprep.subr.mxu0 0.0
    %2603 = vmatpush1.msra.mxu0 %v2584
    %2604 = vmatprep.subr.mxu0 0.0
    %2605 = vmatpush1.msra.mxu0 %v2585
    %2606 = vmatprep.subr.mxu0 0.0
    %2607 = vmatpush1.msra.mxu0 %v2586
    %2608 = vmatprep.subr.mxu0 0.0
    %2609 = vmatpush1.msra.mxu0 %v2587
    %2610 = vmatprep.subr.mxu0 0.0
    %2611 = vmatpush1.msra.mxu0 %v2588
    %2612 = vmatprep.subr.mxu0 0.0
    %2613 = vmatpush1.msra.mxu0 %v2589
    %2614 = vmatprep.subr.mxu0 0.0
    %2615 = vmatpush1.msra.mxu0 %v2590
    %2616 = vmatprep.subr.mxu0 0.0
    %2617 = vmatpush1.msra.mxu0 %v2591
    %2618 = vmatprep.subr.mxu0 0.0
    %2619 = vmatpush1.msra.mxu0 0.0
    %2620 = vmatprep.subr.mxu0 0.0
    %2621 = vmatpush1.msra.mxu0 0.0
    %2622 = vmatprep.subr.mxu0 0.0
    %2623 = vmatpush1.msra.mxu0 0.0
    %2624 = vmatprep.subr.mxu0 0.0
    %2625 = vmatpush1.msra.mxu0 0.0
    %2626 = vmatprep.subr.mxu0 0.0
    %2627 = vmatpush1.msra.mxu0 0.0
    %2628 = vmatprep.subr.mxu0 0.0
    %2629 = vmatpush1.msra.mxu0 0.0
    %2630 = vmatprep.subr.mxu0 0.0
    %2631 = vmatpush1.msra.mxu0 0.0
    %2632 = vmatprep.subr.mxu0 0.0
    %2633 = vmatpush1.msra.mxu0 0.0
    %2634 = vmatprep.subr.mxu0 0.0
    %2635 = vmatpush1.msra.mxu0 0.0
    %2636 = vmatprep.subr.mxu0 0.0
    %2637 = vmatpush1.msra.mxu0 0.0
    %2638 = vmatprep.subr.mxu0 0.0
    %2639 = vmatpush1.msra.mxu0 0.0
    %2640 = vmatprep.subr.mxu0 0.0
    %2641 = vmatpush1.msra.mxu0 0.0
    %2642 = vmatprep.subr.mxu0 0.0
    %2643 = vmatpush1.msra.mxu0 0.0
    %2644 = vmatprep.subr.mxu0 0.0
    %2645 = vmatpush1.msra.mxu0 0.0
    %2646 = vmatprep.subr.mxu0 0.0
    %2647 = vmatpush1.msra.mxu0 0.0
    %2648 = vmatprep.subr.mxu0 0.0
    %2649 = vmatpush1.msra.mxu0 0.0
    %2650 = vmatprep.subr.mxu0 0.0
    %2651 = vmatpush1.msra.mxu0 0.0
    %2652 = vmatprep.subr.mxu0 0.0
    %2653 = vmatpush1.msra.mxu0 0.0
    %2654 = vmatprep.subr.mxu0 0.0
    %2655 = vmatpush1.msra.mxu0 0.0
    %2656 = vmatprep.subr.mxu0 0.0
    %2657 = vmatpush1.msra.mxu0 0.0
    %2658 = vmatprep.subr.mxu0 0.0
    %2659 = vmatpush1.msra.mxu0 0.0
    %2660 = vmatprep.subr.mxu0 0.0
    %2661 = vmatpush1.msra.mxu0 0.0
    %2662 = vmatprep.subr.mxu0 0.0
    %2663 = vmatpush1.msra.mxu0 0.0
    %2664 = vmatprep.subr.mxu0 0.0
    %2665 = vmatpush1.msra.mxu0 0.0
    %2666 = vmatprep.mubr.f32.mxu0 0.0
    %2667 = vmatmul.mubr.f32.gmra.mrb[0].mxu0 %v2597
    %v2668 = vpop.f32.mrb[0].mxu0
    %v2669 = vadd.f32 %v2595, %v2668
    %v2670 = vpop.f32.mrb[0].mxu0
    %2671 = vmatprep.mubr.f32.mxu0 0.0
    %2672 = vmatmul.mubr.f32.gmra.mrb[0].mxu0 %v2600
    %v2673 = vpop.f32.mrb[0].mxu0
    %v2674 = vadd.f32 %v2595, %v2673
    %v2675 = vpop.f32.mrb[0].mxu0
    %2676 = vdwg.mxu0
    %v2677 = vadd.f32 %v2478, %v2669
    %v2678 = vadd.f32 %v2479, %v2674
    %v2679 = vsel %vm28, %v2677, 0.0
    %2680 = vadd.xlane.f32.xlu0 %v2679
    %v2681 = vpop.xlane.xlu0 %2680
    %v2682 = vsel %vm28, %v2678, 0.0
    %2683 = vadd.xlane.f32.xlu0 %v2682
    %v2684 = vpop.xlane.xlu0 %2683
    %v2685 = vmul.f32 %v2681, %v35
    %v2686 = vmul.f32 %v2684, %v35
    %v2687 = vsub.f32 %v2677, %v2685
    %v2688 = vsub.f32 %v2678, %v2686
    %v2689 = vmul.f32 %v2687, %v2687
    %v2690 = vmul.f32 %v2688, %v2688
    %v2691 = vsel %vm28, %v2689, 0.0
    %2692 = vadd.xlane.f32.xlu0 %v2691
    %v2693 = vpop.xlane.xlu0 %2692
    %v2694 = vsel %vm28, %v2690, 0.0
    %2695 = vadd.xlane.f32.xlu0 %v2694
    %v2696 = vpop.xlane.xlu0 %2695
    %v2697 = vmul.f32 %v2693, %v35
    %v2698 = vmul.f32 %v2696, %v35
    %v2699 = vadd.f32 %v2697, 1e-12
    %v2700 = vadd.f32 %v2698, 1e-12
    %v2701 = vrsqrt.pop %v2699
    %v2702 = vrsqrt.pop %v2700
    %v2703 = vmul.f32 %v2687, %v2701
    %v2704 = vmul.f32 %v2688, %v2702
    %v2705 = vlaneseq
    %v2706 = vshrl.u32 %v2705, 7
    %v2707 = vsub.s32 6, %v2706
    %v2708 = vrot.slane %v1405, %v2707
    %v2709 = vmul.f32 %v2703, %v2708
    %v2710 = vmul.f32 %v2704, %v2708
    %v2711 = vlaneseq
    %v2712 = vshrl.u32 %v2711, 7
    %v2713 = vsub.s32 7, %v2712
    %v2714 = vrot.slane %v1405, %v2713
    %v2715 = vadd.f32 %v2709, %v2714
    %v2716 = vadd.f32 %v2710, %v2714
    %2717 = vst.msk [vmem:[#allocation3] sm:$0xff] %vm28, %v2715
    %2718 = vst.msk [vmem:[#allocation3 + $0x8] sm:$0xff] %vm28, %v2716
    // Predicated region
    $region26: #{token_level_encoder.1} parent=1 // pred_check
      _
    $region27: #{token_level_encoder.1} parent=1 // pred_check_branch
      %2720 = sbr.rel (0) target = $region29
    $region28: #{token_level_encoder.1} parent=1 // pred_region
      %s2722 = ssub.s32 256, 256
      %2723 = vsyncadd [#allocation4], %s2722
      %s2724 = sshll.u32 [#allocation3], 4
      %s2725 = int_to_ptr.vmem [resolvable:$true] %s2724
      %2730 = dma.vmem_to_hbm [thread:$0]  %s2725, 256, %s6, [#allocation4], 128, 128, 8
    $region29: #{token_level_encoder.1} parent=1 // pred_fallthru
      _
    // Predicated region
    $region30: #{token_level_encoder.1} parent=1 // pred_check
      _
    $region31: #{token_level_encoder.1} parent=1 // pred_check_branch
      %2732 = sbr.rel (0) target = $region33
    $region32: #{token_level_encoder.1} parent=1 // pred_region
      %2733 = dma.done [#allocation4], 256
    $region33: #{token_level_encoder.1} parent=1 // pred_fallthru
      _
    %2734 = vsyncpa [#allocation4], 1

</llo_original>
